<compile_context>
chip_gen: v5e
topology: v5e:2x2
jax: 0.10.0
libtpu: 0.0.40
codegen_flags: <defaults>
</compile_context>

<pallas_src>
import math

import jax
import jax.numpy as jnp
from jax import lax
from jax.experimental import pallas as pl
from jax.experimental.pallas import tpu as pltpu


# ----------------------------------------------------------------------------
# Fused Pallas kernel: conv1 + BN + ReLU + maxpool + 2 residual blocks.
# ----------------------------------------------------------------------------
def _make_fused_kernel(Hp, Wp, C):
    M = Hp * Wp  # rows of one pooled feature map / one conv1 parity plane

    def kernel(p_ref, w1_ref, w3_ref, b_ref, o_ref, buf_sc):
        # buf_sc: (Hp+2, Wp+16, C) f32 scratch, zeroed once per grid step.  Feature
        # maps are always written to the tile-aligned window [1:Hp+1, 8:8+Wp, :];
        # the untouched margins stay zero and provide (a) the padding for the max
        # pool (valid because activations are >= 0 and the window centre is always a
        # real element) and (b) the zero padding of the 3x3 convolutions.
        buf_sc[...] = jnp.zeros_like(buf_sc)

        def to_buf(f2d):
            buf_sc[1:Hp + 1, 8:8 + Wp, :] = f2d.reshape(Hp, Wp, C)

        # ------------- layer1: conv7x7/s2 (im2col matmul, folded BN) + ReLU -------------
        y = jnp.dot(p_ref[...], w1_ref[...], preferred_element_type=jnp.float32)
        y = jnp.maximum(y + b_ref[0:1, :], 0.0)          # (4*M, C), rows = (p, q, a, b)

        # ------------- fused MaxPool2d(kernel=3, stride=2, padding=1) -------------
        # Output (i, j) pools rows {2i-1, 2i, 2i+1} x cols {2j-1, 2j, 2j+1}.  With
        # parity planes Ypq[a, b] = Y[2a+p, 2b+q] the 9 window terms are
        #   Y00[i,j], Y01[i,j], Y01[i,j-1], Y10[i,j], Y10[i-1,j],
        #   Y11[i,j], Y11[i,j-1], Y11[i-1,j], Y11[i-1,j-1]
        # (out-of-range terms can be replaced by 0 since Y >= 0 post ReLU).
        y00 = y[0 * M:1 * M, :]
        y01 = y[1 * M:2 * M, :]
        y10 = y[2 * M:3 * M, :]
        y11 = y[3 * M:4 * M, :]
        pool = jnp.maximum(jnp.maximum(y00, y01), jnp.maximum(y10, y11))
        pool = pool.reshape(Hp, Wp, C)

        to_buf(y01)                                               # needs (j-1)
        pool = jnp.maximum(pool, buf_sc[1:Hp + 1, 7:7 + Wp, :])
        to_buf(y10)                                               # needs (i-1)
        pool = jnp.maximum(pool, buf_sc[0:Hp, 8:8 + Wp, :])
        to_buf(y11)                                               # needs all three shifts
        pool = jnp.maximum(pool, buf_sc[1:Hp + 1, 7:7 + Wp, :])
        pool = jnp.maximum(pool, buf_sc[0:Hp, 8:8 + Wp, :])
        pool = jnp.maximum(pool, buf_sc[0:Hp, 7:7 + Wp, :])
        res1 = pool.reshape(M, C)                                 # == relu(layer1(x))

        # --------- in-kernel 3x3/s1/p1 conv (+folded BN bias) as 9 shift-matmuls ---------
        def conv3x3(f2d, c_idx):
            to_buf(f2d)
            acc = jnp.zeros((M, C), jnp.float32)
            for di in range(3):
                for dj in range(3):
                    # window == F[i + di - 1, j + dj - 1] with implicit zero padding
                    win = buf_sc[di:di + Hp, dj + 7:dj + 7 + Wp, :]
                    wk = w3_ref[c_idx * 9 + di * 3 + dj]          # (C, C) bf16 plane
                    acc = acc + jnp.dot(
                        win.reshape(M, C).astype(jnp.bfloat16), wk,
                        preferred_element_type=jnp.float32)
            return acc + b_ref[c_idx + 1:c_idx + 2, :]

        # ------------------------- layer2 (residual block) -------------------------
        h = jnp.maximum(conv3x3(res1, 0), 0.0)
        x2 = jnp.maximum(conv3x3(h, 1) + res1, 0.0)
        # ------------------------- layer3 (residual block) -------------------------
        h = jnp.maximum(conv3x3(x2, 2), 0.0)
        x3 = jnp.maximum(conv3x3(h, 3) + x2, 0.0)

        # TODO(synk): layer4 (stride-2 BasicBlock stack) is inactive for
        # Layer_Count=[3,3] and its `block` class is external to this module.

        o_ref[...] = x3

    return kernel


# ----------------------------------------------------------------------------
# Host-side (plain JAX) parameter folding and conv1 patch preparation.
# ----------------------------------------------------------------------------
def _fold_bn(bn, conv_bias=None, eps=1e-5):
    """Inference BatchNorm -> per-channel (scale, bias); absorbs the conv bias."""
    scale = bn["gamma"] / jnp.sqrt(bn["var"] + eps)
    bias = bn["beta"] - bn["mean"] * scale
    if conv_bias is not None:
        bias = bias + conv_bias * scale
    return scale, bias


def _conv1_patches_parity(x_nhwc, Hp, Wp):
    """im2col for conv 7x7 / stride 2 / pad 3.

    Rows are ordered (n, p, q, a, b) where the conv output pixel is (2a+p, 2b+q);
    patch elements are ordered (kh, kw, cin)."""
    N, H, W, Cin = x_nhwc.shape
    Hc, Wc = 2 * Hp, 2 * Wp
    xp = jnp.pad(x_nhwc, ((0, 0), (3, 3), (3, 3), (0, 0)))
    cols = []
    for i in range(7):
        for j in range(7):
            cols.append(lax.slice(
                xp, (0, i, j, 0),
                (N, i + 2 * (Hc - 1) + 1, j + 2 * (Wc - 1) + 1, Cin),
                (1, 2, 2, 1)))                               # [N, Hc, Wc, Cin]
    p = jnp.stack(cols, axis=3)                              # [N, Hc, Wc, 49, Cin]
    p = p.reshape(N, Hp, 2, Wp, 2, 49 * Cin)                 # [N, a, p, b, q, K]
    p = jnp.transpose(p, (0, 2, 4, 1, 3, 5))                 # [N, p, q, a, b, K]
    return p.reshape(N * 4 * Hp * Wp, 49 * Cin)


def _conv3_planes(w_oihw, scale):
    """Torch [Cout,Cin,3,3] -> [9, Cin, Cout] matmul planes (k = di*3+dj), BN-scaled."""
    w = jnp.transpose(w_oihw, (2, 3, 1, 0)) * scale[None, None, None, :]
    cin, cout = w.shape[2], w.shape[3]
    return w.reshape(9, cin, cout)


def init_params(key, channels):
    """Deterministic init matching the module __init__ (shapes & conv-weight scaling)."""
    def conv_w(k, cout, cin, ksz):
        n = ksz * ksz * cout
        return jax.random.normal(k, (cout, cin, ksz, ksz), jnp.float32) * math.sqrt(2.0 / n)

    def bn(cout):
        return dict(gamma=jnp.ones((cout,), jnp.float32),
                    beta=jnp.zeros((cout,), jnp.float32),
                    mean=jnp.zeros((cout,), jnp.float32),
                    var=jnp.ones((cout,), jnp.float32))

    ks = jax.random.split(key, 8)
    p = {}
    p["l1_conv_w"] = conv_w(ks[0], 64, channels, 7)
    p["l1_bn"] = bn(64)
    p["l2_conv1_w"] = conv_w(ks[1], 64, 64, 3)
    p["l2_bn1"] = bn(64)
    p["l2_conv2_w"] = conv_w(ks[2], 64, 64, 3)
    p["l2_conv2_b"] = jax.random.normal(ks[3], (64,), jnp.float32) * 0.05
    p["l2_bn2"] = bn(64)
    p["l3_conv1_w"] = conv_w(ks[4], 64, 64, 3)
    p["l3_conv1_b"] = jax.random.normal(ks[5], (64,), jnp.float32) * 0.05
    p["l3_bn1"] = bn(64)
    p["l3_conv2_w"] = conv_w(ks[6], 64, 64, 3)
    p["l3_conv2_b"] = jax.random.normal(ks[7], (64,), jnp.float32) * 0.05
    p["l3_bn2"] = bn(64)
    return p


# ----------------------------------------------------------------------------
# Public forward (Layer_Count = [3, 3]): layer1, layer2, layer3; layer4 skipped.
# ----------------------------------------------------------------------------
def resnet18_client_forward(params, x_nchw, volly=None):
    x = jnp.transpose(x_nchw, (0, 2, 3, 1)).astype(jnp.float32)     # NCHW -> NHWC
    N, H, W, Cin = x.shape
    Cout = 64

    Hc, Wc = (H + 6 - 7) // 2 + 1, (W + 6 - 7) // 2 + 1             # conv1 out (k7,s2,p3)
    Hp, Wp = (Hc + 2 - 3) // 2 + 1, (Wc + 2 - 3) // 2 + 1           # maxpool out (k3,s2,p1)
    assert Hc == 2 * Hp and Wc == 2 * Wp, "parity maxpool needs even conv1 output dims"

    K1 = 7 * 7 * Cin
    K1p = ((K1 + 127) // 128) * 128                                 # lane-pad conv1 K dim

    # --- host-side prep: im2col for conv1, BN folding, weight packing (all tiny) ---
    patches = _conv1_patches_parity(x, Hp, Wp)
    patches = jnp.pad(patches, ((0, 0), (0, K1p - K1))).astype(jnp.bfloat16)

    s1, b1 = _fold_bn(params["l1_bn"])
    w1 = jnp.transpose(params["l1_conv_w"], (2, 3, 1, 0)).reshape(K1, Cout) * s1[None, :]
    w1 = jnp.pad(w1, ((0, K1p - K1), (0, 0))).astype(jnp.bfloat16)

    s2a, b2a = _fold_bn(params["l2_bn1"])
    s2b, b2b = _fold_bn(params["l2_bn2"], params["l2_conv2_b"])
    s3a, b3a = _fold_bn(params["l3_bn1"], params["l3_conv1_b"])
    s3b, b3b = _fold_bn(params["l3_bn2"], params["l3_conv2_b"])
    w3 = jnp.concatenate([
        _conv3_planes(params["l2_conv1_w"], s2a),
        _conv3_planes(params["l2_conv2_w"], s2b),
        _conv3_planes(params["l3_conv1_w"], s3a),
        _conv3_planes(params["l3_conv2_w"], s3b),
    ], axis=0).astype(jnp.bfloat16)                                  # [36, 64, 64]
    biases = jnp.stack([b1, b2a, b2b, b3a, b3b], axis=0).astype(jnp.float32)  # [5, 64]

    Mrow = 4 * Hp * Wp        # conv1 rows per sample (parity ordered)
    Mout = Hp * Wp            # output rows per sample

    out2d = pl.pallas_call(
        _make_fused_kernel(Hp, Wp, Cout),
        out_shape=jax.ShapeDtypeStruct((N * Mout, Cout), jnp.float32),
        grid=(N,),
        in_specs=[
            pl.BlockSpec((Mrow, K1p), lambda n: (n, 0)),             # conv1 patches (per sample)
            pl.BlockSpec((K1p, Cout), lambda n: (0, 0)),             # folded conv1 weight
            pl.BlockSpec((36, Cout, Cout), lambda n: (0, 0, 0)),     # folded 3x3 weights
            pl.BlockSpec((5, Cout), lambda n: (0, 0)),               # folded biases
        ],
        out_specs=pl.BlockSpec((Mout, Cout), lambda n: (n, 0)),
        scratch_shapes=[pltpu.VMEM((Hp + 2, Wp + 16, Cout), jnp.float32)],
        compiler_params=pltpu.CompilerParams(
            dimension_semantics=("parallel",),                       # v7x: batch across 2 TCs
        ),
    )(patches, w1, w3, biases)

    out = jnp.transpose(out2d.reshape(N, Hp, Wp, Cout), (0, 3, 1, 2))  # -> NCHW
    return out, volly


# ----------------------------------------------------------------------------
# Plain-JAX (f32) reference of the same forward, for correctness checking.
# ----------------------------------------------------------------------------
def reference_forward(params, x_nchw, eps=1e-5):
    x = jnp.transpose(x_nchw, (0, 2, 3, 1)).astype(jnp.float32)

    def conv(v, w, b, stride, pad):
        y = lax.conv_general_dilated(
            v, jnp.transpose(w, (2, 3, 1, 0)),
            window_strides=(stride, stride), padding=((pad, pad), (pad, pad)),
            dimension_numbers=("NHWC", "HWIO", "NHWC"))
        if b is not None:
            y = y + b
        return y

    def bn(v, p):
        s = p["gamma"] / jnp.sqrt(p["var"] + eps)
        return v * s + (p["beta"] - p["mean"] * s)

    y = jax.nn.relu(bn(conv(x, params["l1_conv_w"], None, 2, 3), params["l1_bn"]))
    y = lax.reduce_window(y, -jnp.inf, lax.max, (1, 3, 3, 1), (1, 2, 2, 1),
                          ((0, 0), (1, 1), (1, 1), (0, 0)))
    res1 = jax.nn.relu(y)
    h = jax.nn.relu(bn(conv(res1, params["l2_conv1_w"], None, 1, 1), params["l2_bn1"]))
    z = bn(conv(h, params["l2_conv2_w"], params["l2_conv2_b"], 1, 1), params["l2_bn2"])
    x2 = jax.nn.relu(z + res1)
    h = jax.nn.relu(bn(conv(x2, params["l3_conv1_w"], params["l3_conv1_b"], 1, 1),
                       params["l3_bn1"]))
    z = bn(conv(h, params["l3_conv2_w"], params["l3_conv2_b"], 1, 1), params["l3_bn2"])
    x3 = jax.nn.relu(z + x2)
    return jnp.transpose(x3, (0, 3, 1, 2))


# ----------------------------------------------------------------------------
if __name__ == "__main__":
    key = jax.random.PRNGKey(0)
    k_param, k_x = jax.random.split(key)

    channels = 3
    x = jax.random.normal(k_x, (2, channels, 32, 32), jnp.float32)   # NCHW input
    params = init_params(k_param, channels)

    fwd = jax.jit(resnet18_client_forward)
    out, volly = fwd(params, x)
    out = jax.block_until_ready(out)

    assert out.shape == (2, 64, 8, 8), out.shape
    assert bool(jnp.all(jnp.isfinite(out)))

    # Numerical check vs. the f32 reference (kernel uses bf16 MXU matmuls w/ f32 acc).
    ref = reference_forward(params, x)
    rel = float(jnp.linalg.norm(out - ref) / (jnp.linalg.norm(ref) + 1e-12))
    assert rel < 0.08, f"relative error too large: {rel}"

    print("KERNEL_OK")
</pallas_src>

<mosaic_0001>
module attributes {stable_mosaic.version = 11 : i64} {
  func.func @kernel(%arg0: i32, %arg1: memref<256x256xbf16, #tpu.memory_space<vmem>>, %arg2: memref<256x64xbf16, #tpu.memory_space<vmem>>, %arg3: memref<36x64x64xbf16, #tpu.memory_space<vmem>>, %arg4: memref<5x64xf32, #tpu.memory_space<vmem>>, %arg5: memref<64x64xf32, #tpu.memory_space<vmem>>, %arg6: memref<10x24x64xf32, #tpu.memory_space<vmem>>) attributes {dimension_semantics = [#tpu.dimension_semantics<parallel>], iteration_bounds = array<i64: 2>, scalar_prefetch = 0 : i64, scratch_operands = 1 : i64, tpu.core_type = #tpu.core_type<tc>, window_params = [{transform_indices = @transform_0, window_bounds = array<i64: 256, 256>}, {pipeline_mode = #tpu.pipeline_mode<synchronous>, transform_indices = @transform_1, window_bounds = array<i64: 256, 64>}, {pipeline_mode = #tpu.pipeline_mode<synchronous>, transform_indices = @transform_2, window_bounds = array<i64: 36, 64, 64>}, {pipeline_mode = #tpu.pipeline_mode<synchronous>, transform_indices = @transform_3, window_bounds = array<i64: 5, 64>}, {transform_indices = @transform_4, window_bounds = array<i64: 64, 64>}]} {
    %cst = arith.constant 0.000000e+00 : f32
    %0 = vector.broadcast %cst : f32 to vector<10x24x64xf32>
    %c0 = arith.constant 0 : index
    %c0_0 = arith.constant 0 : index
    %c0_1 = arith.constant 0 : index
    %1 = vector.load %arg6[%c0, %c0_0, %c0_1] : memref<10x24x64xf32, #tpu.memory_space<vmem>>, vector<10x24x64xf32>
    tpu.vector_store %arg6[%c0, %c0_0, %c0_1], %0 {strides = array<i32>} : memref<10x24x64xf32, #tpu.memory_space<vmem>>, vector<10x24x64xf32>,
    %c0_2 = arith.constant 0 : index
    %c0_3 = arith.constant 0 : index
    %2 = vector.load %arg1[%c0_2, %c0_3] : memref<256x256xbf16, #tpu.memory_space<vmem>>, vector<256x256xbf16>
    %c0_4 = arith.constant 0 : index
    %c0_5 = arith.constant 0 : index
    %3 = vector.load %arg2[%c0_4, %c0_5] : memref<256x64xbf16, #tpu.memory_space<vmem>>, vector<256x64xbf16>
    %cst_6 = arith.constant dense<0.000000e+00> : vector<256x64xf32>
    %4 = tpu.matmul %2, %3, %cst_6 {dimension_numbers = #tpu.dot_dimension_numbers<[1], [0], [0], [1], [0, 0, 1, 1], [], []>} : vector<256x256xbf16>, vector<256x64xbf16>, vector<256x64xf32> -> vector<256x64xf32>
    %c0_7 = arith.constant 0 : index
    %c0_8 = arith.constant 0 : index
    %5 = vector.load %arg4[%c0_7, %c0_8] : memref<5x64xf32, #tpu.memory_space<vmem>>, vector<1x64xf32>
    %6 = vector.broadcast %5 : vector<1x64xf32> to vector<256x64xf32>
    %7 = arith.addf %4, %6 : vector<256x64xf32>
    %cst_9 = arith.constant 0.000000e+00 : f32
    %8 = vector.broadcast %cst_9 : f32 to vector<256x64xf32>
    %9 = arith.maximumf %7, %8 : vector<256x64xf32>
    %10 = vector.extract_strided_slice %9 {offsets = [0, 0], sizes = [64, 64], strides = [1, 1]} : vector<256x64xf32> to vector<64x64xf32>
    %11 = vector.extract_strided_slice %9 {offsets = [64, 0], sizes = [64, 64], strides = [1, 1]} : vector<256x64xf32> to vector<64x64xf32>
    %12 = vector.extract_strided_slice %9 {offsets = [128, 0], sizes = [64, 64], strides = [1, 1]} : vector<256x64xf32> to vector<64x64xf32>
    %13 = vector.extract_strided_slice %9 {offsets = [192, 0], sizes = [64, 64], strides = [1, 1]} : vector<256x64xf32> to vector<64x64xf32>
    %14 = arith.maximumf %10, %11 : vector<64x64xf32>
    %15 = arith.maximumf %12, %13 : vector<64x64xf32>
    %16 = arith.maximumf %14, %15 : vector<64x64xf32>
    %17 = vector.shape_cast %16 : vector<64x64xf32> to vector<8x8x64xf32>
    %18 = vector.shape_cast %11 : vector<64x64xf32> to vector<8x8x64xf32>
    %c1 = arith.constant 1 : index
    %c8 = arith.constant 8 : index
    %c0_10 = arith.constant 0 : index
    %19 = vector.load %arg6[%c1, %c8, %c0_10] : memref<10x24x64xf32, #tpu.memory_space<vmem>>, vector<8x8x64xf32>
    tpu.vector_store %arg6[%c1, %c8, %c0_10], %18 {strides = array<i32>} : memref<10x24x64xf32, #tpu.memory_space<vmem>>, vector<8x8x64xf32>,
    %c1_11 = arith.constant 1 : index
    %c7 = arith.constant 7 : index
    %c0_12 = arith.constant 0 : index
    %20 = vector.load %arg6[%c1_11, %c7, %c0_12] : memref<10x24x64xf32, #tpu.memory_space<vmem>>, vector<8x8x64xf32>
    %21 = arith.maximumf %17, %20 : vector<8x8x64xf32>
    %22 = vector.shape_cast %12 : vector<64x64xf32> to vector<8x8x64xf32>
    %c1_13 = arith.constant 1 : index
    %c8_14 = arith.constant 8 : index
    %c0_15 = arith.constant 0 : index
    %23 = vector.load %arg6[%c1_13, %c8_14, %c0_15] : memref<10x24x64xf32, #tpu.memory_space<vmem>>, vector<8x8x64xf32>
    tpu.vector_store %arg6[%c1_13, %c8_14, %c0_15], %22 {strides = array<i32>} : memref<10x24x64xf32, #tpu.memory_space<vmem>>, vector<8x8x64xf32>,
    %c0_16 = arith.constant 0 : index
    %c8_17 = arith.constant 8 : index
    %c0_18 = arith.constant 0 : index
    %24 = vector.load %arg6[%c0_16, %c8_17, %c0_18] : memref<10x24x64xf32, #tpu.memory_space<vmem>>, vector<8x8x64xf32>
    %25 = arith.maximumf %21, %24 : vector<8x8x64xf32>
    %26 = vector.shape_cast %13 : vector<64x64xf32> to vector<8x8x64xf32>
    %c1_19 = arith.constant 1 : index
    %c8_20 = arith.constant 8 : index
    %c0_21 = arith.constant 0 : index
    %27 = vector.load %arg6[%c1_19, %c8_20, %c0_21] : memref<10x24x64xf32, #tpu.memory_space<vmem>>, vector<8x8x64xf32>
    tpu.vector_store %arg6[%c1_19, %c8_20, %c0_21], %26 {strides = array<i32>} : memref<10x24x64xf32, #tpu.memory_space<vmem>>, vector<8x8x64xf32>,
    %c1_22 = arith.constant 1 : index
    %c7_23 = arith.constant 7 : index
    %c0_24 = arith.constant 0 : index
    %28 = vector.load %arg6[%c1_22, %c7_23, %c0_24] : memref<10x24x64xf32, #tpu.memory_space<vmem>>, vector<8x8x64xf32>
    %29 = arith.maximumf %25, %28 : vector<8x8x64xf32>
    %c0_25 = arith.constant 0 : index
    %c8_26 = arith.constant 8 : index
    %c0_27 = arith.constant 0 : index
    %30 = vector.load %arg6[%c0_25, %c8_26, %c0_27] : memref<10x24x64xf32, #tpu.memory_space<vmem>>, vector<8x8x64xf32>
    %31 = arith.maximumf %29, %30 : vector<8x8x64xf32>
    %c0_28 = arith.constant 0 : index
    %c7_29 = arith.constant 7 : index
    %c0_30 = arith.constant 0 : index
    %32 = vector.load %arg6[%c0_28, %c7_29, %c0_30] : memref<10x24x64xf32, #tpu.memory_space<vmem>>, vector<8x8x64xf32>
    %33 = arith.maximumf %31, %32 : vector<8x8x64xf32>
    %34 = vector.shape_cast %33 : vector<8x8x64xf32> to vector<64x64xf32>
    %35 = vector.shape_cast %34 : vector<64x64xf32> to vector<8x8x64xf32>
    %c1_31 = arith.constant 1 : index
    %c8_32 = arith.constant 8 : index
    %c0_33 = arith.constant 0 : index
    %36 = vector.load %arg6[%c1_31, %c8_32, %c0_33] : memref<10x24x64xf32, #tpu.memory_space<vmem>>, vector<8x8x64xf32>
    tpu.vector_store %arg6[%c1_31, %c8_32, %c0_33], %35 {strides = array<i32>} : memref<10x24x64xf32, #tpu.memory_space<vmem>>, vector<8x8x64xf32>,
    %cst_34 = arith.constant 0.000000e+00 : f32
    %37 = vector.broadcast %cst_34 : f32 to vector<64x64xf32>
    %c0_35 = arith.constant 0 : index
    %c7_36 = arith.constant 7 : index
    %c0_37 = arith.constant 0 : index
    %38 = vector.load %arg6[%c0_35, %c7_36, %c0_37] : memref<10x24x64xf32, #tpu.memory_space<vmem>>, vector<8x8x64xf32>
    %c0_38 = arith.constant 0 : index
    %c0_39 = arith.constant 0 : index
    %c0_40 = arith.constant 0 : index
    %39 = vector.load %arg3[%c0_38, %c0_39, %c0_40] : memref<36x64x64xbf16, #tpu.memory_space<vmem>>, vector<1x64x64xbf16>
    %40 = vector.shape_cast %39 : vector<1x64x64xbf16> to vector<64x64xbf16>
    %41 = vector.shape_cast %38 : vector<8x8x64xf32> to vector<64x64xf32>
    %42 = arith.truncf %41 : vector<64x64xf32> to vector<64x64xbf16>
    %cst_41 = arith.constant dense<0.000000e+00> : vector<64x64xf32>
    %43 = tpu.matmul %42, %40, %cst_41 {dimension_numbers = #tpu.dot_dimension_numbers<[1], [0], [0], [1], [0, 0, 1, 1], [], []>} : vector<64x64xbf16>, vector<64x64xbf16>, vector<64x64xf32> -> vector<64x64xf32>
    %44 = arith.addf %37, %43 : vector<64x64xf32>
    %c0_42 = arith.constant 0 : index
    %c8_43 = arith.constant 8 : index
    %c0_44 = arith.constant 0 : index
    %45 = vector.load %arg6[%c0_42, %c8_43, %c0_44] : memref<10x24x64xf32, #tpu.memory_space<vmem>>, vector<8x8x64xf32>
    %c1_45 = arith.constant 1 : index
    %c0_46 = arith.constant 0 : index
    %c0_47 = arith.constant 0 : index
    %46 = vector.load %arg3[%c1_45, %c0_46, %c0_47] : memref<36x64x64xbf16, #tpu.memory_space<vmem>>, vector<1x64x64xbf16>
    %47 = vector.shape_cast %46 : vector<1x64x64xbf16> to vector<64x64xbf16>
    %48 = vector.shape_cast %45 : vector<8x8x64xf32> to vector<64x64xf32>
    %49 = arith.truncf %48 : vector<64x64xf32> to vector<64x64xbf16>
    %cst_48 = arith.constant dense<0.000000e+00> : vector<64x64xf32>
    %50 = tpu.matmul %49, %47, %cst_48 {dimension_numbers = #tpu.dot_dimension_numbers<[1], [0], [0], [1], [0, 0, 1, 1], [], []>} : vector<64x64xbf16>, vector<64x64xbf16>, vector<64x64xf32> -> vector<64x64xf32>
    %51 = arith.addf %44, %50 : vector<64x64xf32>
    %c0_49 = arith.constant 0 : index
    %c9 = arith.constant 9 : index
    %c0_50 = arith.constant 0 : index
    %52 = vector.load %arg6[%c0_49, %c9, %c0_50] : memref<10x24x64xf32, #tpu.memory_space<vmem>>, vector<8x8x64xf32>
    %c2 = arith.constant 2 : index
    %c0_51 = arith.constant 0 : index
    %c0_52 = arith.constant 0 : index
    %53 = vector.load %arg3[%c2, %c0_51, %c0_52] : memref<36x64x64xbf16, #tpu.memory_space<vmem>>, vector<1x64x64xbf16>
    %54 = vector.shape_cast %53 : vector<1x64x64xbf16> to vector<64x64xbf16>
    %55 = vector.shape_cast %52 : vector<8x8x64xf32> to vector<64x64xf32>
    %56 = arith.truncf %55 : vector<64x64xf32> to vector<64x64xbf16>
    %cst_53 = arith.constant dense<0.000000e+00> : vector<64x64xf32>
    %57 = tpu.matmul %56, %54, %cst_53 {dimension_numbers = #tpu.dot_dimension_numbers<[1], [0], [0], [1], [0, 0, 1, 1], [], []>} : vector<64x64xbf16>, vector<64x64xbf16>, vector<64x64xf32> -> vector<64x64xf32>
    %58 = arith.addf %51, %57 : vector<64x64xf32>
    %c1_54 = arith.constant 1 : index
    %c7_55 = arith.constant 7 : index
    %c0_56 = arith.constant 0 : index
    %59 = vector.load %arg6[%c1_54, %c7_55, %c0_56] : memref<10x24x64xf32, #tpu.memory_space<vmem>>, vector<8x8x64xf32>
    %c3 = arith.constant 3 : index
    %c0_57 = arith.constant 0 : index
    %c0_58 = arith.constant 0 : index
    %60 = vector.load %arg3[%c3, %c0_57, %c0_58] : memref<36x64x64xbf16, #tpu.memory_space<vmem>>, vector<1x64x64xbf16>
    %61 = vector.shape_cast %60 : vector<1x64x64xbf16> to vector<64x64xbf16>
    %62 = vector.shape_cast %59 : vector<8x8x64xf32> to vector<64x64xf32>
    %63 = arith.truncf %62 : vector<64x64xf32> to vector<64x64xbf16>
    %cst_59 = arith.constant dense<0.000000e+00> : vector<64x64xf32>
    %64 = tpu.matmul %63, %61, %cst_59 {dimension_numbers = #tpu.dot_dimension_numbers<[1], [0], [0], [1], [0, 0, 1, 1], [], []>} : vector<64x64xbf16>, vector<64x64xbf16>, vector<64x64xf32> -> vector<64x64xf32>
    %65 = arith.addf %58, %64 : vector<64x64xf32>
    %c1_60 = arith.constant 1 : index
    %c8_61 = arith.constant 8 : index
    %c0_62 = arith.constant 0 : index
    %66 = vector.load %arg6[%c1_60, %c8_61, %c0_62] : memref<10x24x64xf32, #tpu.memory_space<vmem>>, vector<8x8x64xf32>
    %c4 = arith.constant 4 : index
    %c0_63 = arith.constant 0 : index
    %c0_64 = arith.constant 0 : index
    %67 = vector.load %arg3[%c4, %c0_63, %c0_64] : memref<36x64x64xbf16, #tpu.memory_space<vmem>>, vector<1x64x64xbf16>
    %68 = vector.shape_cast %67 : vector<1x64x64xbf16> to vector<64x64xbf16>
    %69 = vector.shape_cast %66 : vector<8x8x64xf32> to vector<64x64xf32>
    %70 = arith.truncf %69 : vector<64x64xf32> to vector<64x64xbf16>
    %cst_65 = arith.constant dense<0.000000e+00> : vector<64x64xf32>
    %71 = tpu.matmul %70, %68, %cst_65 {dimension_numbers = #tpu.dot_dimension_numbers<[1], [0], [0], [1], [0, 0, 1, 1], [], []>} : vector<64x64xbf16>, vector<64x64xbf16>, vector<64x64xf32> -> vector<64x64xf32>
    %72 = arith.addf %65, %71 : vector<64x64xf32>
    %c1_66 = arith.constant 1 : index
    %c9_67 = arith.constant 9 : index
    %c0_68 = arith.constant 0 : index
    %73 = vector.load %arg6[%c1_66, %c9_67, %c0_68] : memref<10x24x64xf32, #tpu.memory_space<vmem>>, vector<8x8x64xf32>
    %c5 = arith.constant 5 : index
    %c0_69 = arith.constant 0 : index
    %c0_70 = arith.constant 0 : index
    %74 = vector.load %arg3[%c5, %c0_69, %c0_70] : memref<36x64x64xbf16, #tpu.memory_space<vmem>>, vector<1x64x64xbf16>
    %75 = vector.shape_cast %74 : vector<1x64x64xbf16> to vector<64x64xbf16>
    %76 = vector.shape_cast %73 : vector<8x8x64xf32> to vector<64x64xf32>
    %77 = arith.truncf %76 : vector<64x64xf32> to vector<64x64xbf16>
    %cst_71 = arith.constant dense<0.000000e+00> : vector<64x64xf32>
    %78 = tpu.matmul %77, %75, %cst_71 {dimension_numbers = #tpu.dot_dimension_numbers<[1], [0], [0], [1], [0, 0, 1, 1], [], []>} : vector<64x64xbf16>, vector<64x64xbf16>, vector<64x64xf32> -> vector<64x64xf32>
    %79 = arith.addf %72, %78 : vector<64x64xf32>
    %c2_72 = arith.constant 2 : index
    %c7_73 = arith.constant 7 : index
    %c0_74 = arith.constant 0 : index
    %80 = vector.load %arg6[%c2_72, %c7_73, %c0_74] : memref<10x24x64xf32, #tpu.memory_space<vmem>>, vector<8x8x64xf32>
    %c6 = arith.constant 6 : index
    %c0_75 = arith.constant 0 : index
    %c0_76 = arith.constant 0 : index
    %81 = vector.load %arg3[%c6, %c0_75, %c0_76] : memref<36x64x64xbf16, #tpu.memory_space<vmem>>, vector<1x64x64xbf16>
    %82 = vector.shape_cast %81 : vector<1x64x64xbf16> to vector<64x64xbf16>
    %83 = vector.shape_cast %80 : vector<8x8x64xf32> to vector<64x64xf32>
    %84 = arith.truncf %83 : vector<64x64xf32> to vector<64x64xbf16>
    %cst_77 = arith.constant dense<0.000000e+00> : vector<64x64xf32>
    %85 = tpu.matmul %84, %82, %cst_77 {dimension_numbers = #tpu.dot_dimension_numbers<[1], [0], [0], [1], [0, 0, 1, 1], [], []>} : vector<64x64xbf16>, vector<64x64xbf16>, vector<64x64xf32> -> vector<64x64xf32>
    %86 = arith.addf %79, %85 : vector<64x64xf32>
    %c2_78 = arith.constant 2 : index
    %c8_79 = arith.constant 8 : index
    %c0_80 = arith.constant 0 : index
    %87 = vector.load %arg6[%c2_78, %c8_79, %c0_80] : memref<10x24x64xf32, #tpu.memory_space<vmem>>, vector<8x8x64xf32>
    %c7_81 = arith.constant 7 : index
    %c0_82 = arith.constant 0 : index
    %c0_83 = arith.constant 0 : index
    %88 = vector.load %arg3[%c7_81, %c0_82, %c0_83] : memref<36x64x64xbf16, #tpu.memory_space<vmem>>, vector<1x64x64xbf16>
    %89 = vector.shape_cast %88 : vector<1x64x64xbf16> to vector<64x64xbf16>
    %90 = vector.shape_cast %87 : vector<8x8x64xf32> to vector<64x64xf32>
    %91 = arith.truncf %90 : vector<64x64xf32> to vector<64x64xbf16>
    %cst_84 = arith.constant dense<0.000000e+00> : vector<64x64xf32>
    %92 = tpu.matmul %91, %89, %cst_84 {dimension_numbers = #tpu.dot_dimension_numbers<[1], [0], [0], [1], [0, 0, 1, 1], [], []>} : vector<64x64xbf16>, vector<64x64xbf16>, vector<64x64xf32> -> vector<64x64xf32>
    %93 = arith.addf %86, %92 : vector<64x64xf32>
    %c2_85 = arith.constant 2 : index
    %c9_86 = arith.constant 9 : index
    %c0_87 = arith.constant 0 : index
    %94 = vector.load %arg6[%c2_85, %c9_86, %c0_87] : memref<10x24x64xf32, #tpu.memory_space<vmem>>, vector<8x8x64xf32>
    %c8_88 = arith.constant 8 : index
    %c0_89 = arith.constant 0 : index
    %c0_90 = arith.constant 0 : index
    %95 = vector.load %arg3[%c8_88, %c0_89, %c0_90] : memref<36x64x64xbf16, #tpu.memory_space<vmem>>, vector<1x64x64xbf16>
    %96 = vector.shape_cast %95 : vector<1x64x64xbf16> to vector<64x64xbf16>
    %97 = vector.shape_cast %94 : vector<8x8x64xf32> to vector<64x64xf32>
    %98 = arith.truncf %97 : vector<64x64xf32> to vector<64x64xbf16>
    %cst_91 = arith.constant dense<0.000000e+00> : vector<64x64xf32>
    %99 = tpu.matmul %98, %96, %cst_91 {dimension_numbers = #tpu.dot_dimension_numbers<[1], [0], [0], [1], [0, 0, 1, 1], [], []>} : vector<64x64xbf16>, vector<64x64xbf16>, vector<64x64xf32> -> vector<64x64xf32>
    %100 = arith.addf %93, %99 : vector<64x64xf32>
    %c1_92 = arith.constant 1 : index
    %c0_93 = arith.constant 0 : index
    %101 = vector.load %arg4[%c1_92, %c0_93] : memref<5x64xf32, #tpu.memory_space<vmem>>, vector<1x64xf32>
    %102 = vector.broadcast %101 : vector<1x64xf32> to vector<64x64xf32>
    %103 = arith.addf %100, %102 : vector<64x64xf32>
    %cst_94 = arith.constant 0.000000e+00 : f32
    %104 = vector.broadcast %cst_94 : f32 to vector<64x64xf32>
    %105 = arith.maximumf %103, %104 : vector<64x64xf32>
    %106 = vector.shape_cast %105 : vector<64x64xf32> to vector<8x8x64xf32>
    %c1_95 = arith.constant 1 : index
    %c8_96 = arith.constant 8 : index
    %c0_97 = arith.constant 0 : index
    %107 = vector.load %arg6[%c1_95, %c8_96, %c0_97] : memref<10x24x64xf32, #tpu.memory_space<vmem>>, vector<8x8x64xf32>
    tpu.vector_store %arg6[%c1_95, %c8_96, %c0_97], %106 {strides = array<i32>} : memref<10x24x64xf32, #tpu.memory_space<vmem>>, vector<8x8x64xf32>,
    %cst_98 = arith.constant 0.000000e+00 : f32
    %108 = vector.broadcast %cst_98 : f32 to vector<64x64xf32>
    %c0_99 = arith.constant 0 : index
    %c7_100 = arith.constant 7 : index
    %c0_101 = arith.constant 0 : index
    %109 = vector.load %arg6[%c0_99, %c7_100, %c0_101] : memref<10x24x64xf32, #tpu.memory_space<vmem>>, vector<8x8x64xf32>
    %c9_102 = arith.constant 9 : index
    %c0_103 = arith.constant 0 : index
    %c0_104 = arith.constant 0 : index
    %110 = vector.load %arg3[%c9_102, %c0_103, %c0_104] : memref<36x64x64xbf16, #tpu.memory_space<vmem>>, vector<1x64x64xbf16>
    %111 = vector.shape_cast %110 : vector<1x64x64xbf16> to vector<64x64xbf16>
    %112 = vector.shape_cast %109 : vector<8x8x64xf32> to vector<64x64xf32>
    %113 = arith.truncf %112 : vector<64x64xf32> to vector<64x64xbf16>
    %cst_105 = arith.constant dense<0.000000e+00> : vector<64x64xf32>
    %114 = tpu.matmul %113, %111, %cst_105 {dimension_numbers = #tpu.dot_dimension_numbers<[1], [0], [0], [1], [0, 0, 1, 1], [], []>} : vector<64x64xbf16>, vector<64x64xbf16>, vector<64x64xf32> -> vector<64x64xf32>
    %115 = arith.addf %108, %114 : vector<64x64xf32>
    %c0_106 = arith.constant 0 : index
    %c8_107 = arith.constant 8 : index
    %c0_108 = arith.constant 0 : index
    %116 = vector.load %arg6[%c0_106, %c8_107, %c0_108] : memref<10x24x64xf32, #tpu.memory_space<vmem>>, vector<8x8x64xf32>
    %c10 = arith.constant 10 : index
    %c0_109 = arith.constant 0 : index
    %c0_110 = arith.constant 0 : index
    %117 = vector.load %arg3[%c10, %c0_109, %c0_110] : memref<36x64x64xbf16, #tpu.memory_space<vmem>>, vector<1x64x64xbf16>
    %118 = vector.shape_cast %117 : vector<1x64x64xbf16> to vector<64x64xbf16>
    %119 = vector.shape_cast %116 : vector<8x8x64xf32> to vector<64x64xf32>
    %120 = arith.truncf %119 : vector<64x64xf32> to vector<64x64xbf16>
    %cst_111 = arith.constant dense<0.000000e+00> : vector<64x64xf32>
    %121 = tpu.matmul %120, %118, %cst_111 {dimension_numbers = #tpu.dot_dimension_numbers<[1], [0], [0], [1], [0, 0, 1, 1], [], []>} : vector<64x64xbf16>, vector<64x64xbf16>, vector<64x64xf32> -> vector<64x64xf32>
    %122 = arith.addf %115, %121 : vector<64x64xf32>
    %c0_112 = arith.constant 0 : index
    %c9_113 = arith.constant 9 : index
    %c0_114 = arith.constant 0 : index
    %123 = vector.load %arg6[%c0_112, %c9_113, %c0_114] : memref<10x24x64xf32, #tpu.memory_space<vmem>>, vector<8x8x64xf32>
    %c11 = arith.constant 11 : index
    %c0_115 = arith.constant 0 : index
    %c0_116 = arith.constant 0 : index
    %124 = vector.load %arg3[%c11, %c0_115, %c0_116] : memref<36x64x64xbf16, #tpu.memory_space<vmem>>, vector<1x64x64xbf16>
    %125 = vector.shape_cast %124 : vector<1x64x64xbf16> to vector<64x64xbf16>
    %126 = vector.shape_cast %123 : vector<8x8x64xf32> to vector<64x64xf32>
    %127 = arith.truncf %126 : vector<64x64xf32> to vector<64x64xbf16>
    %cst_117 = arith.constant dense<0.000000e+00> : vector<64x64xf32>
    %128 = tpu.matmul %127, %125, %cst_117 {dimension_numbers = #tpu.dot_dimension_numbers<[1], [0], [0], [1], [0, 0, 1, 1], [], []>} : vector<64x64xbf16>, vector<64x64xbf16>, vector<64x64xf32> -> vector<64x64xf32>
    %129 = arith.addf %122, %128 : vector<64x64xf32>
    %c1_118 = arith.constant 1 : index
    %c7_119 = arith.constant 7 : index
    %c0_120 = arith.constant 0 : index
    %130 = vector.load %arg6[%c1_118, %c7_119, %c0_120] : memref<10x24x64xf32, #tpu.memory_space<vmem>>, vector<8x8x64xf32>
    %c12 = arith.constant 12 : index
    %c0_121 = arith.constant 0 : index
    %c0_122 = arith.constant 0 : index
    %131 = vector.load %arg3[%c12, %c0_121, %c0_122] : memref<36x64x64xbf16, #tpu.memory_space<vmem>>, vector<1x64x64xbf16>
    %132 = vector.shape_cast %131 : vector<1x64x64xbf16> to vector<64x64xbf16>
    %133 = vector.shape_cast %130 : vector<8x8x64xf32> to vector<64x64xf32>
    %134 = arith.truncf %133 : vector<64x64xf32> to vector<64x64xbf16>
    %cst_123 = arith.constant dense<0.000000e+00> : vector<64x64xf32>
    %135 = tpu.matmul %134, %132, %cst_123 {dimension_numbers = #tpu.dot_dimension_numbers<[1], [0], [0], [1], [0, 0, 1, 1], [], []>} : vector<64x64xbf16>, vector<64x64xbf16>, vector<64x64xf32> -> vector<64x64xf32>
    %136 = arith.addf %129, %135 : vector<64x64xf32>
    %c1_124 = arith.constant 1 : index
    %c8_125 = arith.constant 8 : index
    %c0_126 = arith.constant 0 : index
    %137 = vector.load %arg6[%c1_124, %c8_125, %c0_126] : memref<10x24x64xf32, #tpu.memory_space<vmem>>, vector<8x8x64xf32>
    %c13 = arith.constant 13 : index
    %c0_127 = arith.constant 0 : index
    %c0_128 = arith.constant 0 : index
    %138 = vector.load %arg3[%c13, %c0_127, %c0_128] : memref<36x64x64xbf16, #tpu.memory_space<vmem>>, vector<1x64x64xbf16>
    %139 = vector.shape_cast %138 : vector<1x64x64xbf16> to vector<64x64xbf16>
    %140 = vector.shape_cast %137 : vector<8x8x64xf32> to vector<64x64xf32>
    %141 = arith.truncf %140 : vector<64x64xf32> to vector<64x64xbf16>
    %cst_129 = arith.constant dense<0.000000e+00> : vector<64x64xf32>
    %142 = tpu.matmul %141, %139, %cst_129 {dimension_numbers = #tpu.dot_dimension_numbers<[1], [0], [0], [1], [0, 0, 1, 1], [], []>} : vector<64x64xbf16>, vector<64x64xbf16>, vector<64x64xf32> -> vector<64x64xf32>
    %143 = arith.addf %136, %142 : vector<64x64xf32>
    %c1_130 = arith.constant 1 : index
    %c9_131 = arith.constant 9 : index
    %c0_132 = arith.constant 0 : index
    %144 = vector.load %arg6[%c1_130, %c9_131, %c0_132] : memref<10x24x64xf32, #tpu.memory_space<vmem>>, vector<8x8x64xf32>
    %c14 = arith.constant 14 : index
    %c0_133 = arith.constant 0 : index
    %c0_134 = arith.constant 0 : index
    %145 = vector.load %arg3[%c14, %c0_133, %c0_134] : memref<36x64x64xbf16, #tpu.memory_space<vmem>>, vector<1x64x64xbf16>
    %146 = vector.shape_cast %145 : vector<1x64x64xbf16> to vector<64x64xbf16>
    %147 = vector.shape_cast %144 : vector<8x8x64xf32> to vector<64x64xf32>
    %148 = arith.truncf %147 : vector<64x64xf32> to vector<64x64xbf16>
    %cst_135 = arith.constant dense<0.000000e+00> : vector<64x64xf32>
    %149 = tpu.matmul %148, %146, %cst_135 {dimension_numbers = #tpu.dot_dimension_numbers<[1], [0], [0], [1], [0, 0, 1, 1], [], []>} : vector<64x64xbf16>, vector<64x64xbf16>, vector<64x64xf32> -> vector<64x64xf32>
    %150 = arith.addf %143, %149 : vector<64x64xf32>
    %c2_136 = arith.constant 2 : index
    %c7_137 = arith.constant 7 : index
    %c0_138 = arith.constant 0 : index
    %151 = vector.load %arg6[%c2_136, %c7_137, %c0_138] : memref<10x24x64xf32, #tpu.memory_space<vmem>>, vector<8x8x64xf32>
    %c15 = arith.constant 15 : index
    %c0_139 = arith.constant 0 : index
    %c0_140 = arith.constant 0 : index
    %152 = vector.load %arg3[%c15, %c0_139, %c0_140] : memref<36x64x64xbf16, #tpu.memory_space<vmem>>, vector<1x64x64xbf16>
    %153 = vector.shape_cast %152 : vector<1x64x64xbf16> to vector<64x64xbf16>
    %154 = vector.shape_cast %151 : vector<8x8x64xf32> to vector<64x64xf32>
    %155 = arith.truncf %154 : vector<64x64xf32> to vector<64x64xbf16>
    %cst_141 = arith.constant dense<0.000000e+00> : vector<64x64xf32>
    %156 = tpu.matmul %155, %153, %cst_141 {dimension_numbers = #tpu.dot_dimension_numbers<[1], [0], [0], [1], [0, 0, 1, 1], [], []>} : vector<64x64xbf16>, vector<64x64xbf16>, vector<64x64xf32> -> vector<64x64xf32>
    %157 = arith.addf %150, %156 : vector<64x64xf32>
    %c2_142 = arith.constant 2 : index
    %c8_143 = arith.constant 8 : index
    %c0_144 = arith.constant 0 : index
    %158 = vector.load %arg6[%c2_142, %c8_143, %c0_144] : memref<10x24x64xf32, #tpu.memory_space<vmem>>, vector<8x8x64xf32>
    %c16 = arith.constant 16 : index
    %c0_145 = arith.constant 0 : index
    %c0_146 = arith.constant 0 : index
    %159 = vector.load %arg3[%c16, %c0_145, %c0_146] : memref<36x64x64xbf16, #tpu.memory_space<vmem>>, vector<1x64x64xbf16>
    %160 = vector.shape_cast %159 : vector<1x64x64xbf16> to vector<64x64xbf16>
    %161 = vector.shape_cast %158 : vector<8x8x64xf32> to vector<64x64xf32>
    %162 = arith.truncf %161 : vector<64x64xf32> to vector<64x64xbf16>
    %cst_147 = arith.constant dense<0.000000e+00> : vector<64x64xf32>
    %163 = tpu.matmul %162, %160, %cst_147 {dimension_numbers = #tpu.dot_dimension_numbers<[1], [0], [0], [1], [0, 0, 1, 1], [], []>} : vector<64x64xbf16>, vector<64x64xbf16>, vector<64x64xf32> -> vector<64x64xf32>
    %164 = arith.addf %157, %163 : vector<64x64xf32>
    %c2_148 = arith.constant 2 : index
    %c9_149 = arith.constant 9 : index
    %c0_150 = arith.constant 0 : index
    %165 = vector.load %arg6[%c2_148, %c9_149, %c0_150] : memref<10x24x64xf32, #tpu.memory_space<vmem>>, vector<8x8x64xf32>
    %c17 = arith.constant 17 : index
    %c0_151 = arith.constant 0 : index
    %c0_152 = arith.constant 0 : index
    %166 = vector.load %arg3[%c17, %c0_151, %c0_152] : memref<36x64x64xbf16, #tpu.memory_space<vmem>>, vector<1x64x64xbf16>
    %167 = vector.shape_cast %166 : vector<1x64x64xbf16> to vector<64x64xbf16>
    %168 = vector.shape_cast %165 : vector<8x8x64xf32> to vector<64x64xf32>
    %169 = arith.truncf %168 : vector<64x64xf32> to vector<64x64xbf16>
    %cst_153 = arith.constant dense<0.000000e+00> : vector<64x64xf32>
    %170 = tpu.matmul %169, %167, %cst_153 {dimension_numbers = #tpu.dot_dimension_numbers<[1], [0], [0], [1], [0, 0, 1, 1], [], []>} : vector<64x64xbf16>, vector<64x64xbf16>, vector<64x64xf32> -> vector<64x64xf32>
    %171 = arith.addf %164, %170 : vector<64x64xf32>
    %c2_154 = arith.constant 2 : index
    %c0_155 = arith.constant 0 : index
    %172 = vector.load %arg4[%c2_154, %c0_155] : memref<5x64xf32, #tpu.memory_space<vmem>>, vector<1x64xf32>
    %173 = vector.broadcast %172 : vector<1x64xf32> to vector<64x64xf32>
    %174 = arith.addf %171, %173 : vector<64x64xf32>
    %175 = arith.addf %174, %34 : vector<64x64xf32>
    %cst_156 = arith.constant 0.000000e+00 : f32
    %176 = vector.broadcast %cst_156 : f32 to vector<64x64xf32>
    %177 = arith.maximumf %175, %176 : vector<64x64xf32>
    %178 = vector.shape_cast %177 : vector<64x64xf32> to vector<8x8x64xf32>
    %c1_157 = arith.constant 1 : index
    %c8_158 = arith.constant 8 : index
    %c0_159 = arith.constant 0 : index
    %179 = vector.load %arg6[%c1_157, %c8_158, %c0_159] : memref<10x24x64xf32, #tpu.memory_space<vmem>>, vector<8x8x64xf32>
    tpu.vector_store %arg6[%c1_157, %c8_158, %c0_159], %178 {strides = array<i32>} : memref<10x24x64xf32, #tpu.memory_space<vmem>>, vector<8x8x64xf32>,
    %cst_160 = arith.constant 0.000000e+00 : f32
    %180 = vector.broadcast %cst_160 : f32 to vector<64x64xf32>
    %c0_161 = arith.constant 0 : index
    %c7_162 = arith.constant 7 : index
    %c0_163 = arith.constant 0 : index
    %181 = vector.load %arg6[%c0_161, %c7_162, %c0_163] : memref<10x24x64xf32, #tpu.memory_space<vmem>>, vector<8x8x64xf32>
    %c18 = arith.constant 18 : index
    %c0_164 = arith.constant 0 : index
    %c0_165 = arith.constant 0 : index
    %182 = vector.load %arg3[%c18, %c0_164, %c0_165] : memref<36x64x64xbf16, #tpu.memory_space<vmem>>, vector<1x64x64xbf16>
    %183 = vector.shape_cast %182 : vector<1x64x64xbf16> to vector<64x64xbf16>
    %184 = vector.shape_cast %181 : vector<8x8x64xf32> to vector<64x64xf32>
    %185 = arith.truncf %184 : vector<64x64xf32> to vector<64x64xbf16>
    %cst_166 = arith.constant dense<0.000000e+00> : vector<64x64xf32>
    %186 = tpu.matmul %185, %183, %cst_166 {dimension_numbers = #tpu.dot_dimension_numbers<[1], [0], [0], [1], [0, 0, 1, 1], [], []>} : vector<64x64xbf16>, vector<64x64xbf16>, vector<64x64xf32> -> vector<64x64xf32>
    %187 = arith.addf %180, %186 : vector<64x64xf32>
    %c0_167 = arith.constant 0 : index
    %c8_168 = arith.constant 8 : index
    %c0_169 = arith.constant 0 : index
    %188 = vector.load %arg6[%c0_167, %c8_168, %c0_169] : memref<10x24x64xf32, #tpu.memory_space<vmem>>, vector<8x8x64xf32>
    %c19 = arith.constant 19 : index
    %c0_170 = arith.constant 0 : index
    %c0_171 = arith.constant 0 : index
    %189 = vector.load %arg3[%c19, %c0_170, %c0_171] : memref<36x64x64xbf16, #tpu.memory_space<vmem>>, vector<1x64x64xbf16>
    %190 = vector.shape_cast %189 : vector<1x64x64xbf16> to vector<64x64xbf16>
    %191 = vector.shape_cast %188 : vector<8x8x64xf32> to vector<64x64xf32>
    %192 = arith.truncf %191 : vector<64x64xf32> to vector<64x64xbf16>
    %cst_172 = arith.constant dense<0.000000e+00> : vector<64x64xf32>
    %193 = tpu.matmul %192, %190, %cst_172 {dimension_numbers = #tpu.dot_dimension_numbers<[1], [0], [0], [1], [0, 0, 1, 1], [], []>} : vector<64x64xbf16>, vector<64x64xbf16>, vector<64x64xf32> -> vector<64x64xf32>
    %194 = arith.addf %187, %193 : vector<64x64xf32>
    %c0_173 = arith.constant 0 : index
    %c9_174 = arith.constant 9 : index
    %c0_175 = arith.constant 0 : index
    %195 = vector.load %arg6[%c0_173, %c9_174, %c0_175] : memref<10x24x64xf32, #tpu.memory_space<vmem>>, vector<8x8x64xf32>
    %c20 = arith.constant 20 : index
    %c0_176 = arith.constant 0 : index
    %c0_177 = arith.constant 0 : index
    %196 = vector.load %arg3[%c20, %c0_176, %c0_177] : memref<36x64x64xbf16, #tpu.memory_space<vmem>>, vector<1x64x64xbf16>
    %197 = vector.shape_cast %196 : vector<1x64x64xbf16> to vector<64x64xbf16>
    %198 = vector.shape_cast %195 : vector<8x8x64xf32> to vector<64x64xf32>
    %199 = arith.truncf %198 : vector<64x64xf32> to vector<64x64xbf16>
    %cst_178 = arith.constant dense<0.000000e+00> : vector<64x64xf32>
    %200 = tpu.matmul %199, %197, %cst_178 {dimension_numbers = #tpu.dot_dimension_numbers<[1], [0], [0], [1], [0, 0, 1, 1], [], []>} : vector<64x64xbf16>, vector<64x64xbf16>, vector<64x64xf32> -> vector<64x64xf32>
    %201 = arith.addf %194, %200 : vector<64x64xf32>
    %c1_179 = arith.constant 1 : index
    %c7_180 = arith.constant 7 : index
    %c0_181 = arith.constant 0 : index
    %202 = vector.load %arg6[%c1_179, %c7_180, %c0_181] : memref<10x24x64xf32, #tpu.memory_space<vmem>>, vector<8x8x64xf32>
    %c21 = arith.constant 21 : index
    %c0_182 = arith.constant 0 : index
    %c0_183 = arith.constant 0 : index
    %203 = vector.load %arg3[%c21, %c0_182, %c0_183] : memref<36x64x64xbf16, #tpu.memory_space<vmem>>, vector<1x64x64xbf16>
    %204 = vector.shape_cast %203 : vector<1x64x64xbf16> to vector<64x64xbf16>
    %205 = vector.shape_cast %202 : vector<8x8x64xf32> to vector<64x64xf32>
    %206 = arith.truncf %205 : vector<64x64xf32> to vector<64x64xbf16>
    %cst_184 = arith.constant dense<0.000000e+00> : vector<64x64xf32>
    %207 = tpu.matmul %206, %204, %cst_184 {dimension_numbers = #tpu.dot_dimension_numbers<[1], [0], [0], [1], [0, 0, 1, 1], [], []>} : vector<64x64xbf16>, vector<64x64xbf16>, vector<64x64xf32> -> vector<64x64xf32>
    %208 = arith.addf %201, %207 : vector<64x64xf32>
    %c1_185 = arith.constant 1 : index
    %c8_186 = arith.constant 8 : index
    %c0_187 = arith.constant 0 : index
    %209 = vector.load %arg6[%c1_185, %c8_186, %c0_187] : memref<10x24x64xf32, #tpu.memory_space<vmem>>, vector<8x8x64xf32>
    %c22 = arith.constant 22 : index
    %c0_188 = arith.constant 0 : index
    %c0_189 = arith.constant 0 : index
    %210 = vector.load %arg3[%c22, %c0_188, %c0_189] : memref<36x64x64xbf16, #tpu.memory_space<vmem>>, vector<1x64x64xbf16>
    %211 = vector.shape_cast %210 : vector<1x64x64xbf16> to vector<64x64xbf16>
    %212 = vector.shape_cast %209 : vector<8x8x64xf32> to vector<64x64xf32>
    %213 = arith.truncf %212 : vector<64x64xf32> to vector<64x64xbf16>
    %cst_190 = arith.constant dense<0.000000e+00> : vector<64x64xf32>
    %214 = tpu.matmul %213, %211, %cst_190 {dimension_numbers = #tpu.dot_dimension_numbers<[1], [0], [0], [1], [0, 0, 1, 1], [], []>} : vector<64x64xbf16>, vector<64x64xbf16>, vector<64x64xf32> -> vector<64x64xf32>
    %215 = arith.addf %208, %214 : vector<64x64xf32>
    %c1_191 = arith.constant 1 : index
    %c9_192 = arith.constant 9 : index
    %c0_193 = arith.constant 0 : index
    %216 = vector.load %arg6[%c1_191, %c9_192, %c0_193] : memref<10x24x64xf32, #tpu.memory_space<vmem>>, vector<8x8x64xf32>
    %c23 = arith.constant 23 : index
    %c0_194 = arith.constant 0 : index
    %c0_195 = arith.constant 0 : index
    %217 = vector.load %arg3[%c23, %c0_194, %c0_195] : memref<36x64x64xbf16, #tpu.memory_space<vmem>>, vector<1x64x64xbf16>
    %218 = vector.shape_cast %217 : vector<1x64x64xbf16> to vector<64x64xbf16>
    %219 = vector.shape_cast %216 : vector<8x8x64xf32> to vector<64x64xf32>
    %220 = arith.truncf %219 : vector<64x64xf32> to vector<64x64xbf16>
    %cst_196 = arith.constant dense<0.000000e+00> : vector<64x64xf32>
    %221 = tpu.matmul %220, %218, %cst_196 {dimension_numbers = #tpu.dot_dimension_numbers<[1], [0], [0], [1], [0, 0, 1, 1], [], []>} : vector<64x64xbf16>, vector<64x64xbf16>, vector<64x64xf32> -> vector<64x64xf32>
    %222 = arith.addf %215, %221 : vector<64x64xf32>
    %c2_197 = arith.constant 2 : index
    %c7_198 = arith.constant 7 : index
    %c0_199 = arith.constant 0 : index
    %223 = vector.load %arg6[%c2_197, %c7_198, %c0_199] : memref<10x24x64xf32, #tpu.memory_space<vmem>>, vector<8x8x64xf32>
    %c24 = arith.constant 24 : index
    %c0_200 = arith.constant 0 : index
    %c0_201 = arith.constant 0 : index
    %224 = vector.load %arg3[%c24, %c0_200, %c0_201] : memref<36x64x64xbf16, #tpu.memory_space<vmem>>, vector<1x64x64xbf16>
    %225 = vector.shape_cast %224 : vector<1x64x64xbf16> to vector<64x64xbf16>
    %226 = vector.shape_cast %223 : vector<8x8x64xf32> to vector<64x64xf32>
    %227 = arith.truncf %226 : vector<64x64xf32> to vector<64x64xbf16>
    %cst_202 = arith.constant dense<0.000000e+00> : vector<64x64xf32>
    %228 = tpu.matmul %227, %225, %cst_202 {dimension_numbers = #tpu.dot_dimension_numbers<[1], [0], [0], [1], [0, 0, 1, 1], [], []>} : vector<64x64xbf16>, vector<64x64xbf16>, vector<64x64xf32> -> vector<64x64xf32>
    %229 = arith.addf %222, %228 : vector<64x64xf32>
    %c2_203 = arith.constant 2 : index
    %c8_204 = arith.constant 8 : index
    %c0_205 = arith.constant 0 : index
    %230 = vector.load %arg6[%c2_203, %c8_204, %c0_205] : memref<10x24x64xf32, #tpu.memory_space<vmem>>, vector<8x8x64xf32>
    %c25 = arith.constant 25 : index
    %c0_206 = arith.constant 0 : index
    %c0_207 = arith.constant 0 : index
    %231 = vector.load %arg3[%c25, %c0_206, %c0_207] : memref<36x64x64xbf16, #tpu.memory_space<vmem>>, vector<1x64x64xbf16>
    %232 = vector.shape_cast %231 : vector<1x64x64xbf16> to vector<64x64xbf16>
    %233 = vector.shape_cast %230 : vector<8x8x64xf32> to vector<64x64xf32>
    %234 = arith.truncf %233 : vector<64x64xf32> to vector<64x64xbf16>
    %cst_208 = arith.constant dense<0.000000e+00> : vector<64x64xf32>
    %235 = tpu.matmul %234, %232, %cst_208 {dimension_numbers = #tpu.dot_dimension_numbers<[1], [0], [0], [1], [0, 0, 1, 1], [], []>} : vector<64x64xbf16>, vector<64x64xbf16>, vector<64x64xf32> -> vector<64x64xf32>
    %236 = arith.addf %229, %235 : vector<64x64xf32>
    %c2_209 = arith.constant 2 : index
    %c9_210 = arith.constant 9 : index
    %c0_211 = arith.constant 0 : index
    %237 = vector.load %arg6[%c2_209, %c9_210, %c0_211] : memref<10x24x64xf32, #tpu.memory_space<vmem>>, vector<8x8x64xf32>
    %c26 = arith.constant 26 : index
    %c0_212 = arith.constant 0 : index
    %c0_213 = arith.constant 0 : index
    %238 = vector.load %arg3[%c26, %c0_212, %c0_213] : memref<36x64x64xbf16, #tpu.memory_space<vmem>>, vector<1x64x64xbf16>
    %239 = vector.shape_cast %238 : vector<1x64x64xbf16> to vector<64x64xbf16>
    %240 = vector.shape_cast %237 : vector<8x8x64xf32> to vector<64x64xf32>
    %241 = arith.truncf %240 : vector<64x64xf32> to vector<64x64xbf16>
    %cst_214 = arith.constant dense<0.000000e+00> : vector<64x64xf32>
    %242 = tpu.matmul %241, %239, %cst_214 {dimension_numbers = #tpu.dot_dimension_numbers<[1], [0], [0], [1], [0, 0, 1, 1], [], []>} : vector<64x64xbf16>, vector<64x64xbf16>, vector<64x64xf32> -> vector<64x64xf32>
    %243 = arith.addf %236, %242 : vector<64x64xf32>
    %c3_215 = arith.constant 3 : index
    %c0_216 = arith.constant 0 : index
    %244 = vector.load %arg4[%c3_215, %c0_216] : memref<5x64xf32, #tpu.memory_space<vmem>>, vector<1x64xf32>
    %245 = vector.broadcast %244 : vector<1x64xf32> to vector<64x64xf32>
    %246 = arith.addf %243, %245 : vector<64x64xf32>
    %cst_217 = arith.constant 0.000000e+00 : f32
    %247 = vector.broadcast %cst_217 : f32 to vector<64x64xf32>
    %248 = arith.maximumf %246, %247 : vector<64x64xf32>
    %249 = vector.shape_cast %248 : vector<64x64xf32> to vector<8x8x64xf32>
    %c1_218 = arith.constant 1 : index
    %c8_219 = arith.constant 8 : index
    %c0_220 = arith.constant 0 : index
    %250 = vector.load %arg6[%c1_218, %c8_219, %c0_220] : memref<10x24x64xf32, #tpu.memory_space<vmem>>, vector<8x8x64xf32>
    tpu.vector_store %arg6[%c1_218, %c8_219, %c0_220], %249 {strides = array<i32>} : memref<10x24x64xf32, #tpu.memory_space<vmem>>, vector<8x8x64xf32>,
    %cst_221 = arith.constant 0.000000e+00 : f32
    %251 = vector.broadcast %cst_221 : f32 to vector<64x64xf32>
    %c0_222 = arith.constant 0 : index
    %c7_223 = arith.constant 7 : index
    %c0_224 = arith.constant 0 : index
    %252 = vector.load %arg6[%c0_222, %c7_223, %c0_224] : memref<10x24x64xf32, #tpu.memory_space<vmem>>, vector<8x8x64xf32>
    %c27 = arith.constant 27 : index
    %c0_225 = arith.constant 0 : index
    %c0_226 = arith.constant 0 : index
    %253 = vector.load %arg3[%c27, %c0_225, %c0_226] : memref<36x64x64xbf16, #tpu.memory_space<vmem>>, vector<1x64x64xbf16>
    %254 = vector.shape_cast %253 : vector<1x64x64xbf16> to vector<64x64xbf16>
    %255 = vector.shape_cast %252 : vector<8x8x64xf32> to vector<64x64xf32>
    %256 = arith.truncf %255 : vector<64x64xf32> to vector<64x64xbf16>
    %cst_227 = arith.constant dense<0.000000e+00> : vector<64x64xf32>
    %257 = tpu.matmul %256, %254, %cst_227 {dimension_numbers = #tpu.dot_dimension_numbers<[1], [0], [0], [1], [0, 0, 1, 1], [], []>} : vector<64x64xbf16>, vector<64x64xbf16>, vector<64x64xf32> -> vector<64x64xf32>
    %258 = arith.addf %251, %257 : vector<64x64xf32>
    %c0_228 = arith.constant 0 : index
    %c8_229 = arith.constant 8 : index
    %c0_230 = arith.constant 0 : index
    %259 = vector.load %arg6[%c0_228, %c8_229, %c0_230] : memref<10x24x64xf32, #tpu.memory_space<vmem>>, vector<8x8x64xf32>
    %c28 = arith.constant 28 : index
    %c0_231 = arith.constant 0 : index
    %c0_232 = arith.constant 0 : index
    %260 = vector.load %arg3[%c28, %c0_231, %c0_232] : memref<36x64x64xbf16, #tpu.memory_space<vmem>>, vector<1x64x64xbf16>
    %261 = vector.shape_cast %260 : vector<1x64x64xbf16> to vector<64x64xbf16>
    %262 = vector.shape_cast %259 : vector<8x8x64xf32> to vector<64x64xf32>
    %263 = arith.truncf %262 : vector<64x64xf32> to vector<64x64xbf16>
    %cst_233 = arith.constant dense<0.000000e+00> : vector<64x64xf32>
    %264 = tpu.matmul %263, %261, %cst_233 {dimension_numbers = #tpu.dot_dimension_numbers<[1], [0], [0], [1], [0, 0, 1, 1], [], []>} : vector<64x64xbf16>, vector<64x64xbf16>, vector<64x64xf32> -> vector<64x64xf32>
    %265 = arith.addf %258, %264 : vector<64x64xf32>
    %c0_234 = arith.constant 0 : index
    %c9_235 = arith.constant 9 : index
    %c0_236 = arith.constant 0 : index
    %266 = vector.load %arg6[%c0_234, %c9_235, %c0_236] : memref<10x24x64xf32, #tpu.memory_space<vmem>>, vector<8x8x64xf32>
    %c29 = arith.constant 29 : index
    %c0_237 = arith.constant 0 : index
    %c0_238 = arith.constant 0 : index
    %267 = vector.load %arg3[%c29, %c0_237, %c0_238] : memref<36x64x64xbf16, #tpu.memory_space<vmem>>, vector<1x64x64xbf16>
    %268 = vector.shape_cast %267 : vector<1x64x64xbf16> to vector<64x64xbf16>
    %269 = vector.shape_cast %266 : vector<8x8x64xf32> to vector<64x64xf32>
    %270 = arith.truncf %269 : vector<64x64xf32> to vector<64x64xbf16>
    %cst_239 = arith.constant dense<0.000000e+00> : vector<64x64xf32>
    %271 = tpu.matmul %270, %268, %cst_239 {dimension_numbers = #tpu.dot_dimension_numbers<[1], [0], [0], [1], [0, 0, 1, 1], [], []>} : vector<64x64xbf16>, vector<64x64xbf16>, vector<64x64xf32> -> vector<64x64xf32>
    %272 = arith.addf %265, %271 : vector<64x64xf32>
    %c1_240 = arith.constant 1 : index
    %c7_241 = arith.constant 7 : index
    %c0_242 = arith.constant 0 : index
    %273 = vector.load %arg6[%c1_240, %c7_241, %c0_242] : memref<10x24x64xf32, #tpu.memory_space<vmem>>, vector<8x8x64xf32>
    %c30 = arith.constant 30 : index
    %c0_243 = arith.constant 0 : index
    %c0_244 = arith.constant 0 : index
    %274 = vector.load %arg3[%c30, %c0_243, %c0_244] : memref<36x64x64xbf16, #tpu.memory_space<vmem>>, vector<1x64x64xbf16>
    %275 = vector.shape_cast %274 : vector<1x64x64xbf16> to vector<64x64xbf16>
    %276 = vector.shape_cast %273 : vector<8x8x64xf32> to vector<64x64xf32>
    %277 = arith.truncf %276 : vector<64x64xf32> to vector<64x64xbf16>
    %cst_245 = arith.constant dense<0.000000e+00> : vector<64x64xf32>
    %278 = tpu.matmul %277, %275, %cst_245 {dimension_numbers = #tpu.dot_dimension_numbers<[1], [0], [0], [1], [0, 0, 1, 1], [], []>} : vector<64x64xbf16>, vector<64x64xbf16>, vector<64x64xf32> -> vector<64x64xf32>
    %279 = arith.addf %272, %278 : vector<64x64xf32>
    %c1_246 = arith.constant 1 : index
    %c8_247 = arith.constant 8 : index
    %c0_248 = arith.constant 0 : index
    %280 = vector.load %arg6[%c1_246, %c8_247, %c0_248] : memref<10x24x64xf32, #tpu.memory_space<vmem>>, vector<8x8x64xf32>
    %c31 = arith.constant 31 : index
    %c0_249 = arith.constant 0 : index
    %c0_250 = arith.constant 0 : index
    %281 = vector.load %arg3[%c31, %c0_249, %c0_250] : memref<36x64x64xbf16, #tpu.memory_space<vmem>>, vector<1x64x64xbf16>
    %282 = vector.shape_cast %281 : vector<1x64x64xbf16> to vector<64x64xbf16>
    %283 = vector.shape_cast %280 : vector<8x8x64xf32> to vector<64x64xf32>
    %284 = arith.truncf %283 : vector<64x64xf32> to vector<64x64xbf16>
    %cst_251 = arith.constant dense<0.000000e+00> : vector<64x64xf32>
    %285 = tpu.matmul %284, %282, %cst_251 {dimension_numbers = #tpu.dot_dimension_numbers<[1], [0], [0], [1], [0, 0, 1, 1], [], []>} : vector<64x64xbf16>, vector<64x64xbf16>, vector<64x64xf32> -> vector<64x64xf32>
    %286 = arith.addf %279, %285 : vector<64x64xf32>
    %c1_252 = arith.constant 1 : index
    %c9_253 = arith.constant 9 : index
    %c0_254 = arith.constant 0 : index
    %287 = vector.load %arg6[%c1_252, %c9_253, %c0_254] : memref<10x24x64xf32, #tpu.memory_space<vmem>>, vector<8x8x64xf32>
    %c32 = arith.constant 32 : index
    %c0_255 = arith.constant 0 : index
    %c0_256 = arith.constant 0 : index
    %288 = vector.load %arg3[%c32, %c0_255, %c0_256] : memref<36x64x64xbf16, #tpu.memory_space<vmem>>, vector<1x64x64xbf16>
    %289 = vector.shape_cast %288 : vector<1x64x64xbf16> to vector<64x64xbf16>
    %290 = vector.shape_cast %287 : vector<8x8x64xf32> to vector<64x64xf32>
    %291 = arith.truncf %290 : vector<64x64xf32> to vector<64x64xbf16>
    %cst_257 = arith.constant dense<0.000000e+00> : vector<64x64xf32>
    %292 = tpu.matmul %291, %289, %cst_257 {dimension_numbers = #tpu.dot_dimension_numbers<[1], [0], [0], [1], [0, 0, 1, 1], [], []>} : vector<64x64xbf16>, vector<64x64xbf16>, vector<64x64xf32> -> vector<64x64xf32>
    %293 = arith.addf %286, %292 : vector<64x64xf32>
    %c2_258 = arith.constant 2 : index
    %c7_259 = arith.constant 7 : index
    %c0_260 = arith.constant 0 : index
    %294 = vector.load %arg6[%c2_258, %c7_259, %c0_260] : memref<10x24x64xf32, #tpu.memory_space<vmem>>, vector<8x8x64xf32>
    %c33 = arith.constant 33 : index
    %c0_261 = arith.constant 0 : index
    %c0_262 = arith.constant 0 : index
    %295 = vector.load %arg3[%c33, %c0_261, %c0_262] : memref<36x64x64xbf16, #tpu.memory_space<vmem>>, vector<1x64x64xbf16>
    %296 = vector.shape_cast %295 : vector<1x64x64xbf16> to vector<64x64xbf16>
    %297 = vector.shape_cast %294 : vector<8x8x64xf32> to vector<64x64xf32>
    %298 = arith.truncf %297 : vector<64x64xf32> to vector<64x64xbf16>
    %cst_263 = arith.constant dense<0.000000e+00> : vector<64x64xf32>
    %299 = tpu.matmul %298, %296, %cst_263 {dimension_numbers = #tpu.dot_dimension_numbers<[1], [0], [0], [1], [0, 0, 1, 1], [], []>} : vector<64x64xbf16>, vector<64x64xbf16>, vector<64x64xf32> -> vector<64x64xf32>
    %300 = arith.addf %293, %299 : vector<64x64xf32>
    %c2_264 = arith.constant 2 : index
    %c8_265 = arith.constant 8 : index
    %c0_266 = arith.constant 0 : index
    %301 = vector.load %arg6[%c2_264, %c8_265, %c0_266] : memref<10x24x64xf32, #tpu.memory_space<vmem>>, vector<8x8x64xf32>
    %c34 = arith.constant 34 : index
    %c0_267 = arith.constant 0 : index
    %c0_268 = arith.constant 0 : index
    %302 = vector.load %arg3[%c34, %c0_267, %c0_268] : memref<36x64x64xbf16, #tpu.memory_space<vmem>>, vector<1x64x64xbf16>
    %303 = vector.shape_cast %302 : vector<1x64x64xbf16> to vector<64x64xbf16>
    %304 = vector.shape_cast %301 : vector<8x8x64xf32> to vector<64x64xf32>
    %305 = arith.truncf %304 : vector<64x64xf32> to vector<64x64xbf16>
    %cst_269 = arith.constant dense<0.000000e+00> : vector<64x64xf32>
    %306 = tpu.matmul %305, %303, %cst_269 {dimension_numbers = #tpu.dot_dimension_numbers<[1], [0], [0], [1], [0, 0, 1, 1], [], []>} : vector<64x64xbf16>, vector<64x64xbf16>, vector<64x64xf32> -> vector<64x64xf32>
    %307 = arith.addf %300, %306 : vector<64x64xf32>
    %c2_270 = arith.constant 2 : index
    %c9_271 = arith.constant 9 : index
    %c0_272 = arith.constant 0 : index
    %308 = vector.load %arg6[%c2_270, %c9_271, %c0_272] : memref<10x24x64xf32, #tpu.memory_space<vmem>>, vector<8x8x64xf32>
    %c35 = arith.constant 35 : index
    %c0_273 = arith.constant 0 : index
    %c0_274 = arith.constant 0 : index
    %309 = vector.load %arg3[%c35, %c0_273, %c0_274] : memref<36x64x64xbf16, #tpu.memory_space<vmem>>, vector<1x64x64xbf16>
    %310 = vector.shape_cast %309 : vector<1x64x64xbf16> to vector<64x64xbf16>
    %311 = vector.shape_cast %308 : vector<8x8x64xf32> to vector<64x64xf32>
    %312 = arith.truncf %311 : vector<64x64xf32> to vector<64x64xbf16>
    %cst_275 = arith.constant dense<0.000000e+00> : vector<64x64xf32>
    %313 = tpu.matmul %312, %310, %cst_275 {dimension_numbers = #tpu.dot_dimension_numbers<[1], [0], [0], [1], [0, 0, 1, 1], [], []>} : vector<64x64xbf16>, vector<64x64xbf16>, vector<64x64xf32> -> vector<64x64xf32>
    %314 = arith.addf %307, %313 : vector<64x64xf32>
    %c4_276 = arith.constant 4 : index
    %c0_277 = arith.constant 0 : index
    %315 = vector.load %arg4[%c4_276, %c0_277] : memref<5x64xf32, #tpu.memory_space<vmem>>, vector<1x64xf32>
    %316 = vector.broadcast %315 : vector<1x64xf32> to vector<64x64xf32>
    %317 = arith.addf %314, %316 : vector<64x64xf32>
    %318 = arith.addf %317, %177 : vector<64x64xf32>
    %cst_278 = arith.constant 0.000000e+00 : f32
    %319 = vector.broadcast %cst_278 : f32 to vector<64x64xf32>
    %320 = arith.maximumf %318, %319 : vector<64x64xf32>
    %c0_279 = arith.constant 0 : index
    %c0_280 = arith.constant 0 : index
    %321 = vector.load %arg5[%c0_279, %c0_280] : memref<64x64xf32, #tpu.memory_space<vmem>>, vector<64x64xf32>
    tpu.vector_store %arg5[%c0_279, %c0_280], %320 {strides = array<i32>} : memref<64x64xf32, #tpu.memory_space<vmem>>, vector<64x64xf32>,
    return
  }
  func.func @transform_0(%arg0: i32) -> (i32, i32) {
    %c0_i32 = arith.constant 0 : i32
    %c0_i32_0 = arith.constant 0 : i32
    return %arg0, %c0_i32 : i32, i32
  }
  func.func @transform_1(%arg0: i32) -> (i32, i32) {
    %c0_i32 = arith.constant 0 : i32
    %c0_i32_0 = arith.constant 0 : i32
    %c0_i32_1 = arith.constant 0 : i32
    return %c0_i32, %c0_i32_0 : i32, i32
  }
  func.func @transform_2(%arg0: i32) -> (i32, i32, i32) {
    %c0_i32 = arith.constant 0 : i32
    %c0_i32_0 = arith.constant 0 : i32
    %c0_i32_1 = arith.constant 0 : i32
    %c0_i32_2 = arith.constant 0 : i32
    return %c0_i32, %c0_i32_0, %c0_i32_1 : i32, i32, i32
  }
  func.func @transform_3(%arg0: i32) -> (i32, i32) {
    %c0_i32 = arith.constant 0 : i32
    %c0_i32_0 = arith.constant 0 : i32
    %c0_i32_1 = arith.constant 0 : i32
    return %c0_i32, %c0_i32_0 : i32, i32
  }
  func.func @transform_4(%arg0: i32) -> (i32, i32) {
    %c0_i32 = arith.constant 0 : i32
    %c0_i32_0 = arith.constant 0 : i32
    return %arg0, %c0_i32 : i32, i32
  }
}

</mosaic_0001>

<llo_original>
// kernel: resnet18_client_forward.1
$region0: #{resnet18_client_forward.1}
  #allocation0 [shape = 'u32[]', space=smem, size = 0x4, offset = 0x4, fixed_abs, tag = 'smem constant byte address 0x4 - core index']
  #allocation1 [shape = 'u32[72,128]{1,0:T(1,128)}', space=vmem, size = 0x9000, scoped, tag = 'internal scratch']
  #allocation2 [shape = 'f32[10,24,64]{2,1,0:T(8,128)}', space=vmem, size = 0x1e000, scoped, tag = 'scratch operand']
  %s0 = inlined_call_operand.vmem [shape: bf16[512,256], index: 0, kind: input, shape index: {}]
  %s1 = inlined_call_operand.vmem [shape: bf16[256,64], index: 1, kind: input, shape index: {}]
  %s2 = inlined_call_operand.vmem [shape: bf16[36,64,64], index: 2, kind: input, shape index: {}]
  %s3 = inlined_call_operand.vmem [shape: f32[5,64], index: 3, kind: input, shape index: {}]
  %s4 = inlined_call_operand.hbm [shape: f32[128,64], index: 4, kind: output, shape index: {}]
  %s5 = sld [smem:[#allocation0]]
  $region49: #{resnet18_client_forward.1} parent=0
    _
  %s7 = ssub.s32 1, %s5
  %s8 = scalar_select 0, %s7, %s5
  $region1: #{resnet18_client_forward.1} parent=0
    #allocation3 [shape = 'u8[65536]{0}', space=vmem, size = 0x10000, scoped, tag = 'output window, operand 0']
    #allocation4 [shape = 's32[2]{0}', space=sflag, size = 0x8, scoped, tag = 'scoped memory for resnet18_client_forward.1']
    %9 = vsyncpa [#allocation4], 0
    %s10 = scalar_lea.sflag [#allocation4], 1
    %11 = vsyncpa %s10, 0
    loop: start=0, step=1, limit=4
    $region2: #{resnet18_client_forward.1} parent=1 // loop_pre_header
      _
    $region3: #{resnet18_client_forward.1} parent=1 // loop_header
      %s13 = sphi 0, %s17
      %p14 = scmp.ge.s32.totalorder %s13, 4
      %s23 = sphi 0, %s25
      %s26 = sphi 0, %s23
      %s27 = sphi 0, %s26
      %s43 = sphi 0, %s27
      %s47 = sphi 0, %s47
      %s49 = sphi 0, %s47
      %s50 = sphi 0, %s49
      %s64 = sphi 0, %s50
      %s68 = sphi 0, %s68
      %s70 = sphi 0, %s68
      %s71 = sphi 0, %s70
      %s85 = sphi 0, %s71
      %s89 = sphi 0, %s89
      %s91 = sphi 0, %s89
      %s92 = sphi 0, %s91
      %s106 = sphi 0, %s92
      %s112 = sphi 0, %s114
      %s115 = sphi 0, %s112
      %s116 = sphi 0, %s115
      %s132 = sphi 0, %s116
    $region4: #{resnet18_client_forward.1} parent=1 // loop_header_branch
      %16 = sbr.rel (%p14) target = $region8
    $region5: #{resnet18_client_forward.1} parent=1 // loop_body
      %s18 = ssub.s32 %s13, 1
      %s19 = ssub.s32 %s13, 2
      %s20 = sadd.s32 %s13, 1
      %s21 = ssub.s32 %s13, %s20
      %p22 = scmp.eq.s32.totalorder %s21, 0
      %s24 = sadd.s32 %s23, 1
      %s25 = scalar_select %p22, %s23, %s24
      %p28 = pneg %p22
      %p29 = scmp.eq.s32.totalorder %s13, 1
      %p30 = por %p28, %p29
      %p31 = scmp.ne.s32.totalorder %s23, %s26
      %p32 = scmp.eq.s32.totalorder %s13, 0
      %p33 = por %p31, %p32
      %p34 = scmp.ne.s32.totalorder %s23, %s26
      %p35 = scmp.eq.s32.totalorder %s18, 1
      %p36 = por %p34, %p35
      %p37 = scmp.ne.s32.totalorder %s26, %s27
      %p38 = scmp.eq.s32.totalorder %s18, 0
      %p39 = por %p37, %p38
      %p40 = scmp.ne.s32.totalorder %s26, %s27
      %p41 = scmp.eq.s32.totalorder %s19, 1
      %p42 = por %p40, %p41
      %p44 = scmp.ne.s32.totalorder %s27, %s43
      %p45 = scmp.eq.s32.totalorder %s19, 0
      %p46 = por %p44, %p45
      %s48 = sadd.s32 %s47, 1
      %p51 = scmp.eq.s32.totalorder %s13, 1
      %p52 = scmp.ne.s32.totalorder %s47, %s49
      %p53 = scmp.eq.s32.totalorder %s13, 0
      %p54 = por %p52, %p53
      %p55 = scmp.ne.s32.totalorder %s47, %s49
      %p56 = scmp.eq.s32.totalorder %s18, 1
      %p57 = por %p55, %p56
      %p58 = scmp.ne.s32.totalorder %s49, %s50
      %p59 = scmp.eq.s32.totalorder %s18, 0
      %p60 = por %p58, %p59
      %p61 = scmp.ne.s32.totalorder %s49, %s50
      %p62 = scmp.eq.s32.totalorder %s19, 1
      %p63 = por %p61, %p62
      %p65 = scmp.ne.s32.totalorder %s50, %s64
      %p66 = scmp.eq.s32.totalorder %s19, 0
      %p67 = por %p65, %p66
      %s69 = sadd.s32 %s68, 1
      %p72 = scmp.eq.s32.totalorder %s13, 1
      %p73 = scmp.ne.s32.totalorder %s68, %s70
      %p74 = scmp.eq.s32.totalorder %s13, 0
      %p75 = por %p73, %p74
      %p76 = scmp.ne.s32.totalorder %s68, %s70
      %p77 = scmp.eq.s32.totalorder %s18, 1
      %p78 = por %p76, %p77
      %p79 = scmp.ne.s32.totalorder %s70, %s71
      %p80 = scmp.eq.s32.totalorder %s18, 0
      %p81 = por %p79, %p80
      %p82 = scmp.ne.s32.totalorder %s70, %s71
      %p83 = scmp.eq.s32.totalorder %s19, 1
      %p84 = por %p82, %p83
      %p86 = scmp.ne.s32.totalorder %s71, %s85
      %p87 = scmp.eq.s32.totalorder %s19, 0
      %p88 = por %p86, %p87
      %s90 = sadd.s32 %s89, 1
      %p93 = scmp.eq.s32.totalorder %s13, 1
      %p94 = scmp.ne.s32.totalorder %s89, %s91
      %p95 = scmp.eq.s32.totalorder %s13, 0
      %p96 = por %p94, %p95
      %p97 = scmp.ne.s32.totalorder %s89, %s91
      %p98 = scmp.eq.s32.totalorder %s18, 1
      %p99 = por %p97, %p98
      %p100 = scmp.ne.s32.totalorder %s91, %s92
      %p101 = scmp.eq.s32.totalorder %s18, 0
      %p102 = por %p100, %p101
      %p103 = scmp.ne.s32.totalorder %s91, %s92
      %p104 = scmp.eq.s32.totalorder %s19, 1
      %p105 = por %p103, %p104
      %p107 = scmp.ne.s32.totalorder %s92, %s106
      %p108 = scmp.eq.s32.totalorder %s19, 0
      %p109 = por %p107, %p108
      %s110 = ssub.s32 %s13, %s20
      %p111 = scmp.eq.s32.totalorder %s110, 0
      %s113 = sadd.s32 %s112, 1
      %s114 = scalar_select %p111, %s112, %s113
      %p117 = pneg %p111
      %p118 = scmp.eq.s32.totalorder %s13, 1
      %p119 = por %p117, %p118
      %p120 = scmp.ne.s32.totalorder %s112, %s115
      %p121 = scmp.eq.s32.totalorder %s13, 0
      %p122 = por %p120, %p121
      %p123 = scmp.ne.s32.totalorder %s112, %s115
      %p124 = scmp.eq.s32.totalorder %s18, 1
      %p125 = por %p123, %p124
      %p126 = scmp.ne.s32.totalorder %s115, %s116
      %p127 = scmp.eq.s32.totalorder %s18, 0
      %p128 = por %p126, %p127
      %p129 = scmp.ne.s32.totalorder %s115, %s116
      %p130 = scmp.eq.s32.totalorder %s19, 1
      %p131 = por %p129, %p130
      %p133 = scmp.ne.s32.totalorder %s116, %s132
      %p134 = scmp.eq.s32.totalorder %s19, 0
      %p135 = por %p133, %p134
      %p136 = scmp.le.s32.totalorder 1, %s13
      %p137 = scmp.lt.s32.totalorder %s13, 3
      %p138 = pnand %p136, %p137
      %p139 = pneg %p138
      // Predicated region
      $region9: #{resnet18_client_forward.1} parent=5 // pred_check
        _
      $region10: #{resnet18_client_forward.1} parent=5 // pred_check_branch
        %141 = sbr.rel (%p138) target = $region12
      $region11: #{resnet18_client_forward.1} parent=5 // pred_region
        %s142 = ssub.s32 %s13, 1
        // Predicated region
        $region13: #{resnet18_client_forward.1} parent=11 // pred_check
          %p143 = pneg %p60
        $region14: #{resnet18_client_forward.1} parent=11 // pred_check_branch
          %145 = sbr.rel (%p143) target = $region16
        $region15: #{resnet18_client_forward.1} parent=11 // pred_region
          _
        $region16: #{resnet18_client_forward.1} parent=11 // pred_fallthru
          _
        // Predicated region
        $region17: #{resnet18_client_forward.1} parent=11 // pred_check
          %p146 = pneg %p81
        $region18: #{resnet18_client_forward.1} parent=11 // pred_check_branch
          %148 = sbr.rel (%p146) target = $region20
        $region19: #{resnet18_client_forward.1} parent=11 // pred_region
          _
        $region20: #{resnet18_client_forward.1} parent=11 // pred_fallthru
          _
        // Predicated region
        $region21: #{resnet18_client_forward.1} parent=11 // pred_check
          %p149 = pneg %p102
        $region22: #{resnet18_client_forward.1} parent=11 // pred_check_branch
          %151 = sbr.rel (%p149) target = $region24
        $region23: #{resnet18_client_forward.1} parent=11 // pred_region
          _
        $region24: #{resnet18_client_forward.1} parent=11 // pred_fallthru
          _
      $region12: #{resnet18_client_forward.1} parent=5 // pred_fallthru
        _
      %p152 = scmp.lt.s32.totalorder %s13, 2
      // Predicated region
      $region25: #{resnet18_client_forward.1} parent=5 // pred_check
        %p153 = pneg %p152
      $region26: #{resnet18_client_forward.1} parent=5 // pred_check_branch
        %155 = sbr.rel (%p153) target = $region28
      $region27: #{resnet18_client_forward.1} parent=5 // pred_region
        // Predicated region
        $region29: #{resnet18_client_forward.1} parent=27 // pred_check
          %p156 = pneg %p33
        $region30: #{resnet18_client_forward.1} parent=27 // pred_check_branch
          %158 = sbr.rel (%p156) target = $region32
        $region31: #{resnet18_client_forward.1} parent=27 // pred_region
          %s159 = smul.u32 32, %s13
          %p160 = scmp.lt.s32.totalorder %s159, 63
          %s161 = scalar_select %p160, %s159, 63
          %s162 = smul.addr %s161, 2
          %s163 = smul.addr %s162, 4
          %s164 = scalar_lea.vmem %s0, %s163
          %s165 = smul.u32 32, %s13
        $region32: #{resnet18_client_forward.1} parent=27 // pred_fallthru
          _
      $region28: #{resnet18_client_forward.1} parent=5 // pred_fallthru
        _
      %p166 = scmp.le.s32.totalorder 1, %s13
      %p167 = scmp.lt.s32.totalorder %s13, 3
      %p168 = pnand %p166, %p167
      %p169 = pneg %p168
      // Predicated region
      $region33: #{resnet18_client_forward.1} parent=5 // pred_check
        _
      $region34: #{resnet18_client_forward.1} parent=5 // pred_check_branch
        %171 = sbr.rel (%p168) target = $region36
      $region35: #{resnet18_client_forward.1} parent=5 // pred_region
        %s172 = ssub.s32 %s13, 1
        %s173 = smul.u32 32, %s18
        %p174 = scmp.lt.s32.totalorder %s173, 63
        %s175 = scalar_select %p174, %s173, 63
        %s176 = smul.addr %s175, 2
        %s177 = smul.addr %s176, 4
        %s178 = scalar_lea.vmem %s0, %s177
        %p179 = pneg %p39
        %p180 = pneg %p36
        %p181 = pneg %p60
        %p182 = pneg %p57
        %p183 = pneg %p81
        %p184 = pneg %p78
        %p185 = pneg %p102
        %p186 = pneg %p99
        %p187 = pneg %p128
        %p188 = pneg %p125
        %s189 = sand.u32 %s115, 1
        %s190 = scalar_lea.sflag [#allocation4], %s189
        %s191 = sand.u32 %s115, 1
        %s192 = smul.addr %s191, 64
        %s193 = scalar_lea.vmem [#allocation3], %s192
        %s194 = smul.u32 32, %s18
        %p195 = scmp.lt.s32.totalorder %s194, 63
        %s196 = scalar_select %p195, %s194, 63
        %s197 = smul.addr %s196, 2
        %s198 = smul.addr %s197, 4
        %s199 = scalar_lea.vmem %s0, %s198
        %s200 = smul.u32 32, %s18
        %s201 = smul.u32 8, %s18
        %vm203 = vcmask 523264
        %204 = vst.msk [vmem:[#allocation2] sm:$0xff] %vm203, 0.0
        %205 = vst.msk [vmem:[#allocation2 + $0x8] sm:$0xff] %vm203, 0.0
        %206 = vst.msk [vmem:[#allocation2 + $0x10] sm:$0xff] %vm203, 0.0
        %207 = vst.msk [vmem:[#allocation2 + $0x18] sm:$0xff] %vm203, 0.0
        %208 = vst.msk [vmem:[#allocation2 + $0x20] sm:$0xff] %vm203, 0.0
        %209 = vst.msk [vmem:[#allocation2 + $0x28] sm:$0xff] %vm203, 0.0
        %210 = vst.msk [vmem:[#allocation2 + $0x30] sm:$0xff] %vm203, 0.0
        %211 = vst.msk [vmem:[#allocation2 + $0x38] sm:$0xff] %vm203, 0.0
        %212 = vst.msk [vmem:[#allocation2 + $0x40] sm:$0xff] %vm203, 0.0
        %213 = vst.msk [vmem:[#allocation2 + $0x48] sm:$0xff] %vm203, 0.0
        %214 = vst.msk [vmem:[#allocation2 + $0x50] sm:$0xff] %vm203, 0.0
        %215 = vst.msk [vmem:[#allocation2 + $0x58] sm:$0xff] %vm203, 0.0
        %216 = vst.msk [vmem:[#allocation2 + $0x60] sm:$0xff] %vm203, 0.0
        %217 = vst.msk [vmem:[#allocation2 + $0x68] sm:$0xff] %vm203, 0.0
        %218 = vst.msk [vmem:[#allocation2 + $0x70] sm:$0xff] %vm203, 0.0
        %219 = vst.msk [vmem:[#allocation2 + $0x78] sm:$0xff] %vm203, 0.0
        %220 = vst.msk [vmem:[#allocation2 + $0x80] sm:$0xff] %vm203, 0.0
        %221 = vst.msk [vmem:[#allocation2 + $0x88] sm:$0xff] %vm203, 0.0
        %222 = vst.msk [vmem:[#allocation2 + $0x90] sm:$0xff] %vm203, 0.0
        %223 = vst.msk [vmem:[#allocation2 + $0x98] sm:$0xff] %vm203, 0.0
        %224 = vst.msk [vmem:[#allocation2 + $0xa0] sm:$0xff] %vm203, 0.0
        %225 = vst.msk [vmem:[#allocation2 + $0xa8] sm:$0xff] %vm203, 0.0
        %226 = vst.msk [vmem:[#allocation2 + $0xb0] sm:$0xff] %vm203, 0.0
        %227 = vst.msk [vmem:[#allocation2 + $0xb8] sm:$0xff] %vm203, 0.0
        %228 = vst.msk [vmem:[#allocation2 + $0xc0] sm:$0xff] %vm203, 0.0
        %229 = vst.msk [vmem:[#allocation2 + $0xc8] sm:$0xff] %vm203, 0.0
        %230 = vst.msk [vmem:[#allocation2 + $0xd0] sm:$0xff] %vm203, 0.0
        %231 = vst.msk [vmem:[#allocation2 + $0xd8] sm:$0xff] %vm203, 0.0
        %232 = vst.msk [vmem:[#allocation2 + $0xe0] sm:$0xff] %vm203, 0.0
        %233 = vst.msk [vmem:[#allocation2 + $0xe8] sm:$0xff] %vm203, 0.0
        %v234 = vld [vmem:[%s199] sm:$0xff]
        %v235 = vld [vmem:[%s199 + $0x8] sm:$0xff]
        %v236 = vld [vmem:[%s199 + $0x10] sm:$0xff]
        %v237 = vld [vmem:[%s199 + $0x18] sm:$0xff]
        %v238 = vld [vmem:[%s199 + $0x20] sm:$0xff]
        %v239 = vld [vmem:[%s199 + $0x28] sm:$0xff]
        %v240 = vld [vmem:[%s199 + $0x30] sm:$0xff]
        %v241 = vld [vmem:[%s199 + $0x38] sm:$0xff]
        %v242 = vld [vmem:[%s199 + $0x40] sm:$0xff]
        %v243 = vld [vmem:[%s199 + $0x48] sm:$0xff]
        %v244 = vld [vmem:[%s199 + $0x50] sm:$0xff]
        %v245 = vld [vmem:[%s199 + $0x58] sm:$0xff]
        %v246 = vld [vmem:[%s199 + $0x60] sm:$0xff]
        %v247 = vld [vmem:[%s199 + $0x68] sm:$0xff]
        %v248 = vld [vmem:[%s199 + $0x70] sm:$0xff]
        %v249 = vld [vmem:[%s199 + $0x78] sm:$0xff]
        %v250 = vld [vmem:[%s199 + $0x80] sm:$0xff]
        %v251 = vld [vmem:[%s199 + $0x88] sm:$0xff]
        %v252 = vld [vmem:[%s199 + $0x90] sm:$0xff]
        %v253 = vld [vmem:[%s199 + $0x98] sm:$0xff]
        %v254 = vld [vmem:[%s199 + $0xa0] sm:$0xff]
        %v255 = vld [vmem:[%s199 + $0xa8] sm:$0xff]
        %v256 = vld [vmem:[%s199 + $0xb0] sm:$0xff]
        %v257 = vld [vmem:[%s199 + $0xb8] sm:$0xff]
        %v258 = vld [vmem:[%s199 + $0xc0] sm:$0xff]
        %v259 = vld [vmem:[%s199 + $0xc8] sm:$0xff]
        %v260 = vld [vmem:[%s199 + $0xd0] sm:$0xff]
        %v261 = vld [vmem:[%s199 + $0xd8] sm:$0xff]
        %v262 = vld [vmem:[%s199 + $0xe0] sm:$0xff]
        %v263 = vld [vmem:[%s199 + $0xe8] sm:$0xff]
        %v264 = vld [vmem:[%s199 + $0xf0] sm:$0xff]
        %v265 = vld [vmem:[%s199 + $0xf8] sm:$0xff]
        %v266 = vld [vmem:[%s1] sm:$0xf]
        %v267 = vld [vmem:[%s1 + $0x4] sm:$0xf]
        %v268 = vld [vmem:[%s1 + $0x8] sm:$0xf]
        %v269 = vld [vmem:[%s1 + $0xc] sm:$0xf]
        %v270 = vld [vmem:[%s1 + $0x10] sm:$0xf]
        %v271 = vld [vmem:[%s1 + $0x14] sm:$0xf]
        %v272 = vld [vmem:[%s1 + $0x18] sm:$0xf]
        %v273 = vld [vmem:[%s1 + $0x1c] sm:$0xf]
        %v274 = vld [vmem:[%s1 + $0x20] sm:$0xf]
        %v275 = vld [vmem:[%s1 + $0x24] sm:$0xf]
        %v276 = vld [vmem:[%s1 + $0x28] sm:$0xf]
        %v277 = vld [vmem:[%s1 + $0x2c] sm:$0xf]
        %v278 = vld [vmem:[%s1 + $0x30] sm:$0xf]
        %v279 = vld [vmem:[%s1 + $0x34] sm:$0xf]
        %v280 = vld [vmem:[%s1 + $0x38] sm:$0xf]
        %v281 = vld [vmem:[%s1 + $0x3c] sm:$0xf]
        %v282 = vld [vmem:[%s1 + $0x40] sm:$0xf]
        %v283 = vld [vmem:[%s1 + $0x44] sm:$0xf]
        %v284 = vld [vmem:[%s1 + $0x48] sm:$0xf]
        %v285 = vld [vmem:[%s1 + $0x4c] sm:$0xf]
        %v286 = vld [vmem:[%s1 + $0x50] sm:$0xf]
        %v287 = vld [vmem:[%s1 + $0x54] sm:$0xf]
        %v288 = vld [vmem:[%s1 + $0x58] sm:$0xf]
        %v289 = vld [vmem:[%s1 + $0x5c] sm:$0xf]
        %v290 = vld [vmem:[%s1 + $0x60] sm:$0xf]
        %v291 = vld [vmem:[%s1 + $0x64] sm:$0xf]
        %v292 = vld [vmem:[%s1 + $0x68] sm:$0xf]
        %v293 = vld [vmem:[%s1 + $0x6c] sm:$0xf]
        %v294 = vld [vmem:[%s1 + $0x70] sm:$0xf]
        %v295 = vld [vmem:[%s1 + $0x74] sm:$0xf]
        %v296 = vld [vmem:[%s1 + $0x78] sm:$0xf]
        %v297 = vld [vmem:[%s1 + $0x7c] sm:$0xf]
        %v298 = vld [vmem:[%s3] sm:$0x1]
        %v299 = vperm.slane %v298, 0
        %v332 = vunpack.c.l.b16 %v234
        %v333 = vunpack.c.h.b16 %v234
        %v334 = vunpack.c.l.b16 %v235
        %v335 = vunpack.c.h.b16 %v235
        %v336 = vunpack.c.l.b16 %v236
        %v337 = vunpack.c.h.b16 %v236
        %v338 = vunpack.c.l.b16 %v237
        %v339 = vunpack.c.h.b16 %v237
        %v340 = vunpack.c.l.b16 %v238
        %v341 = vunpack.c.h.b16 %v238
        %v342 = vunpack.c.l.b16 %v239
        %v343 = vunpack.c.h.b16 %v239
        %v344 = vunpack.c.l.b16 %v240
        %v345 = vunpack.c.h.b16 %v240
        %v346 = vunpack.c.l.b16 %v241
        %v347 = vunpack.c.h.b16 %v241
        %v348 = vunpack.c.l.b16 %v242
        %v349 = vunpack.c.h.b16 %v242
        %v350 = vunpack.c.l.b16 %v243
        %v351 = vunpack.c.h.b16 %v243
        %v352 = vunpack.c.l.b16 %v244
        %v353 = vunpack.c.h.b16 %v244
        %v354 = vunpack.c.l.b16 %v245
        %v355 = vunpack.c.h.b16 %v245
        %v356 = vunpack.c.l.b16 %v246
        %v357 = vunpack.c.h.b16 %v246
        %v358 = vunpack.c.l.b16 %v247
        %v359 = vunpack.c.h.b16 %v247
        %v360 = vunpack.c.l.b16 %v248
        %v361 = vunpack.c.h.b16 %v248
        %v362 = vunpack.c.l.b16 %v249
        %v363 = vunpack.c.h.b16 %v249
        %v364 = vunpack.c.l.b16 %v250
        %v365 = vunpack.c.h.b16 %v250
        %v366 = vunpack.c.l.b16 %v251
        %v367 = vunpack.c.h.b16 %v251
        %v368 = vunpack.c.l.b16 %v252
        %v369 = vunpack.c.h.b16 %v252
        %v370 = vunpack.c.l.b16 %v253
        %v371 = vunpack.c.h.b16 %v253
        %v372 = vunpack.c.l.b16 %v254
        %v373 = vunpack.c.h.b16 %v254
        %v374 = vunpack.c.l.b16 %v255
        %v375 = vunpack.c.h.b16 %v255
        %v376 = vunpack.c.l.b16 %v256
        %v377 = vunpack.c.h.b16 %v256
        %v378 = vunpack.c.l.b16 %v257
        %v379 = vunpack.c.h.b16 %v257
        %v380 = vunpack.c.l.b16 %v258
        %v381 = vunpack.c.h.b16 %v258
        %v382 = vunpack.c.l.b16 %v259
        %v383 = vunpack.c.h.b16 %v259
        %v384 = vunpack.c.l.b16 %v260
        %v385 = vunpack.c.h.b16 %v260
        %v386 = vunpack.c.l.b16 %v261
        %v387 = vunpack.c.h.b16 %v261
        %v388 = vunpack.c.l.b16 %v262
        %v389 = vunpack.c.h.b16 %v262
        %v390 = vunpack.c.l.b16 %v263
        %v391 = vunpack.c.h.b16 %v263
        %v392 = vunpack.c.l.b16 %v264
        %v393 = vunpack.c.h.b16 %v264
        %v394 = vunpack.c.l.b16 %v265
        %v395 = vunpack.c.h.b16 %v265
        %v396 = vpack.c.b16 %v334, %v332
        %v397 = vpack.c.b16 %v335, %v333
        %v398 = vpack.c.b16 %v338, %v336
        %v399 = vpack.c.b16 %v339, %v337
        %v400 = vpack.c.b16 %v342, %v340
        %v401 = vpack.c.b16 %v343, %v341
        %v402 = vpack.c.b16 %v346, %v344
        %v403 = vpack.c.b16 %v347, %v345
        %v404 = vpack.c.b16 %v350, %v348
        %v405 = vpack.c.b16 %v351, %v349
        %v406 = vpack.c.b16 %v354, %v352
        %v407 = vpack.c.b16 %v355, %v353
        %v408 = vpack.c.b16 %v358, %v356
        %v409 = vpack.c.b16 %v359, %v357
        %v410 = vpack.c.b16 %v362, %v360
        %v411 = vpack.c.b16 %v363, %v361
        %v412 = vpack.c.b16 %v366, %v364
        %v413 = vpack.c.b16 %v367, %v365
        %v414 = vpack.c.b16 %v370, %v368
        %v415 = vpack.c.b16 %v371, %v369
        %v416 = vpack.c.b16 %v374, %v372
        %v417 = vpack.c.b16 %v375, %v373
        %v418 = vpack.c.b16 %v378, %v376
        %v419 = vpack.c.b16 %v379, %v377
        %v420 = vpack.c.b16 %v382, %v380
        %v421 = vpack.c.b16 %v383, %v381
        %v422 = vpack.c.b16 %v386, %v384
        %v423 = vpack.c.b16 %v387, %v385
        %v424 = vpack.c.b16 %v390, %v388
        %v425 = vpack.c.b16 %v391, %v389
        %v426 = vpack.c.b16 %v394, %v392
        %v427 = vpack.c.b16 %v395, %v393
        %v492 = vunpack.c.l.b16 %v266
        %v493 = vunpack.c.l.b16 %v267
        %v494 = vunpack.c.l.b16 %v268
        %v495 = vunpack.c.l.b16 %v269
        %v496 = vunpack.c.l.b16 %v270
        %v497 = vunpack.c.l.b16 %v271
        %v498 = vunpack.c.l.b16 %v272
        %v499 = vunpack.c.l.b16 %v273
        %v500 = vunpack.c.l.b16 %v274
        %v501 = vunpack.c.l.b16 %v275
        %v502 = vunpack.c.l.b16 %v276
        %v503 = vunpack.c.l.b16 %v277
        %v504 = vunpack.c.l.b16 %v278
        %v505 = vunpack.c.l.b16 %v279
        %v506 = vunpack.c.l.b16 %v280
        %v507 = vunpack.c.l.b16 %v281
        %v508 = vunpack.c.l.b16 %v282
        %v509 = vunpack.c.l.b16 %v283
        %v510 = vunpack.c.l.b16 %v284
        %v511 = vunpack.c.l.b16 %v285
        %v512 = vunpack.c.l.b16 %v286
        %v513 = vunpack.c.l.b16 %v287
        %v514 = vunpack.c.l.b16 %v288
        %v515 = vunpack.c.l.b16 %v289
        %v516 = vunpack.c.l.b16 %v290
        %v517 = vunpack.c.l.b16 %v291
        %v518 = vunpack.c.l.b16 %v292
        %v519 = vunpack.c.l.b16 %v293
        %v520 = vunpack.c.l.b16 %v294
        %v521 = vunpack.c.l.b16 %v295
        %v522 = vunpack.c.l.b16 %v296
        %v523 = vunpack.c.l.b16 %v297
        %v524 = vpack.c.b16 %v493, %v492
        %v525 = vpack.c.b16 %v495, %v494
        %v526 = vpack.c.b16 %v497, %v496
        %v527 = vpack.c.b16 %v499, %v498
        %v528 = vpack.c.b16 %v501, %v500
        %v529 = vpack.c.b16 %v503, %v502
        %v530 = vpack.c.b16 %v505, %v504
        %v531 = vpack.c.b16 %v507, %v506
        %v532 = vpack.c.b16 %v509, %v508
        %v533 = vpack.c.b16 %v511, %v510
        %v534 = vpack.c.b16 %v513, %v512
        %v535 = vpack.c.b16 %v515, %v514
        %v536 = vpack.c.b16 %v517, %v516
        %v537 = vpack.c.b16 %v519, %v518
        %v538 = vpack.c.b16 %v521, %v520
        %v539 = vpack.c.b16 %v523, %v522
        %556 = vmatpush.bf16.msra.mxu0 %v531
        %557 = vmatpush.bf16.msra.mxu0 %v530
        %558 = vmatpush.bf16.msra.mxu0 %v529
        %559 = vmatpush.bf16.msra.mxu0 %v528
        %560 = vmatpush.bf16.msra.mxu0 %v527
        %561 = vmatpush.bf16.msra.mxu0 %v526
        %562 = vmatpush.bf16.msra.mxu0 %v525
        %563 = vmatpush.bf16.msra.mxu0 %v524
        %564 = vmatmul.bf16.gmra.mxu0 %v396
        %v565 = vpop.f32.mrf.mxu0
        %v566 = vadd.f32 %v299, %v565
        %v567 = vpop.f32.mrf.mxu0
        %v568 = vadd.f32 %v299, %v567
        %569 = vmatmul.bf16.gmra.mxu0 %v398
        %v570 = vpop.f32.mrf.mxu0
        %v571 = vadd.f32 %v299, %v570
        %v572 = vpop.f32.mrf.mxu0
        %v573 = vadd.f32 %v299, %v572
        %574 = vmatmul.bf16.gmra.mxu0 %v400
        %v575 = vpop.f32.mrf.mxu0
        %v576 = vadd.f32 %v299, %v575
        %v577 = vpop.f32.mrf.mxu0
        %v578 = vadd.f32 %v299, %v577
        %579 = vmatmul.bf16.gmra.mxu0 %v402
        %v580 = vpop.f32.mrf.mxu0
        %v581 = vadd.f32 %v299, %v580
        %v582 = vpop.f32.mrf.mxu0
        %v583 = vadd.f32 %v299, %v582
        %584 = vmatmul.bf16.gmra.mxu0 %v404
        %v585 = vpop.f32.mrf.mxu0
        %v586 = vadd.f32 %v299, %v585
        %v587 = vpop.f32.mrf.mxu0
        %v588 = vadd.f32 %v299, %v587
        %589 = vmatmul.bf16.gmra.mxu0 %v406
        %v590 = vpop.f32.mrf.mxu0
        %v591 = vadd.f32 %v299, %v590
        %v592 = vpop.f32.mrf.mxu0
        %v593 = vadd.f32 %v299, %v592
        %594 = vmatmul.bf16.gmra.mxu0 %v408
        %v595 = vpop.f32.mrf.mxu0
        %v596 = vadd.f32 %v299, %v595
        %v597 = vpop.f32.mrf.mxu0
        %v598 = vadd.f32 %v299, %v597
        %599 = vmatmul.bf16.gmra.mxu0 %v410
        %v600 = vpop.f32.mrf.mxu0
        %v601 = vadd.f32 %v299, %v600
        %v602 = vpop.f32.mrf.mxu0
        %v603 = vadd.f32 %v299, %v602
        %604 = vmatmul.bf16.gmra.mxu0 %v412
        %v605 = vpop.f32.mrf.mxu0
        %v606 = vadd.f32 %v299, %v605
        %v607 = vpop.f32.mrf.mxu0
        %v608 = vadd.f32 %v299, %v607
        %609 = vmatmul.bf16.gmra.mxu0 %v414
        %v610 = vpop.f32.mrf.mxu0
        %v611 = vadd.f32 %v299, %v610
        %v612 = vpop.f32.mrf.mxu0
        %v613 = vadd.f32 %v299, %v612
        %614 = vmatmul.bf16.gmra.mxu0 %v416
        %v615 = vpop.f32.mrf.mxu0
        %v616 = vadd.f32 %v299, %v615
        %v617 = vpop.f32.mrf.mxu0
        %v618 = vadd.f32 %v299, %v617
        %619 = vmatmul.bf16.gmra.mxu0 %v418
        %v620 = vpop.f32.mrf.mxu0
        %v621 = vadd.f32 %v299, %v620
        %v622 = vpop.f32.mrf.mxu0
        %v623 = vadd.f32 %v299, %v622
        %624 = vmatmul.bf16.gmra.mxu0 %v420
        %v625 = vpop.f32.mrf.mxu0
        %v626 = vadd.f32 %v299, %v625
        %v627 = vpop.f32.mrf.mxu0
        %v628 = vadd.f32 %v299, %v627
        %629 = vmatmul.bf16.gmra.mxu0 %v422
        %v630 = vpop.f32.mrf.mxu0
        %v631 = vadd.f32 %v299, %v630
        %v632 = vpop.f32.mrf.mxu0
        %v633 = vadd.f32 %v299, %v632
        %634 = vmatmul.bf16.gmra.mxu0 %v424
        %v635 = vpop.f32.mrf.mxu0
        %v636 = vadd.f32 %v299, %v635
        %v637 = vpop.f32.mrf.mxu0
        %v638 = vadd.f32 %v299, %v637
        %639 = vmatmul.bf16.gmra.mxu0 %v426
        %v640 = vpop.f32.mrf.mxu0
        %v641 = vadd.f32 %v299, %v640
        %v642 = vpop.f32.mrf.mxu0
        %v643 = vadd.f32 %v299, %v642
        %644 = vdwg.mxu0
        %645 = vmatpush.bf16.msra.mxu0 %v539
        %646 = vmatpush.bf16.msra.mxu0 %v538
        %647 = vmatpush.bf16.msra.mxu0 %v537
        %648 = vmatpush.bf16.msra.mxu0 %v536
        %649 = vmatpush.bf16.msra.mxu0 %v535
        %650 = vmatpush.bf16.msra.mxu0 %v534
        %651 = vmatpush.bf16.msra.mxu0 %v533
        %652 = vmatpush.bf16.msra.mxu0 %v532
        %653 = vmatmul.bf16.gmra.mxu0 %v397
        %v654 = vpop.f32.mrf.mxu0
        %v655 = vadd.f32 %v566, %v654
        %v656 = vpop.f32.mrf.mxu0
        %v657 = vadd.f32 %v568, %v656
        %658 = vmatmul.bf16.gmra.mxu0 %v399
        %v659 = vpop.f32.mrf.mxu0
        %v660 = vadd.f32 %v571, %v659
        %v661 = vpop.f32.mrf.mxu0
        %v662 = vadd.f32 %v573, %v661
        %663 = vmatmul.bf16.gmra.mxu0 %v401
        %v664 = vpop.f32.mrf.mxu0
        %v665 = vadd.f32 %v576, %v664
        %v666 = vpop.f32.mrf.mxu0
        %v667 = vadd.f32 %v578, %v666
        %668 = vmatmul.bf16.gmra.mxu0 %v403
        %v669 = vpop.f32.mrf.mxu0
        %v670 = vadd.f32 %v581, %v669
        %v671 = vpop.f32.mrf.mxu0
        %v672 = vadd.f32 %v583, %v671
        %673 = vmatmul.bf16.gmra.mxu0 %v405
        %v674 = vpop.f32.mrf.mxu0
        %v675 = vadd.f32 %v586, %v674
        %v676 = vpop.f32.mrf.mxu0
        %v677 = vadd.f32 %v588, %v676
        %678 = vmatmul.bf16.gmra.mxu0 %v407
        %v679 = vpop.f32.mrf.mxu0
        %v680 = vadd.f32 %v591, %v679
        %v681 = vpop.f32.mrf.mxu0
        %v682 = vadd.f32 %v593, %v681
        %683 = vmatmul.bf16.gmra.mxu0 %v409
        %v684 = vpop.f32.mrf.mxu0
        %v685 = vadd.f32 %v596, %v684
        %v686 = vpop.f32.mrf.mxu0
        %v687 = vadd.f32 %v598, %v686
        %688 = vmatmul.bf16.gmra.mxu0 %v411
        %v689 = vpop.f32.mrf.mxu0
        %v690 = vadd.f32 %v601, %v689
        %v691 = vpop.f32.mrf.mxu0
        %v692 = vadd.f32 %v603, %v691
        %693 = vmatmul.bf16.gmra.mxu0 %v413
        %v694 = vpop.f32.mrf.mxu0
        %v695 = vadd.f32 %v606, %v694
        %v696 = vpop.f32.mrf.mxu0
        %v697 = vadd.f32 %v608, %v696
        %698 = vmatmul.bf16.gmra.mxu0 %v415
        %v699 = vpop.f32.mrf.mxu0
        %v700 = vadd.f32 %v611, %v699
        %v701 = vpop.f32.mrf.mxu0
        %v702 = vadd.f32 %v613, %v701
        %703 = vmatmul.bf16.gmra.mxu0 %v417
        %v704 = vpop.f32.mrf.mxu0
        %v705 = vadd.f32 %v616, %v704
        %v706 = vpop.f32.mrf.mxu0
        %v707 = vadd.f32 %v618, %v706
        %708 = vmatmul.bf16.gmra.mxu0 %v419
        %v709 = vpop.f32.mrf.mxu0
        %v710 = vadd.f32 %v621, %v709
        %v711 = vpop.f32.mrf.mxu0
        %v712 = vadd.f32 %v623, %v711
        %713 = vmatmul.bf16.gmra.mxu0 %v421
        %v714 = vpop.f32.mrf.mxu0
        %v715 = vadd.f32 %v626, %v714
        %v716 = vpop.f32.mrf.mxu0
        %v717 = vadd.f32 %v628, %v716
        %718 = vmatmul.bf16.gmra.mxu0 %v423
        %v719 = vpop.f32.mrf.mxu0
        %v720 = vadd.f32 %v631, %v719
        %v721 = vpop.f32.mrf.mxu0
        %v722 = vadd.f32 %v633, %v721
        %723 = vmatmul.bf16.gmra.mxu0 %v425
        %v724 = vpop.f32.mrf.mxu0
        %v725 = vadd.f32 %v636, %v724
        %v726 = vpop.f32.mrf.mxu0
        %v727 = vadd.f32 %v638, %v726
        %728 = vmatmul.bf16.gmra.mxu0 %v427
        %v729 = vpop.f32.mrf.mxu0
        %v730 = vadd.f32 %v641, %v729
        %v731 = vpop.f32.mrf.mxu0
        %v732 = vadd.f32 %v643, %v731
        %733 = vdwg.mxu0
        %v734 = vmax.f32 %v655, 0.0
        %v735 = vmax.f32 %v657, 0.0
        %v736 = vmax.f32 %v660, 0.0
        %v737 = vmax.f32 %v662, 0.0
        %v738 = vmax.f32 %v665, 0.0
        %v739 = vmax.f32 %v667, 0.0
        %v740 = vmax.f32 %v670, 0.0
        %v741 = vmax.f32 %v672, 0.0
        %v742 = vmax.f32 %v675, 0.0
        %v743 = vmax.f32 %v677, 0.0
        %v744 = vmax.f32 %v680, 0.0
        %v745 = vmax.f32 %v682, 0.0
        %v746 = vmax.f32 %v685, 0.0
        %v747 = vmax.f32 %v687, 0.0
        %v748 = vmax.f32 %v690, 0.0
        %v749 = vmax.f32 %v692, 0.0
        %v750 = vmax.f32 %v695, 0.0
        %v751 = vmax.f32 %v697, 0.0
        %v752 = vmax.f32 %v700, 0.0
        %v753 = vmax.f32 %v702, 0.0
        %v754 = vmax.f32 %v705, 0.0
        %v755 = vmax.f32 %v707, 0.0
        %v756 = vmax.f32 %v710, 0.0
        %v757 = vmax.f32 %v712, 0.0
        %v758 = vmax.f32 %v715, 0.0
        %v759 = vmax.f32 %v717, 0.0
        %v760 = vmax.f32 %v720, 0.0
        %v761 = vmax.f32 %v722, 0.0
        %v762 = vmax.f32 %v725, 0.0
        %v763 = vmax.f32 %v727, 0.0
        %v764 = vmax.f32 %v730, 0.0
        %v765 = vmax.f32 %v732, 0.0
        %v766 = vmax.f32 %v734, %v742
        %v767 = vmax.f32 %v735, %v743
        %v768 = vmax.f32 %v736, %v744
        %v769 = vmax.f32 %v737, %v745
        %v770 = vmax.f32 %v738, %v746
        %v771 = vmax.f32 %v739, %v747
        %v772 = vmax.f32 %v740, %v748
        %v773 = vmax.f32 %v741, %v749
        %v774 = vmax.f32 %v750, %v758
        %v775 = vmax.f32 %v751, %v759
        %v776 = vmax.f32 %v752, %v760
        %v777 = vmax.f32 %v753, %v761
        %v778 = vmax.f32 %v754, %v762
        %v779 = vmax.f32 %v755, %v763
        %v780 = vmax.f32 %v756, %v764
        %v781 = vmax.f32 %v757, %v765
        %v782 = vmax.f32 %v766, %v774
        %v783 = vmax.f32 %v767, %v775
        %v784 = vmax.f32 %v768, %v776
        %v785 = vmax.f32 %v769, %v777
        %v786 = vmax.f32 %v770, %v778
        %v787 = vmax.f32 %v771, %v779
        %v788 = vmax.f32 %v772, %v780
        %v789 = vmax.f32 %v773, %v781
        %s790 = scalar_lea.vmem [#allocation2], 24
        %791 = vst.msk [vmem:[%s790 + $0x8] sm:$0xff] %vm203, %v742
        %792 = vst.msk [vmem:[%s790 + $0x20] sm:$0xff] %vm203, %v743
        %793 = vst.msk [vmem:[%s790 + $0x38] sm:$0xff] %vm203, %v744
        %794 = vst.msk [vmem:[%s790 + $0x50] sm:$0xff] %vm203, %v745
        %795 = vst.msk [vmem:[%s790 + $0x68] sm:$0xff] %vm203, %v746
        %796 = vst.msk [vmem:[%s790 + $0x80] sm:$0xff] %vm203, %v747
        %797 = vst.msk [vmem:[%s790 + $0x98] sm:$0xff] %vm203, %v748
        %798 = vst.msk [vmem:[%s790 + $0xb0] sm:$0xff] %vm203, %v749
        %v799 = vld [vmem:[%s790 + $0x7] sm:$0xff]
        %v800 = vld [vmem:[%s790 + $0x1f] sm:$0xff]
        %v801 = vld [vmem:[%s790 + $0x37] sm:$0xff]
        %v802 = vld [vmem:[%s790 + $0x4f] sm:$0xff]
        %v803 = vld [vmem:[%s790 + $0x67] sm:$0xff]
        %v804 = vld [vmem:[%s790 + $0x7f] sm:$0xff]
        %v805 = vld [vmem:[%s790 + $0x97] sm:$0xff]
        %v806 = vld [vmem:[%s790 + $0xaf] sm:$0xff]
        %v807 = vmax.f32 %v782, %v799
        %v808 = vmax.f32 %v783, %v800
        %v809 = vmax.f32 %v784, %v801
        %v810 = vmax.f32 %v785, %v802
        %v811 = vmax.f32 %v786, %v803
        %v812 = vmax.f32 %v787, %v804
        %v813 = vmax.f32 %v788, %v805
        %v814 = vmax.f32 %v789, %v806
        %815 = vst.msk [vmem:[%s790 + $0x8] sm:$0xff] %vm203, %v750
        %816 = vst.msk [vmem:[%s790 + $0x20] sm:$0xff] %vm203, %v751
        %817 = vst.msk [vmem:[%s790 + $0x38] sm:$0xff] %vm203, %v752
        %818 = vst.msk [vmem:[%s790 + $0x50] sm:$0xff] %vm203, %v753
        %819 = vst.msk [vmem:[%s790 + $0x68] sm:$0xff] %vm203, %v754
        %820 = vst.msk [vmem:[%s790 + $0x80] sm:$0xff] %vm203, %v755
        %821 = vst.msk [vmem:[%s790 + $0x98] sm:$0xff] %vm203, %v756
        %822 = vst.msk [vmem:[%s790 + $0xb0] sm:$0xff] %vm203, %v757
        %v823 = vld [vmem:[#allocation2 + $0x8] sm:$0xff]
        %v824 = vld [vmem:[#allocation2 + $0x20] sm:$0xff]
        %v825 = vld [vmem:[#allocation2 + $0x38] sm:$0xff]
        %v826 = vld [vmem:[#allocation2 + $0x50] sm:$0xff]
        %v827 = vld [vmem:[#allocation2 + $0x68] sm:$0xff]
        %v828 = vld [vmem:[#allocation2 + $0x80] sm:$0xff]
        %v829 = vld [vmem:[#allocation2 + $0x98] sm:$0xff]
        %v830 = vld [vmem:[#allocation2 + $0xb0] sm:$0xff]
        %v831 = vmax.f32 %v807, %v823
        %v832 = vmax.f32 %v808, %v824
        %v833 = vmax.f32 %v809, %v825
        %v834 = vmax.f32 %v810, %v826
        %v835 = vmax.f32 %v811, %v827
        %v836 = vmax.f32 %v812, %v828
        %v837 = vmax.f32 %v813, %v829
        %v838 = vmax.f32 %v814, %v830
        %839 = vst.msk [vmem:[%s790 + $0x8] sm:$0xff] %vm203, %v758
        %840 = vst.msk [vmem:[%s790 + $0x20] sm:$0xff] %vm203, %v759
        %841 = vst.msk [vmem:[%s790 + $0x38] sm:$0xff] %vm203, %v760
        %842 = vst.msk [vmem:[%s790 + $0x50] sm:$0xff] %vm203, %v761
        %843 = vst.msk [vmem:[%s790 + $0x68] sm:$0xff] %vm203, %v762
        %844 = vst.msk [vmem:[%s790 + $0x80] sm:$0xff] %vm203, %v763
        %845 = vst.msk [vmem:[%s790 + $0x98] sm:$0xff] %vm203, %v764
        %846 = vst.msk [vmem:[%s790 + $0xb0] sm:$0xff] %vm203, %v765
        %v847 = vld [vmem:[%s790 + $0x7] sm:$0xff]
        %v848 = vld [vmem:[%s790 + $0x1f] sm:$0xff]
        %v849 = vld [vmem:[%s790 + $0x37] sm:$0xff]
        %v850 = vld [vmem:[%s790 + $0x4f] sm:$0xff]
        %v851 = vld [vmem:[%s790 + $0x67] sm:$0xff]
        %v852 = vld [vmem:[%s790 + $0x7f] sm:$0xff]
        %v853 = vld [vmem:[%s790 + $0x97] sm:$0xff]
        %v854 = vld [vmem:[%s790 + $0xaf] sm:$0xff]
        %v855 = vmax.f32 %v831, %v847
        %v856 = vmax.f32 %v832, %v848
        %v857 = vmax.f32 %v833, %v849
        %v858 = vmax.f32 %v834, %v850
        %v859 = vmax.f32 %v835, %v851
        %v860 = vmax.f32 %v836, %v852
        %v861 = vmax.f32 %v837, %v853
        %v862 = vmax.f32 %v838, %v854
        %v863 = vld [vmem:[#allocation2 + $0x8] sm:$0xff]
        %v864 = vld [vmem:[#allocation2 + $0x20] sm:$0xff]
        %v865 = vld [vmem:[#allocation2 + $0x38] sm:$0xff]
        %v866 = vld [vmem:[#allocation2 + $0x50] sm:$0xff]
        %v867 = vld [vmem:[#allocation2 + $0x68] sm:$0xff]
        %v868 = vld [vmem:[#allocation2 + $0x80] sm:$0xff]
        %v869 = vld [vmem:[#allocation2 + $0x98] sm:$0xff]
        %v870 = vld [vmem:[#allocation2 + $0xb0] sm:$0xff]
        %v871 = vmax.f32 %v855, %v863
        %v872 = vmax.f32 %v856, %v864
        %v873 = vmax.f32 %v857, %v865
        %v874 = vmax.f32 %v858, %v866
        %v875 = vmax.f32 %v859, %v867
        %v876 = vmax.f32 %v860, %v868
        %v877 = vmax.f32 %v861, %v869
        %v878 = vmax.f32 %v862, %v870
        %v879 = vld [vmem:[#allocation2 + $0x7] sm:$0xff]
        %v880 = vld [vmem:[#allocation2 + $0x1f] sm:$0xff]
        %v881 = vld [vmem:[#allocation2 + $0x37] sm:$0xff]
        %v882 = vld [vmem:[#allocation2 + $0x4f] sm:$0xff]
        %v883 = vld [vmem:[#allocation2 + $0x67] sm:$0xff]
        %v884 = vld [vmem:[#allocation2 + $0x7f] sm:$0xff]
        %v885 = vld [vmem:[#allocation2 + $0x97] sm:$0xff]
        %v886 = vld [vmem:[#allocation2 + $0xaf] sm:$0xff]
        %v887 = vmax.f32 %v871, %v879
        %v888 = vmax.f32 %v872, %v880
        %v889 = vmax.f32 %v873, %v881
        %v890 = vmax.f32 %v874, %v882
        %v891 = vmax.f32 %v875, %v883
        %v892 = vmax.f32 %v876, %v884
        %v893 = vmax.f32 %v877, %v885
        %v894 = vmax.f32 %v878, %v886
        %895 = vst.msk [vmem:[%s790 + $0x8] sm:$0xff] %vm203, %v887
        %896 = vst.msk [vmem:[%s790 + $0x20] sm:$0xff] %vm203, %v888
        %897 = vst.msk [vmem:[%s790 + $0x38] sm:$0xff] %vm203, %v889
        %898 = vst.msk [vmem:[%s790 + $0x50] sm:$0xff] %vm203, %v890
        %899 = vst.msk [vmem:[%s790 + $0x68] sm:$0xff] %vm203, %v891
        %900 = vst.msk [vmem:[%s790 + $0x80] sm:$0xff] %vm203, %v892
        %901 = vst.msk [vmem:[%s790 + $0x98] sm:$0xff] %vm203, %v893
        %902 = vst.msk [vmem:[%s790 + $0xb0] sm:$0xff] %vm203, %v894
        %v903 = vld [vmem:[#allocation2 + $0x7] sm:$0xff]
        %v904 = vld [vmem:[#allocation2 + $0x1f] sm:$0xff]
        %v905 = vld [vmem:[#allocation2 + $0x37] sm:$0xff]
        %v906 = vld [vmem:[#allocation2 + $0x4f] sm:$0xff]
        %v907 = vld [vmem:[#allocation2 + $0x67] sm:$0xff]
        %v908 = vld [vmem:[#allocation2 + $0x7f] sm:$0xff]
        %v909 = vld [vmem:[#allocation2 + $0x97] sm:$0xff]
        %v910 = vld [vmem:[#allocation2 + $0xaf] sm:$0xff]
        %v911 = vld [vmem:[%s2] sm:$0xf]
        %v912 = vld [vmem:[%s2 + $0x4] sm:$0xf]
        %v913 = vld [vmem:[%s2 + $0x8] sm:$0xf]
        %v914 = vld [vmem:[%s2 + $0xc] sm:$0xf]
        %v915 = vld [vmem:[%s2 + $0x10] sm:$0xf]
        %v916 = vld [vmem:[%s2 + $0x14] sm:$0xf]
        %v917 = vld [vmem:[%s2 + $0x18] sm:$0xf]
        %v918 = vld [vmem:[%s2 + $0x1c] sm:$0xf]
        %v919 = vpack.c.bf16 %v904, %v903
        %v920 = vpack.c.bf16 %v906, %v905
        %v921 = vpack.c.bf16 %v908, %v907
        %v922 = vpack.c.bf16 %v910, %v909
        %v923 = vld [vmem:[#allocation2 + $0x8] sm:$0xff]
        %v924 = vld [vmem:[#allocation2 + $0x20] sm:$0xff]
        %v925 = vld [vmem:[#allocation2 + $0x38] sm:$0xff]
        %v926 = vld [vmem:[#allocation2 + $0x50] sm:$0xff]
        %v927 = vld [vmem:[#allocation2 + $0x68] sm:$0xff]
        %v928 = vld [vmem:[#allocation2 + $0x80] sm:$0xff]
        %v929 = vld [vmem:[#allocation2 + $0x98] sm:$0xff]
        %v930 = vld [vmem:[#allocation2 + $0xb0] sm:$0xff]
        %s931 = scalar_lea.vmem %s2, 32
        %v932 = vld [vmem:[%s931] sm:$0xf]
        %v933 = vld [vmem:[%s931 + $0x4] sm:$0xf]
        %v934 = vld [vmem:[%s931 + $0x8] sm:$0xf]
        %v935 = vld [vmem:[%s931 + $0xc] sm:$0xf]
        %v936 = vld [vmem:[%s931 + $0x10] sm:$0xf]
        %v937 = vld [vmem:[%s931 + $0x14] sm:$0xf]
        %v938 = vld [vmem:[%s931 + $0x18] sm:$0xf]
        %v939 = vld [vmem:[%s931 + $0x1c] sm:$0xf]
        %v940 = vpack.c.bf16 %v924, %v923
        %v941 = vpack.c.bf16 %v926, %v925
        %v942 = vpack.c.bf16 %v928, %v927
        %v943 = vpack.c.bf16 %v930, %v929
        %v952 = vunpack.c.l.b16 %v932
        %v953 = vunpack.c.l.b16 %v933
        %v954 = vunpack.c.l.b16 %v934
        %v955 = vunpack.c.l.b16 %v935
        %v956 = vunpack.c.l.b16 %v936
        %v957 = vunpack.c.l.b16 %v937
        %v958 = vunpack.c.l.b16 %v938
        %v959 = vunpack.c.l.b16 %v939
        %v960 = vpack.c.b16 %v953, %v952
        %v961 = vpack.c.b16 %v955, %v954
        %v962 = vpack.c.b16 %v957, %v956
        %v963 = vpack.c.b16 %v959, %v958
        %v969 = vsel %vm203, %v940, 0
        %v972 = vsel %vm203, %v941, 0
        %v975 = vsel %vm203, %v942, 0
        %v978 = vsel %vm203, %v943, 0
        %980 = vmatpush.bf16.msra.mxu0 0
        %981 = vmatpush.bf16.msra.mxu0 0
        %982 = vmatpush.bf16.msra.mxu0 0
        %983 = vmatpush.bf16.msra.mxu0 0
        %984 = vmatpush.bf16.msra.mxu0 %v963
        %985 = vmatpush.bf16.msra.mxu0 %v962
        %986 = vmatpush.bf16.msra.mxu0 %v961
        %987 = vmatpush.bf16.msra.mxu0 %v960
        %988 = vmatmul.bf16.gmra.mxu0 %v969
        %v989 = vpop.f32.mrf.mxu0
        %v990 = vadd.f32 0.0, %v989
        %v991 = vpop.f32.mrf.mxu0
        %v992 = vadd.f32 0.0, %v991
        %993 = vmatmul.bf16.gmra.mxu0 %v972
        %v994 = vpop.f32.mrf.mxu0
        %v995 = vadd.f32 0.0, %v994
        %v996 = vpop.f32.mrf.mxu0
        %v997 = vadd.f32 0.0, %v996
        %998 = vmatmul.bf16.gmra.mxu0 %v975
        %v999 = vpop.f32.mrf.mxu0
        %v1000 = vadd.f32 0.0, %v999
        %v1001 = vpop.f32.mrf.mxu0
        %v1002 = vadd.f32 0.0, %v1001
        %1003 = vmatmul.bf16.gmra.mxu0 %v978
        %v1004 = vpop.f32.mrf.mxu0
        %v1005 = vadd.f32 0.0, %v1004
        %v1006 = vpop.f32.mrf.mxu0
        %v1007 = vadd.f32 0.0, %v1006
        %1008 = vdwg.mxu0
        %v1017 = vunpack.c.l.b16 %v911
        %v1018 = vunpack.c.l.b16 %v912
        %v1019 = vunpack.c.l.b16 %v913
        %v1020 = vunpack.c.l.b16 %v914
        %v1021 = vunpack.c.l.b16 %v915
        %v1022 = vunpack.c.l.b16 %v916
        %v1023 = vunpack.c.l.b16 %v917
        %v1024 = vunpack.c.l.b16 %v918
        %v1025 = vpack.c.b16 %v1018, %v1017
        %v1026 = vpack.c.b16 %v1020, %v1019
        %v1027 = vpack.c.b16 %v1022, %v1021
        %v1028 = vpack.c.b16 %v1024, %v1023
        %v1034 = vsel %vm203, %v919, 0
        %v1037 = vsel %vm203, %v920, 0
        %v1040 = vsel %vm203, %v921, 0
        %v1043 = vsel %vm203, %v922, 0
        %1045 = vmatpush.bf16.msra.mxu0 0
        %1046 = vmatpush.bf16.msra.mxu0 0
        %1047 = vmatpush.bf16.msra.mxu0 0
        %1048 = vmatpush.bf16.msra.mxu0 0
        %1049 = vmatpush.bf16.msra.mxu0 %v1028
        %1050 = vmatpush.bf16.msra.mxu0 %v1027
        %1051 = vmatpush.bf16.msra.mxu0 %v1026
        %1052 = vmatpush.bf16.msra.mxu0 %v1025
        %1053 = vmatmul.bf16.gmra.mxu0 %v1034
        %v1054 = vpop.f32.mrf.mxu0
        %v1055 = vadd.f32 %v990, %v1054
        %v1056 = vpop.f32.mrf.mxu0
        %v1057 = vadd.f32 %v992, %v1056
        %1058 = vmatmul.bf16.gmra.mxu0 %v1037
        %v1059 = vpop.f32.mrf.mxu0
        %v1060 = vadd.f32 %v995, %v1059
        %v1061 = vpop.f32.mrf.mxu0
        %v1062 = vadd.f32 %v997, %v1061
        %1063 = vmatmul.bf16.gmra.mxu0 %v1040
        %v1064 = vpop.f32.mrf.mxu0
        %v1065 = vadd.f32 %v1000, %v1064
        %v1066 = vpop.f32.mrf.mxu0
        %v1067 = vadd.f32 %v1002, %v1066
        %1068 = vmatmul.bf16.gmra.mxu0 %v1043
        %v1069 = vpop.f32.mrf.mxu0
        %v1070 = vadd.f32 %v1005, %v1069
        %v1071 = vpop.f32.mrf.mxu0
        %v1072 = vadd.f32 %v1007, %v1071
        %1073 = vdwg.mxu0
        %v1074 = vld [vmem:[#allocation2 + $0x9] sm:$0xff]
        %v1075 = vld [vmem:[#allocation2 + $0x21] sm:$0xff]
        %v1076 = vld [vmem:[#allocation2 + $0x39] sm:$0xff]
        %v1077 = vld [vmem:[#allocation2 + $0x51] sm:$0xff]
        %v1078 = vld [vmem:[#allocation2 + $0x69] sm:$0xff]
        %v1079 = vld [vmem:[#allocation2 + $0x81] sm:$0xff]
        %v1080 = vld [vmem:[#allocation2 + $0x99] sm:$0xff]
        %v1081 = vld [vmem:[#allocation2 + $0xb1] sm:$0xff]
        %s1082 = scalar_lea.vmem %s2, 64
        %v1083 = vld [vmem:[%s1082] sm:$0xf]
        %v1084 = vld [vmem:[%s1082 + $0x4] sm:$0xf]
        %v1085 = vld [vmem:[%s1082 + $0x8] sm:$0xf]
        %v1086 = vld [vmem:[%s1082 + $0xc] sm:$0xf]
        %v1087 = vld [vmem:[%s1082 + $0x10] sm:$0xf]
        %v1088 = vld [vmem:[%s1082 + $0x14] sm:$0xf]
        %v1089 = vld [vmem:[%s1082 + $0x18] sm:$0xf]
        %v1090 = vld [vmem:[%s1082 + $0x1c] sm:$0xf]
        %v1091 = vpack.c.bf16 %v1075, %v1074
        %v1092 = vpack.c.bf16 %v1077, %v1076
        %v1093 = vpack.c.bf16 %v1079, %v1078
        %v1094 = vpack.c.bf16 %v1081, %v1080
        %v1103 = vunpack.c.l.b16 %v1083
        %v1104 = vunpack.c.l.b16 %v1084
        %v1105 = vunpack.c.l.b16 %v1085
        %v1106 = vunpack.c.l.b16 %v1086
        %v1107 = vunpack.c.l.b16 %v1087
        %v1108 = vunpack.c.l.b16 %v1088
        %v1109 = vunpack.c.l.b16 %v1089
        %v1110 = vunpack.c.l.b16 %v1090
        %v1111 = vpack.c.b16 %v1104, %v1103
        %v1112 = vpack.c.b16 %v1106, %v1105
        %v1113 = vpack.c.b16 %v1108, %v1107
        %v1114 = vpack.c.b16 %v1110, %v1109
        %v1120 = vsel %vm203, %v1091, 0
        %v1123 = vsel %vm203, %v1092, 0
        %v1126 = vsel %vm203, %v1093, 0
        %v1129 = vsel %vm203, %v1094, 0
        %1131 = vmatpush.bf16.msra.mxu0 0
        %1132 = vmatpush.bf16.msra.mxu0 0
        %1133 = vmatpush.bf16.msra.mxu0 0
        %1134 = vmatpush.bf16.msra.mxu0 0
        %1135 = vmatpush.bf16.msra.mxu0 %v1114
        %1136 = vmatpush.bf16.msra.mxu0 %v1113
        %1137 = vmatpush.bf16.msra.mxu0 %v1112
        %1138 = vmatpush.bf16.msra.mxu0 %v1111
        %1139 = vmatmul.bf16.gmra.mxu0 %v1120
        %v1140 = vpop.f32.mrf.mxu0
        %v1141 = vadd.f32 0.0, %v1140
        %v1142 = vpop.f32.mrf.mxu0
        %v1143 = vadd.f32 0.0, %v1142
        %1144 = vmatmul.bf16.gmra.mxu0 %v1123
        %v1145 = vpop.f32.mrf.mxu0
        %v1146 = vadd.f32 0.0, %v1145
        %v1147 = vpop.f32.mrf.mxu0
        %v1148 = vadd.f32 0.0, %v1147
        %1149 = vmatmul.bf16.gmra.mxu0 %v1126
        %v1150 = vpop.f32.mrf.mxu0
        %v1151 = vadd.f32 0.0, %v1150
        %v1152 = vpop.f32.mrf.mxu0
        %v1153 = vadd.f32 0.0, %v1152
        %1154 = vmatmul.bf16.gmra.mxu0 %v1129
        %v1155 = vpop.f32.mrf.mxu0
        %v1156 = vadd.f32 0.0, %v1155
        %v1157 = vpop.f32.mrf.mxu0
        %v1158 = vadd.f32 0.0, %v1157
        %1159 = vdwg.mxu0
        %v1160 = vadd.f32 %v1055, %v1141
        %v1161 = vadd.f32 %v1057, %v1143
        %v1162 = vadd.f32 %v1060, %v1146
        %v1163 = vadd.f32 %v1062, %v1148
        %v1164 = vadd.f32 %v1065, %v1151
        %v1165 = vadd.f32 %v1067, %v1153
        %v1166 = vadd.f32 %v1070, %v1156
        %v1167 = vadd.f32 %v1072, %v1158
        %v1168 = vld [vmem:[%s790 + $0x7] sm:$0xff]
        %v1169 = vld [vmem:[%s790 + $0x1f] sm:$0xff]
        %v1170 = vld [vmem:[%s790 + $0x37] sm:$0xff]
        %v1171 = vld [vmem:[%s790 + $0x4f] sm:$0xff]
        %v1172 = vld [vmem:[%s790 + $0x67] sm:$0xff]
        %v1173 = vld [vmem:[%s790 + $0x7f] sm:$0xff]
        %v1174 = vld [vmem:[%s790 + $0x97] sm:$0xff]
        %v1175 = vld [vmem:[%s790 + $0xaf] sm:$0xff]
        %s1176 = scalar_lea.vmem %s2, 96
        %v1177 = vld [vmem:[%s1176] sm:$0xf]
        %v1178 = vld [vmem:[%s1176 + $0x4] sm:$0xf]
        %v1179 = vld [vmem:[%s1176 + $0x8] sm:$0xf]
        %v1180 = vld [vmem:[%s1176 + $0xc] sm:$0xf]
        %v1181 = vld [vmem:[%s1176 + $0x10] sm:$0xf]
        %v1182 = vld [vmem:[%s1176 + $0x14] sm:$0xf]
        %v1183 = vld [vmem:[%s1176 + $0x18] sm:$0xf]
        %v1184 = vld [vmem:[%s1176 + $0x1c] sm:$0xf]
        %v1185 = vpack.c.bf16 %v1169, %v1168
        %v1186 = vpack.c.bf16 %v1171, %v1170
        %v1187 = vpack.c.bf16 %v1173, %v1172
        %v1188 = vpack.c.bf16 %v1175, %v1174
        %v1197 = vunpack.c.l.b16 %v1177
        %v1198 = vunpack.c.l.b16 %v1178
        %v1199 = vunpack.c.l.b16 %v1179
        %v1200 = vunpack.c.l.b16 %v1180
        %v1201 = vunpack.c.l.b16 %v1181
        %v1202 = vunpack.c.l.b16 %v1182
        %v1203 = vunpack.c.l.b16 %v1183
        %v1204 = vunpack.c.l.b16 %v1184
        %v1205 = vpack.c.b16 %v1198, %v1197
        %v1206 = vpack.c.b16 %v1200, %v1199
        %v1207 = vpack.c.b16 %v1202, %v1201
        %v1208 = vpack.c.b16 %v1204, %v1203
        %v1214 = vsel %vm203, %v1185, 0
        %v1217 = vsel %vm203, %v1186, 0
        %v1220 = vsel %vm203, %v1187, 0
        %v1223 = vsel %vm203, %v1188, 0
        %1225 = vmatpush.bf16.msra.mxu0 0
        %1226 = vmatpush.bf16.msra.mxu0 0
        %1227 = vmatpush.bf16.msra.mxu0 0
        %1228 = vmatpush.bf16.msra.mxu0 0
        %1229 = vmatpush.bf16.msra.mxu0 %v1208
        %1230 = vmatpush.bf16.msra.mxu0 %v1207
        %1231 = vmatpush.bf16.msra.mxu0 %v1206
        %1232 = vmatpush.bf16.msra.mxu0 %v1205
        %1233 = vmatmul.bf16.gmra.mxu0 %v1214
        %v1234 = vpop.f32.mrf.mxu0
        %v1235 = vadd.f32 0.0, %v1234
        %v1236 = vpop.f32.mrf.mxu0
        %v1237 = vadd.f32 0.0, %v1236
        %1238 = vmatmul.bf16.gmra.mxu0 %v1217
        %v1239 = vpop.f32.mrf.mxu0
        %v1240 = vadd.f32 0.0, %v1239
        %v1241 = vpop.f32.mrf.mxu0
        %v1242 = vadd.f32 0.0, %v1241
        %1243 = vmatmul.bf16.gmra.mxu0 %v1220
        %v1244 = vpop.f32.mrf.mxu0
        %v1245 = vadd.f32 0.0, %v1244
        %v1246 = vpop.f32.mrf.mxu0
        %v1247 = vadd.f32 0.0, %v1246
        %1248 = vmatmul.bf16.gmra.mxu0 %v1223
        %v1249 = vpop.f32.mrf.mxu0
        %v1250 = vadd.f32 0.0, %v1249
        %v1251 = vpop.f32.mrf.mxu0
        %v1252 = vadd.f32 0.0, %v1251
        %1253 = vdwg.mxu0
        %v1254 = vadd.f32 %v1160, %v1235
        %v1255 = vadd.f32 %v1161, %v1237
        %v1256 = vadd.f32 %v1162, %v1240
        %v1257 = vadd.f32 %v1163, %v1242
        %v1258 = vadd.f32 %v1164, %v1245
        %v1259 = vadd.f32 %v1165, %v1247
        %v1260 = vadd.f32 %v1166, %v1250
        %v1261 = vadd.f32 %v1167, %v1252
        %v1262 = vld [vmem:[%s790 + $0x8] sm:$0xff]
        %v1263 = vld [vmem:[%s790 + $0x20] sm:$0xff]
        %v1264 = vld [vmem:[%s790 + $0x38] sm:$0xff]
        %v1265 = vld [vmem:[%s790 + $0x50] sm:$0xff]
        %v1266 = vld [vmem:[%s790 + $0x68] sm:$0xff]
        %v1267 = vld [vmem:[%s790 + $0x80] sm:$0xff]
        %v1268 = vld [vmem:[%s790 + $0x98] sm:$0xff]
        %v1269 = vld [vmem:[%s790 + $0xb0] sm:$0xff]
        %s1270 = scalar_lea.vmem %s2, 128
        %v1271 = vld [vmem:[%s1270] sm:$0xf]
        %v1272 = vld [vmem:[%s1270 + $0x4] sm:$0xf]
        %v1273 = vld [vmem:[%s1270 + $0x8] sm:$0xf]
        %v1274 = vld [vmem:[%s1270 + $0xc] sm:$0xf]
        %v1275 = vld [vmem:[%s1270 + $0x10] sm:$0xf]
        %v1276 = vld [vmem:[%s1270 + $0x14] sm:$0xf]
        %v1277 = vld [vmem:[%s1270 + $0x18] sm:$0xf]
        %v1278 = vld [vmem:[%s1270 + $0x1c] sm:$0xf]
        %v1279 = vpack.c.bf16 %v1263, %v1262
        %v1280 = vpack.c.bf16 %v1265, %v1264
        %v1281 = vpack.c.bf16 %v1267, %v1266
        %v1282 = vpack.c.bf16 %v1269, %v1268
        %v1291 = vunpack.c.l.b16 %v1271
        %v1292 = vunpack.c.l.b16 %v1272
        %v1293 = vunpack.c.l.b16 %v1273
        %v1294 = vunpack.c.l.b16 %v1274
        %v1295 = vunpack.c.l.b16 %v1275
        %v1296 = vunpack.c.l.b16 %v1276
        %v1297 = vunpack.c.l.b16 %v1277
        %v1298 = vunpack.c.l.b16 %v1278
        %v1299 = vpack.c.b16 %v1292, %v1291
        %v1300 = vpack.c.b16 %v1294, %v1293
        %v1301 = vpack.c.b16 %v1296, %v1295
        %v1302 = vpack.c.b16 %v1298, %v1297
        %v1308 = vsel %vm203, %v1279, 0
        %v1311 = vsel %vm203, %v1280, 0
        %v1314 = vsel %vm203, %v1281, 0
        %v1317 = vsel %vm203, %v1282, 0
        %1319 = vmatpush.bf16.msra.mxu0 0
        %1320 = vmatpush.bf16.msra.mxu0 0
        %1321 = vmatpush.bf16.msra.mxu0 0
        %1322 = vmatpush.bf16.msra.mxu0 0
        %1323 = vmatpush.bf16.msra.mxu0 %v1302
        %1324 = vmatpush.bf16.msra.mxu0 %v1301
        %1325 = vmatpush.bf16.msra.mxu0 %v1300
        %1326 = vmatpush.bf16.msra.mxu0 %v1299
        %1327 = vmatmul.bf16.gmra.mxu0 %v1308
        %v1328 = vpop.f32.mrf.mxu0
        %v1329 = vadd.f32 0.0, %v1328
        %v1330 = vpop.f32.mrf.mxu0
        %v1331 = vadd.f32 0.0, %v1330
        %1332 = vmatmul.bf16.gmra.mxu0 %v1311
        %v1333 = vpop.f32.mrf.mxu0
        %v1334 = vadd.f32 0.0, %v1333
        %v1335 = vpop.f32.mrf.mxu0
        %v1336 = vadd.f32 0.0, %v1335
        %1337 = vmatmul.bf16.gmra.mxu0 %v1314
        %v1338 = vpop.f32.mrf.mxu0
        %v1339 = vadd.f32 0.0, %v1338
        %v1340 = vpop.f32.mrf.mxu0
        %v1341 = vadd.f32 0.0, %v1340
        %1342 = vmatmul.bf16.gmra.mxu0 %v1317
        %v1343 = vpop.f32.mrf.mxu0
        %v1344 = vadd.f32 0.0, %v1343
        %v1345 = vpop.f32.mrf.mxu0
        %v1346 = vadd.f32 0.0, %v1345
        %1347 = vdwg.mxu0
        %v1348 = vadd.f32 %v1254, %v1329
        %v1349 = vadd.f32 %v1255, %v1331
        %v1350 = vadd.f32 %v1256, %v1334
        %v1351 = vadd.f32 %v1257, %v1336
        %v1352 = vadd.f32 %v1258, %v1339
        %v1353 = vadd.f32 %v1259, %v1341
        %v1354 = vadd.f32 %v1260, %v1344
        %v1355 = vadd.f32 %v1261, %v1346
        %v1356 = vld [vmem:[%s790 + $0x9] sm:$0xff]
        %v1357 = vld [vmem:[%s790 + $0x21] sm:$0xff]
        %v1358 = vld [vmem:[%s790 + $0x39] sm:$0xff]
        %v1359 = vld [vmem:[%s790 + $0x51] sm:$0xff]
        %v1360 = vld [vmem:[%s790 + $0x69] sm:$0xff]
        %v1361 = vld [vmem:[%s790 + $0x81] sm:$0xff]
        %v1362 = vld [vmem:[%s790 + $0x99] sm:$0xff]
        %v1363 = vld [vmem:[%s790 + $0xb1] sm:$0xff]
        %s1364 = scalar_lea.vmem %s2, 160
        %v1365 = vld [vmem:[%s1364] sm:$0xf]
        %v1366 = vld [vmem:[%s1364 + $0x4] sm:$0xf]
        %v1367 = vld [vmem:[%s1364 + $0x8] sm:$0xf]
        %v1368 = vld [vmem:[%s1364 + $0xc] sm:$0xf]
        %v1369 = vld [vmem:[%s1364 + $0x10] sm:$0xf]
        %v1370 = vld [vmem:[%s1364 + $0x14] sm:$0xf]
        %v1371 = vld [vmem:[%s1364 + $0x18] sm:$0xf]
        %v1372 = vld [vmem:[%s1364 + $0x1c] sm:$0xf]
        %v1373 = vpack.c.bf16 %v1357, %v1356
        %v1374 = vpack.c.bf16 %v1359, %v1358
        %v1375 = vpack.c.bf16 %v1361, %v1360
        %v1376 = vpack.c.bf16 %v1363, %v1362
        %v1385 = vunpack.c.l.b16 %v1365
        %v1386 = vunpack.c.l.b16 %v1366
        %v1387 = vunpack.c.l.b16 %v1367
        %v1388 = vunpack.c.l.b16 %v1368
        %v1389 = vunpack.c.l.b16 %v1369
        %v1390 = vunpack.c.l.b16 %v1370
        %v1391 = vunpack.c.l.b16 %v1371
        %v1392 = vunpack.c.l.b16 %v1372
        %v1393 = vpack.c.b16 %v1386, %v1385
        %v1394 = vpack.c.b16 %v1388, %v1387
        %v1395 = vpack.c.b16 %v1390, %v1389
        %v1396 = vpack.c.b16 %v1392, %v1391
        %v1402 = vsel %vm203, %v1373, 0
        %v1405 = vsel %vm203, %v1374, 0
        %v1408 = vsel %vm203, %v1375, 0
        %v1411 = vsel %vm203, %v1376, 0
        %1413 = vmatpush.bf16.msra.mxu0 0
        %1414 = vmatpush.bf16.msra.mxu0 0
        %1415 = vmatpush.bf16.msra.mxu0 0
        %1416 = vmatpush.bf16.msra.mxu0 0
        %1417 = vmatpush.bf16.msra.mxu0 %v1396
        %1418 = vmatpush.bf16.msra.mxu0 %v1395
        %1419 = vmatpush.bf16.msra.mxu0 %v1394
        %1420 = vmatpush.bf16.msra.mxu0 %v1393
        %1421 = vmatmul.bf16.gmra.mxu0 %v1402
        %v1422 = vpop.f32.mrf.mxu0
        %v1423 = vadd.f32 0.0, %v1422
        %v1424 = vpop.f32.mrf.mxu0
        %v1425 = vadd.f32 0.0, %v1424
        %1426 = vmatmul.bf16.gmra.mxu0 %v1405
        %v1427 = vpop.f32.mrf.mxu0
        %v1428 = vadd.f32 0.0, %v1427
        %v1429 = vpop.f32.mrf.mxu0
        %v1430 = vadd.f32 0.0, %v1429
        %1431 = vmatmul.bf16.gmra.mxu0 %v1408
        %v1432 = vpop.f32.mrf.mxu0
        %v1433 = vadd.f32 0.0, %v1432
        %v1434 = vpop.f32.mrf.mxu0
        %v1435 = vadd.f32 0.0, %v1434
        %1436 = vmatmul.bf16.gmra.mxu0 %v1411
        %v1437 = vpop.f32.mrf.mxu0
        %v1438 = vadd.f32 0.0, %v1437
        %v1439 = vpop.f32.mrf.mxu0
        %v1440 = vadd.f32 0.0, %v1439
        %1441 = vdwg.mxu0
        %v1442 = vadd.f32 %v1348, %v1423
        %v1443 = vadd.f32 %v1349, %v1425
        %v1444 = vadd.f32 %v1350, %v1428
        %v1445 = vadd.f32 %v1351, %v1430
        %v1446 = vadd.f32 %v1352, %v1433
        %v1447 = vadd.f32 %v1353, %v1435
        %v1448 = vadd.f32 %v1354, %v1438
        %v1449 = vadd.f32 %v1355, %v1440
        %s1450 = scalar_lea.vmem [#allocation2], 48
        %v1451 = vld [vmem:[%s1450 + $0x7] sm:$0xff]
        %v1452 = vld [vmem:[%s1450 + $0x1f] sm:$0xff]
        %v1453 = vld [vmem:[%s1450 + $0x37] sm:$0xff]
        %v1454 = vld [vmem:[%s1450 + $0x4f] sm:$0xff]
        %v1455 = vld [vmem:[%s1450 + $0x67] sm:$0xff]
        %v1456 = vld [vmem:[%s1450 + $0x7f] sm:$0xff]
        %v1457 = vld [vmem:[%s1450 + $0x97] sm:$0xff]
        %v1458 = vld [vmem:[%s1450 + $0xaf] sm:$0xff]
        %s1459 = scalar_lea.vmem %s2, 192
        %v1460 = vld [vmem:[%s1459] sm:$0xf]
        %v1461 = vld [vmem:[%s1459 + $0x4] sm:$0xf]
        %v1462 = vld [vmem:[%s1459 + $0x8] sm:$0xf]
        %v1463 = vld [vmem:[%s1459 + $0xc] sm:$0xf]
        %v1464 = vld [vmem:[%s1459 + $0x10] sm:$0xf]
        %v1465 = vld [vmem:[%s1459 + $0x14] sm:$0xf]
        %v1466 = vld [vmem:[%s1459 + $0x18] sm:$0xf]
        %v1467 = vld [vmem:[%s1459 + $0x1c] sm:$0xf]
        %v1468 = vpack.c.bf16 %v1452, %v1451
        %v1469 = vpack.c.bf16 %v1454, %v1453
        %v1470 = vpack.c.bf16 %v1456, %v1455
        %v1471 = vpack.c.bf16 %v1458, %v1457
        %v1480 = vunpack.c.l.b16 %v1460
        %v1481 = vunpack.c.l.b16 %v1461
        %v1482 = vunpack.c.l.b16 %v1462
        %v1483 = vunpack.c.l.b16 %v1463
        %v1484 = vunpack.c.l.b16 %v1464
        %v1485 = vunpack.c.l.b16 %v1465
        %v1486 = vunpack.c.l.b16 %v1466
        %v1487 = vunpack.c.l.b16 %v1467
        %v1488 = vpack.c.b16 %v1481, %v1480
        %v1489 = vpack.c.b16 %v1483, %v1482
        %v1490 = vpack.c.b16 %v1485, %v1484
        %v1491 = vpack.c.b16 %v1487, %v1486
        %v1497 = vsel %vm203, %v1468, 0
        %v1500 = vsel %vm203, %v1469, 0
        %v1503 = vsel %vm203, %v1470, 0
        %v1506 = vsel %vm203, %v1471, 0
        %1508 = vmatpush.bf16.msra.mxu0 0
        %1509 = vmatpush.bf16.msra.mxu0 0
        %1510 = vmatpush.bf16.msra.mxu0 0
        %1511 = vmatpush.bf16.msra.mxu0 0
        %1512 = vmatpush.bf16.msra.mxu0 %v1491
        %1513 = vmatpush.bf16.msra.mxu0 %v1490
        %1514 = vmatpush.bf16.msra.mxu0 %v1489
        %1515 = vmatpush.bf16.msra.mxu0 %v1488
        %1516 = vmatmul.bf16.gmra.mxu0 %v1497
        %v1517 = vpop.f32.mrf.mxu0
        %v1518 = vadd.f32 0.0, %v1517
        %v1519 = vpop.f32.mrf.mxu0
        %v1520 = vadd.f32 0.0, %v1519
        %1521 = vmatmul.bf16.gmra.mxu0 %v1500
        %v1522 = vpop.f32.mrf.mxu0
        %v1523 = vadd.f32 0.0, %v1522
        %v1524 = vpop.f32.mrf.mxu0
        %v1525 = vadd.f32 0.0, %v1524
        %1526 = vmatmul.bf16.gmra.mxu0 %v1503
        %v1527 = vpop.f32.mrf.mxu0
        %v1528 = vadd.f32 0.0, %v1527
        %v1529 = vpop.f32.mrf.mxu0
        %v1530 = vadd.f32 0.0, %v1529
        %1531 = vmatmul.bf16.gmra.mxu0 %v1506
        %v1532 = vpop.f32.mrf.mxu0
        %v1533 = vadd.f32 0.0, %v1532
        %v1534 = vpop.f32.mrf.mxu0
        %v1535 = vadd.f32 0.0, %v1534
        %1536 = vdwg.mxu0
        %v1537 = vadd.f32 %v1442, %v1518
        %v1538 = vadd.f32 %v1443, %v1520
        %v1539 = vadd.f32 %v1444, %v1523
        %v1540 = vadd.f32 %v1445, %v1525
        %v1541 = vadd.f32 %v1446, %v1528
        %v1542 = vadd.f32 %v1447, %v1530
        %v1543 = vadd.f32 %v1448, %v1533
        %v1544 = vadd.f32 %v1449, %v1535
        %v1545 = vld [vmem:[%s1450 + $0x8] sm:$0xff]
        %v1546 = vld [vmem:[%s1450 + $0x20] sm:$0xff]
        %v1547 = vld [vmem:[%s1450 + $0x38] sm:$0xff]
        %v1548 = vld [vmem:[%s1450 + $0x50] sm:$0xff]
        %v1549 = vld [vmem:[%s1450 + $0x68] sm:$0xff]
        %v1550 = vld [vmem:[%s1450 + $0x80] sm:$0xff]
        %v1551 = vld [vmem:[%s1450 + $0x98] sm:$0xff]
        %v1552 = vld [vmem:[%s1450 + $0xb0] sm:$0xff]
        %s1553 = scalar_lea.vmem %s2, 224
        %v1554 = vld [vmem:[%s1553] sm:$0xf]
        %v1555 = vld [vmem:[%s1553 + $0x4] sm:$0xf]
        %v1556 = vld [vmem:[%s1553 + $0x8] sm:$0xf]
        %v1557 = vld [vmem:[%s1553 + $0xc] sm:$0xf]
        %v1558 = vld [vmem:[%s1553 + $0x10] sm:$0xf]
        %v1559 = vld [vmem:[%s1553 + $0x14] sm:$0xf]
        %v1560 = vld [vmem:[%s1553 + $0x18] sm:$0xf]
        %v1561 = vld [vmem:[%s1553 + $0x1c] sm:$0xf]
        %v1562 = vpack.c.bf16 %v1546, %v1545
        %v1563 = vpack.c.bf16 %v1548, %v1547
        %v1564 = vpack.c.bf16 %v1550, %v1549
        %v1565 = vpack.c.bf16 %v1552, %v1551
        %v1574 = vunpack.c.l.b16 %v1554
        %v1575 = vunpack.c.l.b16 %v1555
        %v1576 = vunpack.c.l.b16 %v1556
        %v1577 = vunpack.c.l.b16 %v1557
        %v1578 = vunpack.c.l.b16 %v1558
        %v1579 = vunpack.c.l.b16 %v1559
        %v1580 = vunpack.c.l.b16 %v1560
        %v1581 = vunpack.c.l.b16 %v1561
        %v1582 = vpack.c.b16 %v1575, %v1574
        %v1583 = vpack.c.b16 %v1577, %v1576
        %v1584 = vpack.c.b16 %v1579, %v1578
        %v1585 = vpack.c.b16 %v1581, %v1580
        %v1591 = vsel %vm203, %v1562, 0
        %v1594 = vsel %vm203, %v1563, 0
        %v1597 = vsel %vm203, %v1564, 0
        %v1600 = vsel %vm203, %v1565, 0
        %1602 = vmatpush.bf16.msra.mxu0 0
        %1603 = vmatpush.bf16.msra.mxu0 0
        %1604 = vmatpush.bf16.msra.mxu0 0
        %1605 = vmatpush.bf16.msra.mxu0 0
        %1606 = vmatpush.bf16.msra.mxu0 %v1585
        %1607 = vmatpush.bf16.msra.mxu0 %v1584
        %1608 = vmatpush.bf16.msra.mxu0 %v1583
        %1609 = vmatpush.bf16.msra.mxu0 %v1582
        %1610 = vmatmul.bf16.gmra.mxu0 %v1591
        %v1611 = vpop.f32.mrf.mxu0
        %v1612 = vadd.f32 0.0, %v1611
        %v1613 = vpop.f32.mrf.mxu0
        %v1614 = vadd.f32 0.0, %v1613
        %1615 = vmatmul.bf16.gmra.mxu0 %v1594
        %v1616 = vpop.f32.mrf.mxu0
        %v1617 = vadd.f32 0.0, %v1616
        %v1618 = vpop.f32.mrf.mxu0
        %v1619 = vadd.f32 0.0, %v1618
        %1620 = vmatmul.bf16.gmra.mxu0 %v1597
        %v1621 = vpop.f32.mrf.mxu0
        %v1622 = vadd.f32 0.0, %v1621
        %v1623 = vpop.f32.mrf.mxu0
        %v1624 = vadd.f32 0.0, %v1623
        %1625 = vmatmul.bf16.gmra.mxu0 %v1600
        %v1626 = vpop.f32.mrf.mxu0
        %v1627 = vadd.f32 0.0, %v1626
        %v1628 = vpop.f32.mrf.mxu0
        %v1629 = vadd.f32 0.0, %v1628
        %1630 = vdwg.mxu0
        %v1631 = vadd.f32 %v1537, %v1612
        %v1632 = vadd.f32 %v1538, %v1614
        %v1633 = vadd.f32 %v1539, %v1617
        %v1634 = vadd.f32 %v1540, %v1619
        %v1635 = vadd.f32 %v1541, %v1622
        %v1636 = vadd.f32 %v1542, %v1624
        %v1637 = vadd.f32 %v1543, %v1627
        %v1638 = vadd.f32 %v1544, %v1629
        %v1639 = vld [vmem:[%s1450 + $0x9] sm:$0xff]
        %v1640 = vld [vmem:[%s1450 + $0x21] sm:$0xff]
        %v1641 = vld [vmem:[%s1450 + $0x39] sm:$0xff]
        %v1642 = vld [vmem:[%s1450 + $0x51] sm:$0xff]
        %v1643 = vld [vmem:[%s1450 + $0x69] sm:$0xff]
        %v1644 = vld [vmem:[%s1450 + $0x81] sm:$0xff]
        %v1645 = vld [vmem:[%s1450 + $0x99] sm:$0xff]
        %v1646 = vld [vmem:[%s1450 + $0xb1] sm:$0xff]
        %s1647 = scalar_lea.vmem %s2, 256
        %v1648 = vld [vmem:[%s1647] sm:$0xf]
        %v1649 = vld [vmem:[%s1647 + $0x4] sm:$0xf]
        %v1650 = vld [vmem:[%s1647 + $0x8] sm:$0xf]
        %v1651 = vld [vmem:[%s1647 + $0xc] sm:$0xf]
        %v1652 = vld [vmem:[%s1647 + $0x10] sm:$0xf]
        %v1653 = vld [vmem:[%s1647 + $0x14] sm:$0xf]
        %v1654 = vld [vmem:[%s1647 + $0x18] sm:$0xf]
        %v1655 = vld [vmem:[%s1647 + $0x1c] sm:$0xf]
        %v1656 = vpack.c.bf16 %v1640, %v1639
        %v1657 = vpack.c.bf16 %v1642, %v1641
        %v1658 = vpack.c.bf16 %v1644, %v1643
        %v1659 = vpack.c.bf16 %v1646, %v1645
        %v1668 = vunpack.c.l.b16 %v1648
        %v1669 = vunpack.c.l.b16 %v1649
        %v1670 = vunpack.c.l.b16 %v1650
        %v1671 = vunpack.c.l.b16 %v1651
        %v1672 = vunpack.c.l.b16 %v1652
        %v1673 = vunpack.c.l.b16 %v1653
        %v1674 = vunpack.c.l.b16 %v1654
        %v1675 = vunpack.c.l.b16 %v1655
        %v1676 = vpack.c.b16 %v1669, %v1668
        %v1677 = vpack.c.b16 %v1671, %v1670
        %v1678 = vpack.c.b16 %v1673, %v1672
        %v1679 = vpack.c.b16 %v1675, %v1674
        %v1685 = vsel %vm203, %v1656, 0
        %v1688 = vsel %vm203, %v1657, 0
        %v1691 = vsel %vm203, %v1658, 0
        %v1694 = vsel %vm203, %v1659, 0
        %1696 = vmatpush.bf16.msra.mxu0 0
        %1697 = vmatpush.bf16.msra.mxu0 0
        %1698 = vmatpush.bf16.msra.mxu0 0
        %1699 = vmatpush.bf16.msra.mxu0 0
        %1700 = vmatpush.bf16.msra.mxu0 %v1679
        %1701 = vmatpush.bf16.msra.mxu0 %v1678
        %1702 = vmatpush.bf16.msra.mxu0 %v1677
        %1703 = vmatpush.bf16.msra.mxu0 %v1676
        %1704 = vmatmul.bf16.gmra.mxu0 %v1685
        %v1705 = vpop.f32.mrf.mxu0
        %v1706 = vadd.f32 0.0, %v1705
        %v1707 = vpop.f32.mrf.mxu0
        %v1708 = vadd.f32 0.0, %v1707
        %1709 = vmatmul.bf16.gmra.mxu0 %v1688
        %v1710 = vpop.f32.mrf.mxu0
        %v1711 = vadd.f32 0.0, %v1710
        %v1712 = vpop.f32.mrf.mxu0
        %v1713 = vadd.f32 0.0, %v1712
        %1714 = vmatmul.bf16.gmra.mxu0 %v1691
        %v1715 = vpop.f32.mrf.mxu0
        %v1716 = vadd.f32 0.0, %v1715
        %v1717 = vpop.f32.mrf.mxu0
        %v1718 = vadd.f32 0.0, %v1717
        %1719 = vmatmul.bf16.gmra.mxu0 %v1694
        %v1720 = vpop.f32.mrf.mxu0
        %v1721 = vadd.f32 0.0, %v1720
        %v1722 = vpop.f32.mrf.mxu0
        %v1723 = vadd.f32 0.0, %v1722
        %1724 = vdwg.mxu0
        %v1725 = vadd.f32 %v1631, %v1706
        %v1726 = vadd.f32 %v1632, %v1708
        %v1727 = vadd.f32 %v1633, %v1711
        %v1728 = vadd.f32 %v1634, %v1713
        %v1729 = vadd.f32 %v1635, %v1716
        %v1730 = vadd.f32 %v1636, %v1718
        %v1731 = vadd.f32 %v1637, %v1721
        %v1732 = vadd.f32 %v1638, %v1723
        %v1733 = vld [vmem:[%s3 + $0x1] sm:$0x1]
        %v1734 = vperm.slane %v1733, 0
        %v1735 = vadd.f32 %v1725, %v1734
        %v1736 = vadd.f32 %v1726, %v1734
        %v1737 = vadd.f32 %v1727, %v1734
        %v1738 = vadd.f32 %v1728, %v1734
        %v1739 = vadd.f32 %v1729, %v1734
        %v1740 = vadd.f32 %v1730, %v1734
        %v1741 = vadd.f32 %v1731, %v1734
        %v1742 = vadd.f32 %v1732, %v1734
        %v1743 = vmax.f32 %v1735, 0.0
        %v1744 = vmax.f32 %v1736, 0.0
        %v1745 = vmax.f32 %v1737, 0.0
        %v1746 = vmax.f32 %v1738, 0.0
        %v1747 = vmax.f32 %v1739, 0.0
        %v1748 = vmax.f32 %v1740, 0.0
        %v1749 = vmax.f32 %v1741, 0.0
        %v1750 = vmax.f32 %v1742, 0.0
        %1751 = vst.msk [vmem:[%s790 + $0x8] sm:$0xff] %vm203, %v1743
        %1752 = vst.msk [vmem:[%s790 + $0x20] sm:$0xff] %vm203, %v1744
        %1753 = vst.msk [vmem:[%s790 + $0x38] sm:$0xff] %vm203, %v1745
        %1754 = vst.msk [vmem:[%s790 + $0x50] sm:$0xff] %vm203, %v1746
        %1755 = vst.msk [vmem:[%s790 + $0x68] sm:$0xff] %vm203, %v1747
        %1756 = vst.msk [vmem:[%s790 + $0x80] sm:$0xff] %vm203, %v1748
        %1757 = vst.msk [vmem:[%s790 + $0x98] sm:$0xff] %vm203, %v1749
        %1758 = vst.msk [vmem:[%s790 + $0xb0] sm:$0xff] %vm203, %v1750
        %v1759 = vld [vmem:[#allocation2 + $0x7] sm:$0xff]
        %v1760 = vld [vmem:[#allocation2 + $0x1f] sm:$0xff]
        %v1761 = vld [vmem:[#allocation2 + $0x37] sm:$0xff]
        %v1762 = vld [vmem:[#allocation2 + $0x4f] sm:$0xff]
        %v1763 = vld [vmem:[#allocation2 + $0x67] sm:$0xff]
        %v1764 = vld [vmem:[#allocation2 + $0x7f] sm:$0xff]
        %v1765 = vld [vmem:[#allocation2 + $0x97] sm:$0xff]
        %v1766 = vld [vmem:[#allocation2 + $0xaf] sm:$0xff]
        %s1767 = scalar_lea.vmem %s2, 288
        %v1768 = vld [vmem:[%s1767] sm:$0xf]
        %v1769 = vld [vmem:[%s1767 + $0x4] sm:$0xf]
        %v1770 = vld [vmem:[%s1767 + $0x8] sm:$0xf]
        %v1771 = vld [vmem:[%s1767 + $0xc] sm:$0xf]
        %v1772 = vld [vmem:[%s1767 + $0x10] sm:$0xf]
        %v1773 = vld [vmem:[%s1767 + $0x14] sm:$0xf]
        %v1774 = vld [vmem:[%s1767 + $0x18] sm:$0xf]
        %v1775 = vld [vmem:[%s1767 + $0x1c] sm:$0xf]
        %v1776 = vpack.c.bf16 %v1760, %v1759
        %v1777 = vpack.c.bf16 %v1762, %v1761
        %v1778 = vpack.c.bf16 %v1764, %v1763
        %v1779 = vpack.c.bf16 %v1766, %v1765
        %v1780 = vld [vmem:[#allocation2 + $0x8] sm:$0xff]
        %v1781 = vld [vmem:[#allocation2 + $0x20] sm:$0xff]
        %v1782 = vld [vmem:[#allocation2 + $0x38] sm:$0xff]
        %v1783 = vld [vmem:[#allocation2 + $0x50] sm:$0xff]
        %v1784 = vld [vmem:[#allocation2 + $0x68] sm:$0xff]
        %v1785 = vld [vmem:[#allocation2 + $0x80] sm:$0xff]
        %v1786 = vld [vmem:[#allocation2 + $0x98] sm:$0xff]
        %v1787 = vld [vmem:[#allocation2 + $0xb0] sm:$0xff]
        %s1788 = scalar_lea.vmem %s2, 320
        %v1789 = vld [vmem:[%s1788] sm:$0xf]
        %v1790 = vld [vmem:[%s1788 + $0x4] sm:$0xf]
        %v1791 = vld [vmem:[%s1788 + $0x8] sm:$0xf]
        %v1792 = vld [vmem:[%s1788 + $0xc] sm:$0xf]
        %v1793 = vld [vmem:[%s1788 + $0x10] sm:$0xf]
        %v1794 = vld [vmem:[%s1788 + $0x14] sm:$0xf]
        %v1795 = vld [vmem:[%s1788 + $0x18] sm:$0xf]
        %v1796 = vld [vmem:[%s1788 + $0x1c] sm:$0xf]
        %v1797 = vpack.c.bf16 %v1781, %v1780
        %v1798 = vpack.c.bf16 %v1783, %v1782
        %v1799 = vpack.c.bf16 %v1785, %v1784
        %v1800 = vpack.c.bf16 %v1787, %v1786
        %v1809 = vunpack.c.l.b16 %v1789
        %v1810 = vunpack.c.l.b16 %v1790
        %v1811 = vunpack.c.l.b16 %v1791
        %v1812 = vunpack.c.l.b16 %v1792
        %v1813 = vunpack.c.l.b16 %v1793
        %v1814 = vunpack.c.l.b16 %v1794
        %v1815 = vunpack.c.l.b16 %v1795
        %v1816 = vunpack.c.l.b16 %v1796
        %v1817 = vpack.c.b16 %v1810, %v1809
        %v1818 = vpack.c.b16 %v1812, %v1811
        %v1819 = vpack.c.b16 %v1814, %v1813
        %v1820 = vpack.c.b16 %v1816, %v1815
        %v1826 = vsel %vm203, %v1797, 0
        %v1829 = vsel %vm203, %v1798, 0
        %v1832 = vsel %vm203, %v1799, 0
        %v1835 = vsel %vm203, %v1800, 0
        %1837 = vmatpush.bf16.msra.mxu0 0
        %1838 = vmatpush.bf16.msra.mxu0 0
        %1839 = vmatpush.bf16.msra.mxu0 0
        %1840 = vmatpush.bf16.msra.mxu0 0
        %1841 = vmatpush.bf16.msra.mxu0 %v1820
        %1842 = vmatpush.bf16.msra.mxu0 %v1819
        %1843 = vmatpush.bf16.msra.mxu0 %v1818
        %1844 = vmatpush.bf16.msra.mxu0 %v1817
        %1845 = vmatmul.bf16.gmra.mxu0 %v1826
        %v1846 = vpop.f32.mrf.mxu0
        %v1847 = vadd.f32 0.0, %v1846
        %v1848 = vpop.f32.mrf.mxu0
        %v1849 = vadd.f32 0.0, %v1848
        %1850 = vmatmul.bf16.gmra.mxu0 %v1829
        %v1851 = vpop.f32.mrf.mxu0
        %v1852 = vadd.f32 0.0, %v1851
        %v1853 = vpop.f32.mrf.mxu0
        %v1854 = vadd.f32 0.0, %v1853
        %1855 = vmatmul.bf16.gmra.mxu0 %v1832
        %v1856 = vpop.f32.mrf.mxu0
        %v1857 = vadd.f32 0.0, %v1856
        %v1858 = vpop.f32.mrf.mxu0
        %v1859 = vadd.f32 0.0, %v1858
        %1860 = vmatmul.bf16.gmra.mxu0 %v1835
        %v1861 = vpop.f32.mrf.mxu0
        %v1862 = vadd.f32 0.0, %v1861
        %v1863 = vpop.f32.mrf.mxu0
        %v1864 = vadd.f32 0.0, %v1863
        %1865 = vdwg.mxu0
        %v1874 = vunpack.c.l.b16 %v1768
        %v1875 = vunpack.c.l.b16 %v1769
        %v1876 = vunpack.c.l.b16 %v1770
        %v1877 = vunpack.c.l.b16 %v1771
        %v1878 = vunpack.c.l.b16 %v1772
        %v1879 = vunpack.c.l.b16 %v1773
        %v1880 = vunpack.c.l.b16 %v1774
        %v1881 = vunpack.c.l.b16 %v1775
        %v1882 = vpack.c.b16 %v1875, %v1874
        %v1883 = vpack.c.b16 %v1877, %v1876
        %v1884 = vpack.c.b16 %v1879, %v1878
        %v1885 = vpack.c.b16 %v1881, %v1880
        %v1891 = vsel %vm203, %v1776, 0
        %v1894 = vsel %vm203, %v1777, 0
        %v1897 = vsel %vm203, %v1778, 0
        %v1900 = vsel %vm203, %v1779, 0
        %1902 = vmatpush.bf16.msra.mxu0 0
        %1903 = vmatpush.bf16.msra.mxu0 0
        %1904 = vmatpush.bf16.msra.mxu0 0
        %1905 = vmatpush.bf16.msra.mxu0 0
        %1906 = vmatpush.bf16.msra.mxu0 %v1885
        %1907 = vmatpush.bf16.msra.mxu0 %v1884
        %1908 = vmatpush.bf16.msra.mxu0 %v1883
        %1909 = vmatpush.bf16.msra.mxu0 %v1882
        %1910 = vmatmul.bf16.gmra.mxu0 %v1891
        %v1911 = vpop.f32.mrf.mxu0
        %v1912 = vadd.f32 %v1847, %v1911
        %v1913 = vpop.f32.mrf.mxu0
        %v1914 = vadd.f32 %v1849, %v1913
        %1915 = vmatmul.bf16.gmra.mxu0 %v1894
        %v1916 = vpop.f32.mrf.mxu0
        %v1917 = vadd.f32 %v1852, %v1916
        %v1918 = vpop.f32.mrf.mxu0
        %v1919 = vadd.f32 %v1854, %v1918
        %1920 = vmatmul.bf16.gmra.mxu0 %v1897
        %v1921 = vpop.f32.mrf.mxu0
        %v1922 = vadd.f32 %v1857, %v1921
        %v1923 = vpop.f32.mrf.mxu0
        %v1924 = vadd.f32 %v1859, %v1923
        %1925 = vmatmul.bf16.gmra.mxu0 %v1900
        %v1926 = vpop.f32.mrf.mxu0
        %v1927 = vadd.f32 %v1862, %v1926
        %v1928 = vpop.f32.mrf.mxu0
        %v1929 = vadd.f32 %v1864, %v1928
        %1930 = vdwg.mxu0
        %v1931 = vld [vmem:[#allocation2 + $0x9] sm:$0xff]
        %v1932 = vld [vmem:[#allocation2 + $0x21] sm:$0xff]
        %v1933 = vld [vmem:[#allocation2 + $0x39] sm:$0xff]
        %v1934 = vld [vmem:[#allocation2 + $0x51] sm:$0xff]
        %v1935 = vld [vmem:[#allocation2 + $0x69] sm:$0xff]
        %v1936 = vld [vmem:[#allocation2 + $0x81] sm:$0xff]
        %v1937 = vld [vmem:[#allocation2 + $0x99] sm:$0xff]
        %v1938 = vld [vmem:[#allocation2 + $0xb1] sm:$0xff]
        %s1939 = scalar_lea.vmem %s2, 352
        %v1940 = vld [vmem:[%s1939] sm:$0xf]
        %v1941 = vld [vmem:[%s1939 + $0x4] sm:$0xf]
        %v1942 = vld [vmem:[%s1939 + $0x8] sm:$0xf]
        %v1943 = vld [vmem:[%s1939 + $0xc] sm:$0xf]
        %v1944 = vld [vmem:[%s1939 + $0x10] sm:$0xf]
        %v1945 = vld [vmem:[%s1939 + $0x14] sm:$0xf]
        %v1946 = vld [vmem:[%s1939 + $0x18] sm:$0xf]
        %v1947 = vld [vmem:[%s1939 + $0x1c] sm:$0xf]
        %v1948 = vpack.c.bf16 %v1932, %v1931
        %v1949 = vpack.c.bf16 %v1934, %v1933
        %v1950 = vpack.c.bf16 %v1936, %v1935
        %v1951 = vpack.c.bf16 %v1938, %v1937
        %v1960 = vunpack.c.l.b16 %v1940
        %v1961 = vunpack.c.l.b16 %v1941
        %v1962 = vunpack.c.l.b16 %v1942
        %v1963 = vunpack.c.l.b16 %v1943
        %v1964 = vunpack.c.l.b16 %v1944
        %v1965 = vunpack.c.l.b16 %v1945
        %v1966 = vunpack.c.l.b16 %v1946
        %v1967 = vunpack.c.l.b16 %v1947
        %v1968 = vpack.c.b16 %v1961, %v1960
        %v1969 = vpack.c.b16 %v1963, %v1962
        %v1970 = vpack.c.b16 %v1965, %v1964
        %v1971 = vpack.c.b16 %v1967, %v1966
        %v1977 = vsel %vm203, %v1948, 0
        %v1980 = vsel %vm203, %v1949, 0
        %v1983 = vsel %vm203, %v1950, 0
        %v1986 = vsel %vm203, %v1951, 0
        %1988 = vmatpush.bf16.msra.mxu0 0
        %1989 = vmatpush.bf16.msra.mxu0 0
        %1990 = vmatpush.bf16.msra.mxu0 0
        %1991 = vmatpush.bf16.msra.mxu0 0
        %1992 = vmatpush.bf16.msra.mxu0 %v1971
        %1993 = vmatpush.bf16.msra.mxu0 %v1970
        %1994 = vmatpush.bf16.msra.mxu0 %v1969
        %1995 = vmatpush.bf16.msra.mxu0 %v1968
        %1996 = vmatmul.bf16.gmra.mxu0 %v1977
        %v1997 = vpop.f32.mrf.mxu0
        %v1998 = vadd.f32 0.0, %v1997
        %v1999 = vpop.f32.mrf.mxu0
        %v2000 = vadd.f32 0.0, %v1999
        %2001 = vmatmul.bf16.gmra.mxu0 %v1980
        %v2002 = vpop.f32.mrf.mxu0
        %v2003 = vadd.f32 0.0, %v2002
        %v2004 = vpop.f32.mrf.mxu0
        %v2005 = vadd.f32 0.0, %v2004
        %2006 = vmatmul.bf16.gmra.mxu0 %v1983
        %v2007 = vpop.f32.mrf.mxu0
        %v2008 = vadd.f32 0.0, %v2007
        %v2009 = vpop.f32.mrf.mxu0
        %v2010 = vadd.f32 0.0, %v2009
        %2011 = vmatmul.bf16.gmra.mxu0 %v1986
        %v2012 = vpop.f32.mrf.mxu0
        %v2013 = vadd.f32 0.0, %v2012
        %v2014 = vpop.f32.mrf.mxu0
        %v2015 = vadd.f32 0.0, %v2014
        %2016 = vdwg.mxu0
        %v2017 = vadd.f32 %v1912, %v1998
        %v2018 = vadd.f32 %v1914, %v2000
        %v2019 = vadd.f32 %v1917, %v2003
        %v2020 = vadd.f32 %v1919, %v2005
        %v2021 = vadd.f32 %v1922, %v2008
        %v2022 = vadd.f32 %v1924, %v2010
        %v2023 = vadd.f32 %v1927, %v2013
        %v2024 = vadd.f32 %v1929, %v2015
        %v2025 = vld [vmem:[%s790 + $0x7] sm:$0xff]
        %v2026 = vld [vmem:[%s790 + $0x1f] sm:$0xff]
        %v2027 = vld [vmem:[%s790 + $0x37] sm:$0xff]
        %v2028 = vld [vmem:[%s790 + $0x4f] sm:$0xff]
        %v2029 = vld [vmem:[%s790 + $0x67] sm:$0xff]
        %v2030 = vld [vmem:[%s790 + $0x7f] sm:$0xff]
        %v2031 = vld [vmem:[%s790 + $0x97] sm:$0xff]
        %v2032 = vld [vmem:[%s790 + $0xaf] sm:$0xff]
        %s2033 = scalar_lea.vmem %s2, 384
        %v2034 = vld [vmem:[%s2033] sm:$0xf]
        %v2035 = vld [vmem:[%s2033 + $0x4] sm:$0xf]
        %v2036 = vld [vmem:[%s2033 + $0x8] sm:$0xf]
        %v2037 = vld [vmem:[%s2033 + $0xc] sm:$0xf]
        %v2038 = vld [vmem:[%s2033 + $0x10] sm:$0xf]
        %v2039 = vld [vmem:[%s2033 + $0x14] sm:$0xf]
        %v2040 = vld [vmem:[%s2033 + $0x18] sm:$0xf]
        %v2041 = vld [vmem:[%s2033 + $0x1c] sm:$0xf]
        %v2042 = vpack.c.bf16 %v2026, %v2025
        %v2043 = vpack.c.bf16 %v2028, %v2027
        %v2044 = vpack.c.bf16 %v2030, %v2029
        %v2045 = vpack.c.bf16 %v2032, %v2031
        %v2054 = vunpack.c.l.b16 %v2034
        %v2055 = vunpack.c.l.b16 %v2035
        %v2056 = vunpack.c.l.b16 %v2036
        %v2057 = vunpack.c.l.b16 %v2037
        %v2058 = vunpack.c.l.b16 %v2038
        %v2059 = vunpack.c.l.b16 %v2039
        %v2060 = vunpack.c.l.b16 %v2040
        %v2061 = vunpack.c.l.b16 %v2041
        %v2062 = vpack.c.b16 %v2055, %v2054
        %v2063 = vpack.c.b16 %v2057, %v2056
        %v2064 = vpack.c.b16 %v2059, %v2058
        %v2065 = vpack.c.b16 %v2061, %v2060
        %v2071 = vsel %vm203, %v2042, 0
        %v2074 = vsel %vm203, %v2043, 0
        %v2077 = vsel %vm203, %v2044, 0
        %v2080 = vsel %vm203, %v2045, 0
        %2082 = vmatpush.bf16.msra.mxu0 0
        %2083 = vmatpush.bf16.msra.mxu0 0
        %2084 = vmatpush.bf16.msra.mxu0 0
        %2085 = vmatpush.bf16.msra.mxu0 0
        %2086 = vmatpush.bf16.msra.mxu0 %v2065
        %2087 = vmatpush.bf16.msra.mxu0 %v2064
        %2088 = vmatpush.bf16.msra.mxu0 %v2063
        %2089 = vmatpush.bf16.msra.mxu0 %v2062
        %2090 = vmatmul.bf16.gmra.mxu0 %v2071
        %v2091 = vpop.f32.mrf.mxu0
        %v2092 = vadd.f32 0.0, %v2091
        %v2093 = vpop.f32.mrf.mxu0
        %v2094 = vadd.f32 0.0, %v2093
        %2095 = vmatmul.bf16.gmra.mxu0 %v2074
        %v2096 = vpop.f32.mrf.mxu0
        %v2097 = vadd.f32 0.0, %v2096
        %v2098 = vpop.f32.mrf.mxu0
        %v2099 = vadd.f32 0.0, %v2098
        %2100 = vmatmul.bf16.gmra.mxu0 %v2077
        %v2101 = vpop.f32.mrf.mxu0
        %v2102 = vadd.f32 0.0, %v2101
        %v2103 = vpop.f32.mrf.mxu0
        %v2104 = vadd.f32 0.0, %v2103
        %2105 = vmatmul.bf16.gmra.mxu0 %v2080
        %v2106 = vpop.f32.mrf.mxu0
        %v2107 = vadd.f32 0.0, %v2106
        %v2108 = vpop.f32.mrf.mxu0
        %v2109 = vadd.f32 0.0, %v2108
        %2110 = vdwg.mxu0
        %v2111 = vadd.f32 %v2017, %v2092
        %v2112 = vadd.f32 %v2018, %v2094
        %v2113 = vadd.f32 %v2019, %v2097
        %v2114 = vadd.f32 %v2020, %v2099
        %v2115 = vadd.f32 %v2021, %v2102
        %v2116 = vadd.f32 %v2022, %v2104
        %v2117 = vadd.f32 %v2023, %v2107
        %v2118 = vadd.f32 %v2024, %v2109
        %v2119 = vld [vmem:[%s790 + $0x8] sm:$0xff]
        %v2120 = vld [vmem:[%s790 + $0x20] sm:$0xff]
        %v2121 = vld [vmem:[%s790 + $0x38] sm:$0xff]
        %v2122 = vld [vmem:[%s790 + $0x50] sm:$0xff]
        %v2123 = vld [vmem:[%s790 + $0x68] sm:$0xff]
        %v2124 = vld [vmem:[%s790 + $0x80] sm:$0xff]
        %v2125 = vld [vmem:[%s790 + $0x98] sm:$0xff]
        %v2126 = vld [vmem:[%s790 + $0xb0] sm:$0xff]
        %s2127 = scalar_lea.vmem %s2, 416
        %v2128 = vld [vmem:[%s2127] sm:$0xf]
        %v2129 = vld [vmem:[%s2127 + $0x4] sm:$0xf]
        %v2130 = vld [vmem:[%s2127 + $0x8] sm:$0xf]
        %v2131 = vld [vmem:[%s2127 + $0xc] sm:$0xf]
        %v2132 = vld [vmem:[%s2127 + $0x10] sm:$0xf]
        %v2133 = vld [vmem:[%s2127 + $0x14] sm:$0xf]
        %v2134 = vld [vmem:[%s2127 + $0x18] sm:$0xf]
        %v2135 = vld [vmem:[%s2127 + $0x1c] sm:$0xf]
        %v2136 = vpack.c.bf16 %v2120, %v2119
        %v2137 = vpack.c.bf16 %v2122, %v2121
        %v2138 = vpack.c.bf16 %v2124, %v2123
        %v2139 = vpack.c.bf16 %v2126, %v2125
        %v2148 = vunpack.c.l.b16 %v2128
        %v2149 = vunpack.c.l.b16 %v2129
        %v2150 = vunpack.c.l.b16 %v2130
        %v2151 = vunpack.c.l.b16 %v2131
        %v2152 = vunpack.c.l.b16 %v2132
        %v2153 = vunpack.c.l.b16 %v2133
        %v2154 = vunpack.c.l.b16 %v2134
        %v2155 = vunpack.c.l.b16 %v2135
        %v2156 = vpack.c.b16 %v2149, %v2148
        %v2157 = vpack.c.b16 %v2151, %v2150
        %v2158 = vpack.c.b16 %v2153, %v2152
        %v2159 = vpack.c.b16 %v2155, %v2154
        %v2165 = vsel %vm203, %v2136, 0
        %v2168 = vsel %vm203, %v2137, 0
        %v2171 = vsel %vm203, %v2138, 0
        %v2174 = vsel %vm203, %v2139, 0
        %2176 = vmatpush.bf16.msra.mxu0 0
        %2177 = vmatpush.bf16.msra.mxu0 0
        %2178 = vmatpush.bf16.msra.mxu0 0
        %2179 = vmatpush.bf16.msra.mxu0 0
        %2180 = vmatpush.bf16.msra.mxu0 %v2159
        %2181 = vmatpush.bf16.msra.mxu0 %v2158
        %2182 = vmatpush.bf16.msra.mxu0 %v2157
        %2183 = vmatpush.bf16.msra.mxu0 %v2156
        %2184 = vmatmul.bf16.gmra.mxu0 %v2165
        %v2185 = vpop.f32.mrf.mxu0
        %v2186 = vadd.f32 0.0, %v2185
        %v2187 = vpop.f32.mrf.mxu0
        %v2188 = vadd.f32 0.0, %v2187
        %2189 = vmatmul.bf16.gmra.mxu0 %v2168
        %v2190 = vpop.f32.mrf.mxu0
        %v2191 = vadd.f32 0.0, %v2190
        %v2192 = vpop.f32.mrf.mxu0
        %v2193 = vadd.f32 0.0, %v2192
        %2194 = vmatmul.bf16.gmra.mxu0 %v2171
        %v2195 = vpop.f32.mrf.mxu0
        %v2196 = vadd.f32 0.0, %v2195
        %v2197 = vpop.f32.mrf.mxu0
        %v2198 = vadd.f32 0.0, %v2197
        %2199 = vmatmul.bf16.gmra.mxu0 %v2174
        %v2200 = vpop.f32.mrf.mxu0
        %v2201 = vadd.f32 0.0, %v2200
        %v2202 = vpop.f32.mrf.mxu0
        %v2203 = vadd.f32 0.0, %v2202
        %2204 = vdwg.mxu0
        %v2205 = vadd.f32 %v2111, %v2186
        %v2206 = vadd.f32 %v2112, %v2188
        %v2207 = vadd.f32 %v2113, %v2191
        %v2208 = vadd.f32 %v2114, %v2193
        %v2209 = vadd.f32 %v2115, %v2196
        %v2210 = vadd.f32 %v2116, %v2198
        %v2211 = vadd.f32 %v2117, %v2201
        %v2212 = vadd.f32 %v2118, %v2203
        %v2213 = vld [vmem:[%s790 + $0x9] sm:$0xff]
        %v2214 = vld [vmem:[%s790 + $0x21] sm:$0xff]
        %v2215 = vld [vmem:[%s790 + $0x39] sm:$0xff]
        %v2216 = vld [vmem:[%s790 + $0x51] sm:$0xff]
        %v2217 = vld [vmem:[%s790 + $0x69] sm:$0xff]
        %v2218 = vld [vmem:[%s790 + $0x81] sm:$0xff]
        %v2219 = vld [vmem:[%s790 + $0x99] sm:$0xff]
        %v2220 = vld [vmem:[%s790 + $0xb1] sm:$0xff]
        %s2221 = scalar_lea.vmem %s2, 448
        %v2222 = vld [vmem:[%s2221] sm:$0xf]
        %v2223 = vld [vmem:[%s2221 + $0x4] sm:$0xf]
        %v2224 = vld [vmem:[%s2221 + $0x8] sm:$0xf]
        %v2225 = vld [vmem:[%s2221 + $0xc] sm:$0xf]
        %v2226 = vld [vmem:[%s2221 + $0x10] sm:$0xf]
        %v2227 = vld [vmem:[%s2221 + $0x14] sm:$0xf]
        %v2228 = vld [vmem:[%s2221 + $0x18] sm:$0xf]
        %v2229 = vld [vmem:[%s2221 + $0x1c] sm:$0xf]
        %v2230 = vpack.c.bf16 %v2214, %v2213
        %v2231 = vpack.c.bf16 %v2216, %v2215
        %v2232 = vpack.c.bf16 %v2218, %v2217
        %v2233 = vpack.c.bf16 %v2220, %v2219
        %v2242 = vunpack.c.l.b16 %v2222
        %v2243 = vunpack.c.l.b16 %v2223
        %v2244 = vunpack.c.l.b16 %v2224
        %v2245 = vunpack.c.l.b16 %v2225
        %v2246 = vunpack.c.l.b16 %v2226
        %v2247 = vunpack.c.l.b16 %v2227
        %v2248 = vunpack.c.l.b16 %v2228
        %v2249 = vunpack.c.l.b16 %v2229
        %v2250 = vpack.c.b16 %v2243, %v2242
        %v2251 = vpack.c.b16 %v2245, %v2244
        %v2252 = vpack.c.b16 %v2247, %v2246
        %v2253 = vpack.c.b16 %v2249, %v2248
        %v2259 = vsel %vm203, %v2230, 0
        %v2262 = vsel %vm203, %v2231, 0
        %v2265 = vsel %vm203, %v2232, 0
        %v2268 = vsel %vm203, %v2233, 0
        %2270 = vmatpush.bf16.msra.mxu0 0
        %2271 = vmatpush.bf16.msra.mxu0 0
        %2272 = vmatpush.bf16.msra.mxu0 0
        %2273 = vmatpush.bf16.msra.mxu0 0
        %2274 = vmatpush.bf16.msra.mxu0 %v2253
        %2275 = vmatpush.bf16.msra.mxu0 %v2252
        %2276 = vmatpush.bf16.msra.mxu0 %v2251
        %2277 = vmatpush.bf16.msra.mxu0 %v2250
        %2278 = vmatmul.bf16.gmra.mxu0 %v2259
        %v2279 = vpop.f32.mrf.mxu0
        %v2280 = vadd.f32 0.0, %v2279
        %v2281 = vpop.f32.mrf.mxu0
        %v2282 = vadd.f32 0.0, %v2281
        %2283 = vmatmul.bf16.gmra.mxu0 %v2262
        %v2284 = vpop.f32.mrf.mxu0
        %v2285 = vadd.f32 0.0, %v2284
        %v2286 = vpop.f32.mrf.mxu0
        %v2287 = vadd.f32 0.0, %v2286
        %2288 = vmatmul.bf16.gmra.mxu0 %v2265
        %v2289 = vpop.f32.mrf.mxu0
        %v2290 = vadd.f32 0.0, %v2289
        %v2291 = vpop.f32.mrf.mxu0
        %v2292 = vadd.f32 0.0, %v2291
        %2293 = vmatmul.bf16.gmra.mxu0 %v2268
        %v2294 = vpop.f32.mrf.mxu0
        %v2295 = vadd.f32 0.0, %v2294
        %v2296 = vpop.f32.mrf.mxu0
        %v2297 = vadd.f32 0.0, %v2296
        %2298 = vdwg.mxu0
        %v2299 = vadd.f32 %v2205, %v2280
        %v2300 = vadd.f32 %v2206, %v2282
        %v2301 = vadd.f32 %v2207, %v2285
        %v2302 = vadd.f32 %v2208, %v2287
        %v2303 = vadd.f32 %v2209, %v2290
        %v2304 = vadd.f32 %v2210, %v2292
        %v2305 = vadd.f32 %v2211, %v2295
        %v2306 = vadd.f32 %v2212, %v2297
        %v2307 = vld [vmem:[%s1450 + $0x7] sm:$0xff]
        %v2308 = vld [vmem:[%s1450 + $0x1f] sm:$0xff]
        %v2309 = vld [vmem:[%s1450 + $0x37] sm:$0xff]
        %v2310 = vld [vmem:[%s1450 + $0x4f] sm:$0xff]
        %v2311 = vld [vmem:[%s1450 + $0x67] sm:$0xff]
        %v2312 = vld [vmem:[%s1450 + $0x7f] sm:$0xff]
        %v2313 = vld [vmem:[%s1450 + $0x97] sm:$0xff]
        %v2314 = vld [vmem:[%s1450 + $0xaf] sm:$0xff]
        %s2315 = scalar_lea.vmem %s2, 480
        %v2316 = vld [vmem:[%s2315] sm:$0xf]
        %v2317 = vld [vmem:[%s2315 + $0x4] sm:$0xf]
        %v2318 = vld [vmem:[%s2315 + $0x8] sm:$0xf]
        %v2319 = vld [vmem:[%s2315 + $0xc] sm:$0xf]
        %v2320 = vld [vmem:[%s2315 + $0x10] sm:$0xf]
        %v2321 = vld [vmem:[%s2315 + $0x14] sm:$0xf]
        %v2322 = vld [vmem:[%s2315 + $0x18] sm:$0xf]
        %v2323 = vld [vmem:[%s2315 + $0x1c] sm:$0xf]
        %v2324 = vpack.c.bf16 %v2308, %v2307
        %v2325 = vpack.c.bf16 %v2310, %v2309
        %v2326 = vpack.c.bf16 %v2312, %v2311
        %v2327 = vpack.c.bf16 %v2314, %v2313
        %v2336 = vunpack.c.l.b16 %v2316
        %v2337 = vunpack.c.l.b16 %v2317
        %v2338 = vunpack.c.l.b16 %v2318
        %v2339 = vunpack.c.l.b16 %v2319
        %v2340 = vunpack.c.l.b16 %v2320
        %v2341 = vunpack.c.l.b16 %v2321
        %v2342 = vunpack.c.l.b16 %v2322
        %v2343 = vunpack.c.l.b16 %v2323
        %v2344 = vpack.c.b16 %v2337, %v2336
        %v2345 = vpack.c.b16 %v2339, %v2338
        %v2346 = vpack.c.b16 %v2341, %v2340
        %v2347 = vpack.c.b16 %v2343, %v2342
        %v2353 = vsel %vm203, %v2324, 0
        %v2356 = vsel %vm203, %v2325, 0
        %v2359 = vsel %vm203, %v2326, 0
        %v2362 = vsel %vm203, %v2327, 0
        %2364 = vmatpush.bf16.msra.mxu0 0
        %2365 = vmatpush.bf16.msra.mxu0 0
        %2366 = vmatpush.bf16.msra.mxu0 0
        %2367 = vmatpush.bf16.msra.mxu0 0
        %2368 = vmatpush.bf16.msra.mxu0 %v2347
        %2369 = vmatpush.bf16.msra.mxu0 %v2346
        %2370 = vmatpush.bf16.msra.mxu0 %v2345
        %2371 = vmatpush.bf16.msra.mxu0 %v2344
        %2372 = vmatmul.bf16.gmra.mxu0 %v2353
        %v2373 = vpop.f32.mrf.mxu0
        %v2374 = vadd.f32 0.0, %v2373
        %v2375 = vpop.f32.mrf.mxu0
        %v2376 = vadd.f32 0.0, %v2375
        %2377 = vmatmul.bf16.gmra.mxu0 %v2356
        %v2378 = vpop.f32.mrf.mxu0
        %v2379 = vadd.f32 0.0, %v2378
        %v2380 = vpop.f32.mrf.mxu0
        %v2381 = vadd.f32 0.0, %v2380
        %2382 = vmatmul.bf16.gmra.mxu0 %v2359
        %v2383 = vpop.f32.mrf.mxu0
        %v2384 = vadd.f32 0.0, %v2383
        %v2385 = vpop.f32.mrf.mxu0
        %v2386 = vadd.f32 0.0, %v2385
        %2387 = vmatmul.bf16.gmra.mxu0 %v2362
        %v2388 = vpop.f32.mrf.mxu0
        %v2389 = vadd.f32 0.0, %v2388
        %v2390 = vpop.f32.mrf.mxu0
        %v2391 = vadd.f32 0.0, %v2390
        %2392 = vdwg.mxu0
        %v2393 = vadd.f32 %v2299, %v2374
        %v2394 = vadd.f32 %v2300, %v2376
        %v2395 = vadd.f32 %v2301, %v2379
        %v2396 = vadd.f32 %v2302, %v2381
        %v2397 = vadd.f32 %v2303, %v2384
        %v2398 = vadd.f32 %v2304, %v2386
        %v2399 = vadd.f32 %v2305, %v2389
        %v2400 = vadd.f32 %v2306, %v2391
        %v2401 = vld [vmem:[%s1450 + $0x8] sm:$0xff]
        %v2402 = vld [vmem:[%s1450 + $0x20] sm:$0xff]
        %v2403 = vld [vmem:[%s1450 + $0x38] sm:$0xff]
        %v2404 = vld [vmem:[%s1450 + $0x50] sm:$0xff]
        %v2405 = vld [vmem:[%s1450 + $0x68] sm:$0xff]
        %v2406 = vld [vmem:[%s1450 + $0x80] sm:$0xff]
        %v2407 = vld [vmem:[%s1450 + $0x98] sm:$0xff]
        %v2408 = vld [vmem:[%s1450 + $0xb0] sm:$0xff]
        %s2409 = scalar_lea.vmem %s2, 512
        %v2410 = vld [vmem:[%s2409] sm:$0xf]
        %v2411 = vld [vmem:[%s2409 + $0x4] sm:$0xf]
        %v2412 = vld [vmem:[%s2409 + $0x8] sm:$0xf]
        %v2413 = vld [vmem:[%s2409 + $0xc] sm:$0xf]
        %v2414 = vld [vmem:[%s2409 + $0x10] sm:$0xf]
        %v2415 = vld [vmem:[%s2409 + $0x14] sm:$0xf]
        %v2416 = vld [vmem:[%s2409 + $0x18] sm:$0xf]
        %v2417 = vld [vmem:[%s2409 + $0x1c] sm:$0xf]
        %v2418 = vpack.c.bf16 %v2402, %v2401
        %v2419 = vpack.c.bf16 %v2404, %v2403
        %v2420 = vpack.c.bf16 %v2406, %v2405
        %v2421 = vpack.c.bf16 %v2408, %v2407
        %v2430 = vunpack.c.l.b16 %v2410
        %v2431 = vunpack.c.l.b16 %v2411
        %v2432 = vunpack.c.l.b16 %v2412
        %v2433 = vunpack.c.l.b16 %v2413
        %v2434 = vunpack.c.l.b16 %v2414
        %v2435 = vunpack.c.l.b16 %v2415
        %v2436 = vunpack.c.l.b16 %v2416
        %v2437 = vunpack.c.l.b16 %v2417
        %v2438 = vpack.c.b16 %v2431, %v2430
        %v2439 = vpack.c.b16 %v2433, %v2432
        %v2440 = vpack.c.b16 %v2435, %v2434
        %v2441 = vpack.c.b16 %v2437, %v2436
        %v2447 = vsel %vm203, %v2418, 0
        %v2450 = vsel %vm203, %v2419, 0
        %v2453 = vsel %vm203, %v2420, 0
        %v2456 = vsel %vm203, %v2421, 0
        %2458 = vmatpush.bf16.msra.mxu0 0
        %2459 = vmatpush.bf16.msra.mxu0 0
        %2460 = vmatpush.bf16.msra.mxu0 0
        %2461 = vmatpush.bf16.msra.mxu0 0
        %2462 = vmatpush.bf16.msra.mxu0 %v2441
        %2463 = vmatpush.bf16.msra.mxu0 %v2440
        %2464 = vmatpush.bf16.msra.mxu0 %v2439
        %2465 = vmatpush.bf16.msra.mxu0 %v2438
        %2466 = vmatmul.bf16.gmra.mxu0 %v2447
        %v2467 = vpop.f32.mrf.mxu0
        %v2468 = vadd.f32 0.0, %v2467
        %v2469 = vpop.f32.mrf.mxu0
        %v2470 = vadd.f32 0.0, %v2469
        %2471 = vmatmul.bf16.gmra.mxu0 %v2450
        %v2472 = vpop.f32.mrf.mxu0
        %v2473 = vadd.f32 0.0, %v2472
        %v2474 = vpop.f32.mrf.mxu0
        %v2475 = vadd.f32 0.0, %v2474
        %2476 = vmatmul.bf16.gmra.mxu0 %v2453
        %v2477 = vpop.f32.mrf.mxu0
        %v2478 = vadd.f32 0.0, %v2477
        %v2479 = vpop.f32.mrf.mxu0
        %v2480 = vadd.f32 0.0, %v2479
        %2481 = vmatmul.bf16.gmra.mxu0 %v2456
        %v2482 = vpop.f32.mrf.mxu0
        %v2483 = vadd.f32 0.0, %v2482
        %v2484 = vpop.f32.mrf.mxu0
        %v2485 = vadd.f32 0.0, %v2484
        %2486 = vdwg.mxu0
        %v2487 = vadd.f32 %v2393, %v2468
        %v2488 = vadd.f32 %v2394, %v2470
        %v2489 = vadd.f32 %v2395, %v2473
        %v2490 = vadd.f32 %v2396, %v2475
        %v2491 = vadd.f32 %v2397, %v2478
        %v2492 = vadd.f32 %v2398, %v2480
        %v2493 = vadd.f32 %v2399, %v2483
        %v2494 = vadd.f32 %v2400, %v2485
        %v2495 = vld [vmem:[%s1450 + $0x9] sm:$0xff]
        %v2496 = vld [vmem:[%s1450 + $0x21] sm:$0xff]
        %v2497 = vld [vmem:[%s1450 + $0x39] sm:$0xff]
        %v2498 = vld [vmem:[%s1450 + $0x51] sm:$0xff]
        %v2499 = vld [vmem:[%s1450 + $0x69] sm:$0xff]
        %v2500 = vld [vmem:[%s1450 + $0x81] sm:$0xff]
        %v2501 = vld [vmem:[%s1450 + $0x99] sm:$0xff]
        %v2502 = vld [vmem:[%s1450 + $0xb1] sm:$0xff]
        %s2503 = scalar_lea.vmem %s2, 544
        %v2504 = vld [vmem:[%s2503] sm:$0xf]
        %v2505 = vld [vmem:[%s2503 + $0x4] sm:$0xf]
        %v2506 = vld [vmem:[%s2503 + $0x8] sm:$0xf]
        %v2507 = vld [vmem:[%s2503 + $0xc] sm:$0xf]
        %v2508 = vld [vmem:[%s2503 + $0x10] sm:$0xf]
        %v2509 = vld [vmem:[%s2503 + $0x14] sm:$0xf]
        %v2510 = vld [vmem:[%s2503 + $0x18] sm:$0xf]
        %v2511 = vld [vmem:[%s2503 + $0x1c] sm:$0xf]
        %v2512 = vpack.c.bf16 %v2496, %v2495
        %v2513 = vpack.c.bf16 %v2498, %v2497
        %v2514 = vpack.c.bf16 %v2500, %v2499
        %v2515 = vpack.c.bf16 %v2502, %v2501
        %v2524 = vunpack.c.l.b16 %v2504
        %v2525 = vunpack.c.l.b16 %v2505
        %v2526 = vunpack.c.l.b16 %v2506
        %v2527 = vunpack.c.l.b16 %v2507
        %v2528 = vunpack.c.l.b16 %v2508
        %v2529 = vunpack.c.l.b16 %v2509
        %v2530 = vunpack.c.l.b16 %v2510
        %v2531 = vunpack.c.l.b16 %v2511
        %v2532 = vpack.c.b16 %v2525, %v2524
        %v2533 = vpack.c.b16 %v2527, %v2526
        %v2534 = vpack.c.b16 %v2529, %v2528
        %v2535 = vpack.c.b16 %v2531, %v2530
        %v2541 = vsel %vm203, %v2512, 0
        %v2544 = vsel %vm203, %v2513, 0
        %v2547 = vsel %vm203, %v2514, 0
        %v2550 = vsel %vm203, %v2515, 0
        %2552 = vmatpush.bf16.msra.mxu0 0
        %2553 = vmatpush.bf16.msra.mxu0 0
        %2554 = vmatpush.bf16.msra.mxu0 0
        %2555 = vmatpush.bf16.msra.mxu0 0
        %2556 = vmatpush.bf16.msra.mxu0 %v2535
        %2557 = vmatpush.bf16.msra.mxu0 %v2534
        %2558 = vmatpush.bf16.msra.mxu0 %v2533
        %2559 = vmatpush.bf16.msra.mxu0 %v2532
        %2560 = vmatmul.bf16.gmra.mxu0 %v2541
        %v2561 = vpop.f32.mrf.mxu0
        %v2562 = vadd.f32 0.0, %v2561
        %v2563 = vpop.f32.mrf.mxu0
        %v2564 = vadd.f32 0.0, %v2563
        %2565 = vmatmul.bf16.gmra.mxu0 %v2544
        %v2566 = vpop.f32.mrf.mxu0
        %v2567 = vadd.f32 0.0, %v2566
        %v2568 = vpop.f32.mrf.mxu0
        %v2569 = vadd.f32 0.0, %v2568
        %2570 = vmatmul.bf16.gmra.mxu0 %v2547
        %v2571 = vpop.f32.mrf.mxu0
        %v2572 = vadd.f32 0.0, %v2571
        %v2573 = vpop.f32.mrf.mxu0
        %v2574 = vadd.f32 0.0, %v2573
        %2575 = vmatmul.bf16.gmra.mxu0 %v2550
        %v2576 = vpop.f32.mrf.mxu0
        %v2577 = vadd.f32 0.0, %v2576
        %v2578 = vpop.f32.mrf.mxu0
        %v2579 = vadd.f32 0.0, %v2578
        %2580 = vdwg.mxu0
        %v2581 = vadd.f32 %v2487, %v2562
        %v2582 = vadd.f32 %v2488, %v2564
        %v2583 = vadd.f32 %v2489, %v2567
        %v2584 = vadd.f32 %v2490, %v2569
        %v2585 = vadd.f32 %v2491, %v2572
        %v2586 = vadd.f32 %v2492, %v2574
        %v2587 = vadd.f32 %v2493, %v2577
        %v2588 = vadd.f32 %v2494, %v2579
        %v2589 = vld [vmem:[%s3 + $0x2] sm:$0x1]
        %v2590 = vperm.slane %v2589, 0
        %v2591 = vadd.f32 %v2581, %v2590
        %v2592 = vadd.f32 %v2582, %v2590
        %v2593 = vadd.f32 %v2583, %v2590
        %v2594 = vadd.f32 %v2584, %v2590
        %v2595 = vadd.f32 %v2585, %v2590
        %v2596 = vadd.f32 %v2586, %v2590
        %v2597 = vadd.f32 %v2587, %v2590
        %v2598 = vadd.f32 %v2588, %v2590
        %v2599 = vadd.f32 %v2591, %v887
        %v2600 = vadd.f32 %v2592, %v888
        %v2601 = vadd.f32 %v2593, %v889
        %v2602 = vadd.f32 %v2594, %v890
        %v2603 = vadd.f32 %v2595, %v891
        %v2604 = vadd.f32 %v2596, %v892
        %v2605 = vadd.f32 %v2597, %v893
        %v2606 = vadd.f32 %v2598, %v894
        %v2607 = vmax.f32 %v2599, 0.0
        %v2608 = vmax.f32 %v2600, 0.0
        %v2609 = vmax.f32 %v2601, 0.0
        %v2610 = vmax.f32 %v2602, 0.0
        %v2611 = vmax.f32 %v2603, 0.0
        %v2612 = vmax.f32 %v2604, 0.0
        %v2613 = vmax.f32 %v2605, 0.0
        %v2614 = vmax.f32 %v2606, 0.0
        %2615 = vst.msk [vmem:[%s790 + $0x8] sm:$0xff] %vm203, %v2607
        %2616 = vst.msk [vmem:[%s790 + $0x20] sm:$0xff] %vm203, %v2608
        %2617 = vst.msk [vmem:[%s790 + $0x38] sm:$0xff] %vm203, %v2609
        %2618 = vst.msk [vmem:[%s790 + $0x50] sm:$0xff] %vm203, %v2610
        %2619 = vst.msk [vmem:[%s790 + $0x68] sm:$0xff] %vm203, %v2611
        %2620 = vst.msk [vmem:[%s790 + $0x80] sm:$0xff] %vm203, %v2612
        %2621 = vst.msk [vmem:[%s790 + $0x98] sm:$0xff] %vm203, %v2613
        %2622 = vst.msk [vmem:[%s790 + $0xb0] sm:$0xff] %vm203, %v2614
        %v2623 = vld [vmem:[#allocation2 + $0x7] sm:$0xff]
        %v2624 = vld [vmem:[#allocation2 + $0x1f] sm:$0xff]
        %v2625 = vld [vmem:[#allocation2 + $0x37] sm:$0xff]
        %v2626 = vld [vmem:[#allocation2 + $0x4f] sm:$0xff]
        %v2627 = vld [vmem:[#allocation2 + $0x67] sm:$0xff]
        %v2628 = vld [vmem:[#allocation2 + $0x7f] sm:$0xff]
        %v2629 = vld [vmem:[#allocation2 + $0x97] sm:$0xff]
        %v2630 = vld [vmem:[#allocation2 + $0xaf] sm:$0xff]
        %s2631 = scalar_lea.vmem %s2, 576
        %v2632 = vld [vmem:[%s2631] sm:$0xf]
        %v2633 = vld [vmem:[%s2631 + $0x4] sm:$0xf]
        %v2634 = vld [vmem:[%s2631 + $0x8] sm:$0xf]
        %v2635 = vld [vmem:[%s2631 + $0xc] sm:$0xf]
        %v2636 = vld [vmem:[%s2631 + $0x10] sm:$0xf]
        %v2637 = vld [vmem:[%s2631 + $0x14] sm:$0xf]
        %v2638 = vld [vmem:[%s2631 + $0x18] sm:$0xf]
        %v2639 = vld [vmem:[%s2631 + $0x1c] sm:$0xf]
        %v2640 = vpack.c.bf16 %v2624, %v2623
        %v2641 = vpack.c.bf16 %v2626, %v2625
        %v2642 = vpack.c.bf16 %v2628, %v2627
        %v2643 = vpack.c.bf16 %v2630, %v2629
        %v2644 = vld [vmem:[#allocation2 + $0x8] sm:$0xff]
        %v2645 = vld [vmem:[#allocation2 + $0x20] sm:$0xff]
        %v2646 = vld [vmem:[#allocation2 + $0x38] sm:$0xff]
        %v2647 = vld [vmem:[#allocation2 + $0x50] sm:$0xff]
        %v2648 = vld [vmem:[#allocation2 + $0x68] sm:$0xff]
        %v2649 = vld [vmem:[#allocation2 + $0x80] sm:$0xff]
        %v2650 = vld [vmem:[#allocation2 + $0x98] sm:$0xff]
        %v2651 = vld [vmem:[#allocation2 + $0xb0] sm:$0xff]
        %s2652 = scalar_lea.vmem %s2, 608
        %v2653 = vld [vmem:[%s2652] sm:$0xf]
        %v2654 = vld [vmem:[%s2652 + $0x4] sm:$0xf]
        %v2655 = vld [vmem:[%s2652 + $0x8] sm:$0xf]
        %v2656 = vld [vmem:[%s2652 + $0xc] sm:$0xf]
        %v2657 = vld [vmem:[%s2652 + $0x10] sm:$0xf]
        %v2658 = vld [vmem:[%s2652 + $0x14] sm:$0xf]
        %v2659 = vld [vmem:[%s2652 + $0x18] sm:$0xf]
        %v2660 = vld [vmem:[%s2652 + $0x1c] sm:$0xf]
        %v2661 = vpack.c.bf16 %v2645, %v2644
        %v2662 = vpack.c.bf16 %v2647, %v2646
        %v2663 = vpack.c.bf16 %v2649, %v2648
        %v2664 = vpack.c.bf16 %v2651, %v2650
        %v2673 = vunpack.c.l.b16 %v2653
        %v2674 = vunpack.c.l.b16 %v2654
        %v2675 = vunpack.c.l.b16 %v2655
        %v2676 = vunpack.c.l.b16 %v2656
        %v2677 = vunpack.c.l.b16 %v2657
        %v2678 = vunpack.c.l.b16 %v2658
        %v2679 = vunpack.c.l.b16 %v2659
        %v2680 = vunpack.c.l.b16 %v2660
        %v2681 = vpack.c.b16 %v2674, %v2673
        %v2682 = vpack.c.b16 %v2676, %v2675
        %v2683 = vpack.c.b16 %v2678, %v2677
        %v2684 = vpack.c.b16 %v2680, %v2679
        %v2690 = vsel %vm203, %v2661, 0
        %v2693 = vsel %vm203, %v2662, 0
        %v2696 = vsel %vm203, %v2663, 0
        %v2699 = vsel %vm203, %v2664, 0
        %2701 = vmatpush.bf16.msra.mxu0 0
        %2702 = vmatpush.bf16.msra.mxu0 0
        %2703 = vmatpush.bf16.msra.mxu0 0
        %2704 = vmatpush.bf16.msra.mxu0 0
        %2705 = vmatpush.bf16.msra.mxu0 %v2684
        %2706 = vmatpush.bf16.msra.mxu0 %v2683
        %2707 = vmatpush.bf16.msra.mxu0 %v2682
        %2708 = vmatpush.bf16.msra.mxu0 %v2681
        %2709 = vmatmul.bf16.gmra.mxu0 %v2690
        %v2710 = vpop.f32.mrf.mxu0
        %v2711 = vadd.f32 0.0, %v2710
        %v2712 = vpop.f32.mrf.mxu0
        %v2713 = vadd.f32 0.0, %v2712
        %2714 = vmatmul.bf16.gmra.mxu0 %v2693
        %v2715 = vpop.f32.mrf.mxu0
        %v2716 = vadd.f32 0.0, %v2715
        %v2717 = vpop.f32.mrf.mxu0
        %v2718 = vadd.f32 0.0, %v2717
        %2719 = vmatmul.bf16.gmra.mxu0 %v2696
        %v2720 = vpop.f32.mrf.mxu0
        %v2721 = vadd.f32 0.0, %v2720
        %v2722 = vpop.f32.mrf.mxu0
        %v2723 = vadd.f32 0.0, %v2722
        %2724 = vmatmul.bf16.gmra.mxu0 %v2699
        %v2725 = vpop.f32.mrf.mxu0
        %v2726 = vadd.f32 0.0, %v2725
        %v2727 = vpop.f32.mrf.mxu0
        %v2728 = vadd.f32 0.0, %v2727
        %2729 = vdwg.mxu0
        %v2738 = vunpack.c.l.b16 %v2632
        %v2739 = vunpack.c.l.b16 %v2633
        %v2740 = vunpack.c.l.b16 %v2634
        %v2741 = vunpack.c.l.b16 %v2635
        %v2742 = vunpack.c.l.b16 %v2636
        %v2743 = vunpack.c.l.b16 %v2637
        %v2744 = vunpack.c.l.b16 %v2638
        %v2745 = vunpack.c.l.b16 %v2639
        %v2746 = vpack.c.b16 %v2739, %v2738
        %v2747 = vpack.c.b16 %v2741, %v2740
        %v2748 = vpack.c.b16 %v2743, %v2742
        %v2749 = vpack.c.b16 %v2745, %v2744
        %v2755 = vsel %vm203, %v2640, 0
        %v2758 = vsel %vm203, %v2641, 0
        %v2761 = vsel %vm203, %v2642, 0
        %v2764 = vsel %vm203, %v2643, 0
        %2766 = vmatpush.bf16.msra.mxu0 0
        %2767 = vmatpush.bf16.msra.mxu0 0
        %2768 = vmatpush.bf16.msra.mxu0 0
        %2769 = vmatpush.bf16.msra.mxu0 0
        %2770 = vmatpush.bf16.msra.mxu0 %v2749
        %2771 = vmatpush.bf16.msra.mxu0 %v2748
        %2772 = vmatpush.bf16.msra.mxu0 %v2747
        %2773 = vmatpush.bf16.msra.mxu0 %v2746
        %2774 = vmatmul.bf16.gmra.mxu0 %v2755
        %v2775 = vpop.f32.mrf.mxu0
        %v2776 = vadd.f32 %v2711, %v2775
        %v2777 = vpop.f32.mrf.mxu0
        %v2778 = vadd.f32 %v2713, %v2777
        %2779 = vmatmul.bf16.gmra.mxu0 %v2758
        %v2780 = vpop.f32.mrf.mxu0
        %v2781 = vadd.f32 %v2716, %v2780
        %v2782 = vpop.f32.mrf.mxu0
        %v2783 = vadd.f32 %v2718, %v2782
        %2784 = vmatmul.bf16.gmra.mxu0 %v2761
        %v2785 = vpop.f32.mrf.mxu0
        %v2786 = vadd.f32 %v2721, %v2785
        %v2787 = vpop.f32.mrf.mxu0
        %v2788 = vadd.f32 %v2723, %v2787
        %2789 = vmatmul.bf16.gmra.mxu0 %v2764
        %v2790 = vpop.f32.mrf.mxu0
        %v2791 = vadd.f32 %v2726, %v2790
        %v2792 = vpop.f32.mrf.mxu0
        %v2793 = vadd.f32 %v2728, %v2792
        %2794 = vdwg.mxu0
        %v2795 = vld [vmem:[#allocation2 + $0x9] sm:$0xff]
        %v2796 = vld [vmem:[#allocation2 + $0x21] sm:$0xff]
        %v2797 = vld [vmem:[#allocation2 + $0x39] sm:$0xff]
        %v2798 = vld [vmem:[#allocation2 + $0x51] sm:$0xff]
        %v2799 = vld [vmem:[#allocation2 + $0x69] sm:$0xff]
        %v2800 = vld [vmem:[#allocation2 + $0x81] sm:$0xff]
        %v2801 = vld [vmem:[#allocation2 + $0x99] sm:$0xff]
        %v2802 = vld [vmem:[#allocation2 + $0xb1] sm:$0xff]
        %s2803 = scalar_lea.vmem %s2, 640
        %v2804 = vld [vmem:[%s2803] sm:$0xf]
        %v2805 = vld [vmem:[%s2803 + $0x4] sm:$0xf]
        %v2806 = vld [vmem:[%s2803 + $0x8] sm:$0xf]
        %v2807 = vld [vmem:[%s2803 + $0xc] sm:$0xf]
        %v2808 = vld [vmem:[%s2803 + $0x10] sm:$0xf]
        %v2809 = vld [vmem:[%s2803 + $0x14] sm:$0xf]
        %v2810 = vld [vmem:[%s2803 + $0x18] sm:$0xf]
        %v2811 = vld [vmem:[%s2803 + $0x1c] sm:$0xf]
        %v2812 = vpack.c.bf16 %v2796, %v2795
        %v2813 = vpack.c.bf16 %v2798, %v2797
        %v2814 = vpack.c.bf16 %v2800, %v2799
        %v2815 = vpack.c.bf16 %v2802, %v2801
        %v2824 = vunpack.c.l.b16 %v2804
        %v2825 = vunpack.c.l.b16 %v2805
        %v2826 = vunpack.c.l.b16 %v2806
        %v2827 = vunpack.c.l.b16 %v2807
        %v2828 = vunpack.c.l.b16 %v2808
        %v2829 = vunpack.c.l.b16 %v2809
        %v2830 = vunpack.c.l.b16 %v2810
        %v2831 = vunpack.c.l.b16 %v2811
        %v2832 = vpack.c.b16 %v2825, %v2824
        %v2833 = vpack.c.b16 %v2827, %v2826
        %v2834 = vpack.c.b16 %v2829, %v2828
        %v2835 = vpack.c.b16 %v2831, %v2830
        %v2841 = vsel %vm203, %v2812, 0
        %v2844 = vsel %vm203, %v2813, 0
        %v2847 = vsel %vm203, %v2814, 0
        %v2850 = vsel %vm203, %v2815, 0
        %2852 = vmatpush.bf16.msra.mxu0 0
        %2853 = vmatpush.bf16.msra.mxu0 0
        %2854 = vmatpush.bf16.msra.mxu0 0
        %2855 = vmatpush.bf16.msra.mxu0 0
        %2856 = vmatpush.bf16.msra.mxu0 %v2835
        %2857 = vmatpush.bf16.msra.mxu0 %v2834
        %2858 = vmatpush.bf16.msra.mxu0 %v2833
        %2859 = vmatpush.bf16.msra.mxu0 %v2832
        %2860 = vmatmul.bf16.gmra.mxu0 %v2841
        %v2861 = vpop.f32.mrf.mxu0
        %v2862 = vadd.f32 0.0, %v2861
        %v2863 = vpop.f32.mrf.mxu0
        %v2864 = vadd.f32 0.0, %v2863
        %2865 = vmatmul.bf16.gmra.mxu0 %v2844
        %v2866 = vpop.f32.mrf.mxu0
        %v2867 = vadd.f32 0.0, %v2866
        %v2868 = vpop.f32.mrf.mxu0
        %v2869 = vadd.f32 0.0, %v2868
        %2870 = vmatmul.bf16.gmra.mxu0 %v2847
        %v2871 = vpop.f32.mrf.mxu0
        %v2872 = vadd.f32 0.0, %v2871
        %v2873 = vpop.f32.mrf.mxu0
        %v2874 = vadd.f32 0.0, %v2873
        %2875 = vmatmul.bf16.gmra.mxu0 %v2850
        %v2876 = vpop.f32.mrf.mxu0
        %v2877 = vadd.f32 0.0, %v2876
        %v2878 = vpop.f32.mrf.mxu0
        %v2879 = vadd.f32 0.0, %v2878
        %2880 = vdwg.mxu0
        %v2881 = vadd.f32 %v2776, %v2862
        %v2882 = vadd.f32 %v2778, %v2864
        %v2883 = vadd.f32 %v2781, %v2867
        %v2884 = vadd.f32 %v2783, %v2869
        %v2885 = vadd.f32 %v2786, %v2872
        %v2886 = vadd.f32 %v2788, %v2874
        %v2887 = vadd.f32 %v2791, %v2877
        %v2888 = vadd.f32 %v2793, %v2879
        %v2889 = vld [vmem:[%s790 + $0x7] sm:$0xff]
        %v2890 = vld [vmem:[%s790 + $0x1f] sm:$0xff]
        %v2891 = vld [vmem:[%s790 + $0x37] sm:$0xff]
        %v2892 = vld [vmem:[%s790 + $0x4f] sm:$0xff]
        %v2893 = vld [vmem:[%s790 + $0x67] sm:$0xff]
        %v2894 = vld [vmem:[%s790 + $0x7f] sm:$0xff]
        %v2895 = vld [vmem:[%s790 + $0x97] sm:$0xff]
        %v2896 = vld [vmem:[%s790 + $0xaf] sm:$0xff]
        %s2897 = scalar_lea.vmem %s2, 672
        %v2898 = vld [vmem:[%s2897] sm:$0xf]
        %v2899 = vld [vmem:[%s2897 + $0x4] sm:$0xf]
        %v2900 = vld [vmem:[%s2897 + $0x8] sm:$0xf]
        %v2901 = vld [vmem:[%s2897 + $0xc] sm:$0xf]
        %v2902 = vld [vmem:[%s2897 + $0x10] sm:$0xf]
        %v2903 = vld [vmem:[%s2897 + $0x14] sm:$0xf]
        %v2904 = vld [vmem:[%s2897 + $0x18] sm:$0xf]
        %v2905 = vld [vmem:[%s2897 + $0x1c] sm:$0xf]
        %v2906 = vpack.c.bf16 %v2890, %v2889
        %v2907 = vpack.c.bf16 %v2892, %v2891
        %v2908 = vpack.c.bf16 %v2894, %v2893
        %v2909 = vpack.c.bf16 %v2896, %v2895
        %v2918 = vunpack.c.l.b16 %v2898
        %v2919 = vunpack.c.l.b16 %v2899
        %v2920 = vunpack.c.l.b16 %v2900
        %v2921 = vunpack.c.l.b16 %v2901
        %v2922 = vunpack.c.l.b16 %v2902
        %v2923 = vunpack.c.l.b16 %v2903
        %v2924 = vunpack.c.l.b16 %v2904
        %v2925 = vunpack.c.l.b16 %v2905
        %v2926 = vpack.c.b16 %v2919, %v2918
        %v2927 = vpack.c.b16 %v2921, %v2920
        %v2928 = vpack.c.b16 %v2923, %v2922
        %v2929 = vpack.c.b16 %v2925, %v2924
        %v2935 = vsel %vm203, %v2906, 0
        %v2938 = vsel %vm203, %v2907, 0
        %v2941 = vsel %vm203, %v2908, 0
        %v2944 = vsel %vm203, %v2909, 0
        %2946 = vmatpush.bf16.msra.mxu0 0
        %2947 = vmatpush.bf16.msra.mxu0 0
        %2948 = vmatpush.bf16.msra.mxu0 0
        %2949 = vmatpush.bf16.msra.mxu0 0
        %2950 = vmatpush.bf16.msra.mxu0 %v2929
        %2951 = vmatpush.bf16.msra.mxu0 %v2928
        %2952 = vmatpush.bf16.msra.mxu0 %v2927
        %2953 = vmatpush.bf16.msra.mxu0 %v2926
        %2954 = vmatmul.bf16.gmra.mxu0 %v2935
        %v2955 = vpop.f32.mrf.mxu0
        %v2956 = vadd.f32 0.0, %v2955
        %v2957 = vpop.f32.mrf.mxu0
        %v2958 = vadd.f32 0.0, %v2957
        %2959 = vmatmul.bf16.gmra.mxu0 %v2938
        %v2960 = vpop.f32.mrf.mxu0
        %v2961 = vadd.f32 0.0, %v2960
        %v2962 = vpop.f32.mrf.mxu0
        %v2963 = vadd.f32 0.0, %v2962
        %2964 = vmatmul.bf16.gmra.mxu0 %v2941
        %v2965 = vpop.f32.mrf.mxu0
        %v2966 = vadd.f32 0.0, %v2965
        %v2967 = vpop.f32.mrf.mxu0
        %v2968 = vadd.f32 0.0, %v2967
        %2969 = vmatmul.bf16.gmra.mxu0 %v2944
        %v2970 = vpop.f32.mrf.mxu0
        %v2971 = vadd.f32 0.0, %v2970
        %v2972 = vpop.f32.mrf.mxu0
        %v2973 = vadd.f32 0.0, %v2972
        %2974 = vdwg.mxu0
        %v2975 = vadd.f32 %v2881, %v2956
        %v2976 = vadd.f32 %v2882, %v2958
        %v2977 = vadd.f32 %v2883, %v2961
        %v2978 = vadd.f32 %v2884, %v2963
        %v2979 = vadd.f32 %v2885, %v2966
        %v2980 = vadd.f32 %v2886, %v2968
        %v2981 = vadd.f32 %v2887, %v2971
        %v2982 = vadd.f32 %v2888, %v2973
        %v2983 = vld [vmem:[%s790 + $0x8] sm:$0xff]
        %v2984 = vld [vmem:[%s790 + $0x20] sm:$0xff]
        %v2985 = vld [vmem:[%s790 + $0x38] sm:$0xff]
        %v2986 = vld [vmem:[%s790 + $0x50] sm:$0xff]
        %v2987 = vld [vmem:[%s790 + $0x68] sm:$0xff]
        %v2988 = vld [vmem:[%s790 + $0x80] sm:$0xff]
        %v2989 = vld [vmem:[%s790 + $0x98] sm:$0xff]
        %v2990 = vld [vmem:[%s790 + $0xb0] sm:$0xff]
        %s2991 = scalar_lea.vmem %s2, 704
        %v2992 = vld [vmem:[%s2991] sm:$0xf]
        %v2993 = vld [vmem:[%s2991 + $0x4] sm:$0xf]
        %v2994 = vld [vmem:[%s2991 + $0x8] sm:$0xf]
        %v2995 = vld [vmem:[%s2991 + $0xc] sm:$0xf]
        %v2996 = vld [vmem:[%s2991 + $0x10] sm:$0xf]
        %v2997 = vld [vmem:[%s2991 + $0x14] sm:$0xf]
        %v2998 = vld [vmem:[%s2991 + $0x18] sm:$0xf]
        %v2999 = vld [vmem:[%s2991 + $0x1c] sm:$0xf]
        %v3000 = vpack.c.bf16 %v2984, %v2983
        %v3001 = vpack.c.bf16 %v2986, %v2985
        %v3002 = vpack.c.bf16 %v2988, %v2987
        %v3003 = vpack.c.bf16 %v2990, %v2989
        %v3012 = vunpack.c.l.b16 %v2992
        %v3013 = vunpack.c.l.b16 %v2993
        %v3014 = vunpack.c.l.b16 %v2994
        %v3015 = vunpack.c.l.b16 %v2995
        %v3016 = vunpack.c.l.b16 %v2996
        %v3017 = vunpack.c.l.b16 %v2997
        %v3018 = vunpack.c.l.b16 %v2998
        %v3019 = vunpack.c.l.b16 %v2999
        %v3020 = vpack.c.b16 %v3013, %v3012
        %v3021 = vpack.c.b16 %v3015, %v3014
        %v3022 = vpack.c.b16 %v3017, %v3016
        %v3023 = vpack.c.b16 %v3019, %v3018
        %v3029 = vsel %vm203, %v3000, 0
        %v3032 = vsel %vm203, %v3001, 0
        %v3035 = vsel %vm203, %v3002, 0
        %v3038 = vsel %vm203, %v3003, 0
        %3040 = vmatpush.bf16.msra.mxu0 0
        %3041 = vmatpush.bf16.msra.mxu0 0
        %3042 = vmatpush.bf16.msra.mxu0 0
        %3043 = vmatpush.bf16.msra.mxu0 0
        %3044 = vmatpush.bf16.msra.mxu0 %v3023
        %3045 = vmatpush.bf16.msra.mxu0 %v3022
        %3046 = vmatpush.bf16.msra.mxu0 %v3021
        %3047 = vmatpush.bf16.msra.mxu0 %v3020
        %3048 = vmatmul.bf16.gmra.mxu0 %v3029
        %v3049 = vpop.f32.mrf.mxu0
        %v3050 = vadd.f32 0.0, %v3049
        %v3051 = vpop.f32.mrf.mxu0
        %v3052 = vadd.f32 0.0, %v3051
        %3053 = vmatmul.bf16.gmra.mxu0 %v3032
        %v3054 = vpop.f32.mrf.mxu0
        %v3055 = vadd.f32 0.0, %v3054
        %v3056 = vpop.f32.mrf.mxu0
        %v3057 = vadd.f32 0.0, %v3056
        %3058 = vmatmul.bf16.gmra.mxu0 %v3035
        %v3059 = vpop.f32.mrf.mxu0
        %v3060 = vadd.f32 0.0, %v3059
        %v3061 = vpop.f32.mrf.mxu0
        %v3062 = vadd.f32 0.0, %v3061
        %3063 = vmatmul.bf16.gmra.mxu0 %v3038
        %v3064 = vpop.f32.mrf.mxu0
        %v3065 = vadd.f32 0.0, %v3064
        %v3066 = vpop.f32.mrf.mxu0
        %v3067 = vadd.f32 0.0, %v3066
        %3068 = vdwg.mxu0
        %v3069 = vadd.f32 %v2975, %v3050
        %v3070 = vadd.f32 %v2976, %v3052
        %v3071 = vadd.f32 %v2977, %v3055
        %v3072 = vadd.f32 %v2978, %v3057
        %v3073 = vadd.f32 %v2979, %v3060
        %v3074 = vadd.f32 %v2980, %v3062
        %v3075 = vadd.f32 %v2981, %v3065
        %v3076 = vadd.f32 %v2982, %v3067
        %v3077 = vld [vmem:[%s790 + $0x9] sm:$0xff]
        %v3078 = vld [vmem:[%s790 + $0x21] sm:$0xff]
        %v3079 = vld [vmem:[%s790 + $0x39] sm:$0xff]
        %v3080 = vld [vmem:[%s790 + $0x51] sm:$0xff]
        %v3081 = vld [vmem:[%s790 + $0x69] sm:$0xff]
        %v3082 = vld [vmem:[%s790 + $0x81] sm:$0xff]
        %v3083 = vld [vmem:[%s790 + $0x99] sm:$0xff]
        %v3084 = vld [vmem:[%s790 + $0xb1] sm:$0xff]
        %s3085 = scalar_lea.vmem %s2, 736
        %v3086 = vld [vmem:[%s3085] sm:$0xf]
        %v3087 = vld [vmem:[%s3085 + $0x4] sm:$0xf]
        %v3088 = vld [vmem:[%s3085 + $0x8] sm:$0xf]
        %v3089 = vld [vmem:[%s3085 + $0xc] sm:$0xf]
        %v3090 = vld [vmem:[%s3085 + $0x10] sm:$0xf]
        %v3091 = vld [vmem:[%s3085 + $0x14] sm:$0xf]
        %v3092 = vld [vmem:[%s3085 + $0x18] sm:$0xf]
        %v3093 = vld [vmem:[%s3085 + $0x1c] sm:$0xf]
        %v3094 = vpack.c.bf16 %v3078, %v3077
        %v3095 = vpack.c.bf16 %v3080, %v3079
        %v3096 = vpack.c.bf16 %v3082, %v3081
        %v3097 = vpack.c.bf16 %v3084, %v3083
        %v3106 = vunpack.c.l.b16 %v3086
        %v3107 = vunpack.c.l.b16 %v3087
        %v3108 = vunpack.c.l.b16 %v3088
        %v3109 = vunpack.c.l.b16 %v3089
        %v3110 = vunpack.c.l.b16 %v3090
        %v3111 = vunpack.c.l.b16 %v3091
        %v3112 = vunpack.c.l.b16 %v3092
        %v3113 = vunpack.c.l.b16 %v3093
        %v3114 = vpack.c.b16 %v3107, %v3106
        %v3115 = vpack.c.b16 %v3109, %v3108
        %v3116 = vpack.c.b16 %v3111, %v3110
        %v3117 = vpack.c.b16 %v3113, %v3112
        %v3123 = vsel %vm203, %v3094, 0
        %v3126 = vsel %vm203, %v3095, 0
        %v3129 = vsel %vm203, %v3096, 0
        %v3132 = vsel %vm203, %v3097, 0
        %3134 = vmatpush.bf16.msra.mxu0 0
        %3135 = vmatpush.bf16.msra.mxu0 0
        %3136 = vmatpush.bf16.msra.mxu0 0
        %3137 = vmatpush.bf16.msra.mxu0 0
        %3138 = vmatpush.bf16.msra.mxu0 %v3117
        %3139 = vmatpush.bf16.msra.mxu0 %v3116
        %3140 = vmatpush.bf16.msra.mxu0 %v3115
        %3141 = vmatpush.bf16.msra.mxu0 %v3114
        %3142 = vmatmul.bf16.gmra.mxu0 %v3123
        %v3143 = vpop.f32.mrf.mxu0
        %v3144 = vadd.f32 0.0, %v3143
        %v3145 = vpop.f32.mrf.mxu0
        %v3146 = vadd.f32 0.0, %v3145
        %3147 = vmatmul.bf16.gmra.mxu0 %v3126
        %v3148 = vpop.f32.mrf.mxu0
        %v3149 = vadd.f32 0.0, %v3148
        %v3150 = vpop.f32.mrf.mxu0
        %v3151 = vadd.f32 0.0, %v3150
        %3152 = vmatmul.bf16.gmra.mxu0 %v3129
        %v3153 = vpop.f32.mrf.mxu0
        %v3154 = vadd.f32 0.0, %v3153
        %v3155 = vpop.f32.mrf.mxu0
        %v3156 = vadd.f32 0.0, %v3155
        %3157 = vmatmul.bf16.gmra.mxu0 %v3132
        %v3158 = vpop.f32.mrf.mxu0
        %v3159 = vadd.f32 0.0, %v3158
        %v3160 = vpop.f32.mrf.mxu0
        %v3161 = vadd.f32 0.0, %v3160
        %3162 = vdwg.mxu0
        %v3163 = vadd.f32 %v3069, %v3144
        %v3164 = vadd.f32 %v3070, %v3146
        %v3165 = vadd.f32 %v3071, %v3149
        %v3166 = vadd.f32 %v3072, %v3151
        %v3167 = vadd.f32 %v3073, %v3154
        %v3168 = vadd.f32 %v3074, %v3156
        %v3169 = vadd.f32 %v3075, %v3159
        %v3170 = vadd.f32 %v3076, %v3161
        %v3171 = vld [vmem:[%s1450 + $0x7] sm:$0xff]
        %v3172 = vld [vmem:[%s1450 + $0x1f] sm:$0xff]
        %v3173 = vld [vmem:[%s1450 + $0x37] sm:$0xff]
        %v3174 = vld [vmem:[%s1450 + $0x4f] sm:$0xff]
        %v3175 = vld [vmem:[%s1450 + $0x67] sm:$0xff]
        %v3176 = vld [vmem:[%s1450 + $0x7f] sm:$0xff]
        %v3177 = vld [vmem:[%s1450 + $0x97] sm:$0xff]
        %v3178 = vld [vmem:[%s1450 + $0xaf] sm:$0xff]
        %s3179 = scalar_lea.vmem %s2, 768
        %v3180 = vld [vmem:[%s3179] sm:$0xf]
        %v3181 = vld [vmem:[%s3179 + $0x4] sm:$0xf]
        %v3182 = vld [vmem:[%s3179 + $0x8] sm:$0xf]
        %v3183 = vld [vmem:[%s3179 + $0xc] sm:$0xf]
        %v3184 = vld [vmem:[%s3179 + $0x10] sm:$0xf]
        %v3185 = vld [vmem:[%s3179 + $0x14] sm:$0xf]
        %v3186 = vld [vmem:[%s3179 + $0x18] sm:$0xf]
        %v3187 = vld [vmem:[%s3179 + $0x1c] sm:$0xf]
        %v3188 = vpack.c.bf16 %v3172, %v3171
        %v3189 = vpack.c.bf16 %v3174, %v3173
        %v3190 = vpack.c.bf16 %v3176, %v3175
        %v3191 = vpack.c.bf16 %v3178, %v3177
        %v3200 = vunpack.c.l.b16 %v3180
        %v3201 = vunpack.c.l.b16 %v3181
        %v3202 = vunpack.c.l.b16 %v3182
        %v3203 = vunpack.c.l.b16 %v3183
        %v3204 = vunpack.c.l.b16 %v3184
        %v3205 = vunpack.c.l.b16 %v3185
        %v3206 = vunpack.c.l.b16 %v3186
        %v3207 = vunpack.c.l.b16 %v3187
        %v3208 = vpack.c.b16 %v3201, %v3200
        %v3209 = vpack.c.b16 %v3203, %v3202
        %v3210 = vpack.c.b16 %v3205, %v3204
        %v3211 = vpack.c.b16 %v3207, %v3206
        %v3217 = vsel %vm203, %v3188, 0
        %v3220 = vsel %vm203, %v3189, 0
        %v3223 = vsel %vm203, %v3190, 0
        %v3226 = vsel %vm203, %v3191, 0
        %3228 = vmatpush.bf16.msra.mxu0 0
        %3229 = vmatpush.bf16.msra.mxu0 0
        %3230 = vmatpush.bf16.msra.mxu0 0
        %3231 = vmatpush.bf16.msra.mxu0 0
        %3232 = vmatpush.bf16.msra.mxu0 %v3211
        %3233 = vmatpush.bf16.msra.mxu0 %v3210
        %3234 = vmatpush.bf16.msra.mxu0 %v3209
        %3235 = vmatpush.bf16.msra.mxu0 %v3208
        %3236 = vmatmul.bf16.gmra.mxu0 %v3217
        %v3237 = vpop.f32.mrf.mxu0
        %v3238 = vadd.f32 0.0, %v3237
        %v3239 = vpop.f32.mrf.mxu0
        %v3240 = vadd.f32 0.0, %v3239
        %3241 = vmatmul.bf16.gmra.mxu0 %v3220
        %v3242 = vpop.f32.mrf.mxu0
        %v3243 = vadd.f32 0.0, %v3242
        %v3244 = vpop.f32.mrf.mxu0
        %v3245 = vadd.f32 0.0, %v3244
        %3246 = vmatmul.bf16.gmra.mxu0 %v3223
        %v3247 = vpop.f32.mrf.mxu0
        %v3248 = vadd.f32 0.0, %v3247
        %v3249 = vpop.f32.mrf.mxu0
        %v3250 = vadd.f32 0.0, %v3249
        %3251 = vmatmul.bf16.gmra.mxu0 %v3226
        %v3252 = vpop.f32.mrf.mxu0
        %v3253 = vadd.f32 0.0, %v3252
        %v3254 = vpop.f32.mrf.mxu0
        %v3255 = vadd.f32 0.0, %v3254
        %3256 = vdwg.mxu0
        %v3257 = vadd.f32 %v3163, %v3238
        %v3258 = vadd.f32 %v3164, %v3240
        %v3259 = vadd.f32 %v3165, %v3243
        %v3260 = vadd.f32 %v3166, %v3245
        %v3261 = vadd.f32 %v3167, %v3248
        %v3262 = vadd.f32 %v3168, %v3250
        %v3263 = vadd.f32 %v3169, %v3253
        %v3264 = vadd.f32 %v3170, %v3255
        %v3265 = vld [vmem:[%s1450 + $0x8] sm:$0xff]
        %v3266 = vld [vmem:[%s1450 + $0x20] sm:$0xff]
        %v3267 = vld [vmem:[%s1450 + $0x38] sm:$0xff]
        %v3268 = vld [vmem:[%s1450 + $0x50] sm:$0xff]
        %v3269 = vld [vmem:[%s1450 + $0x68] sm:$0xff]
        %v3270 = vld [vmem:[%s1450 + $0x80] sm:$0xff]
        %v3271 = vld [vmem:[%s1450 + $0x98] sm:$0xff]
        %v3272 = vld [vmem:[%s1450 + $0xb0] sm:$0xff]
        %s3273 = scalar_lea.vmem %s2, 800
        %v3274 = vld [vmem:[%s3273] sm:$0xf]
        %v3275 = vld [vmem:[%s3273 + $0x4] sm:$0xf]
        %v3276 = vld [vmem:[%s3273 + $0x8] sm:$0xf]
        %v3277 = vld [vmem:[%s3273 + $0xc] sm:$0xf]
        %v3278 = vld [vmem:[%s3273 + $0x10] sm:$0xf]
        %v3279 = vld [vmem:[%s3273 + $0x14] sm:$0xf]
        %v3280 = vld [vmem:[%s3273 + $0x18] sm:$0xf]
        %v3281 = vld [vmem:[%s3273 + $0x1c] sm:$0xf]
        %v3282 = vpack.c.bf16 %v3266, %v3265
        %v3283 = vpack.c.bf16 %v3268, %v3267
        %v3284 = vpack.c.bf16 %v3270, %v3269
        %v3285 = vpack.c.bf16 %v3272, %v3271
        %v3294 = vunpack.c.l.b16 %v3274
        %v3295 = vunpack.c.l.b16 %v3275
        %v3296 = vunpack.c.l.b16 %v3276
        %v3297 = vunpack.c.l.b16 %v3277
        %v3298 = vunpack.c.l.b16 %v3278
        %v3299 = vunpack.c.l.b16 %v3279
        %v3300 = vunpack.c.l.b16 %v3280
        %v3301 = vunpack.c.l.b16 %v3281
        %v3302 = vpack.c.b16 %v3295, %v3294
        %v3303 = vpack.c.b16 %v3297, %v3296
        %v3304 = vpack.c.b16 %v3299, %v3298
        %v3305 = vpack.c.b16 %v3301, %v3300
        %v3311 = vsel %vm203, %v3282, 0
        %v3314 = vsel %vm203, %v3283, 0
        %v3317 = vsel %vm203, %v3284, 0
        %v3320 = vsel %vm203, %v3285, 0
        %3322 = vmatpush.bf16.msra.mxu0 0
        %3323 = vmatpush.bf16.msra.mxu0 0
        %3324 = vmatpush.bf16.msra.mxu0 0
        %3325 = vmatpush.bf16.msra.mxu0 0
        %3326 = vmatpush.bf16.msra.mxu0 %v3305
        %3327 = vmatpush.bf16.msra.mxu0 %v3304
        %3328 = vmatpush.bf16.msra.mxu0 %v3303
        %3329 = vmatpush.bf16.msra.mxu0 %v3302
        %3330 = vmatmul.bf16.gmra.mxu0 %v3311
        %v3331 = vpop.f32.mrf.mxu0
        %v3332 = vadd.f32 0.0, %v3331
        %v3333 = vpop.f32.mrf.mxu0
        %v3334 = vadd.f32 0.0, %v3333
        %3335 = vmatmul.bf16.gmra.mxu0 %v3314
        %v3336 = vpop.f32.mrf.mxu0
        %v3337 = vadd.f32 0.0, %v3336
        %v3338 = vpop.f32.mrf.mxu0
        %v3339 = vadd.f32 0.0, %v3338
        %3340 = vmatmul.bf16.gmra.mxu0 %v3317
        %v3341 = vpop.f32.mrf.mxu0
        %v3342 = vadd.f32 0.0, %v3341
        %v3343 = vpop.f32.mrf.mxu0
        %v3344 = vadd.f32 0.0, %v3343
        %3345 = vmatmul.bf16.gmra.mxu0 %v3320
        %v3346 = vpop.f32.mrf.mxu0
        %v3347 = vadd.f32 0.0, %v3346
        %v3348 = vpop.f32.mrf.mxu0
        %v3349 = vadd.f32 0.0, %v3348
        %3350 = vdwg.mxu0
        %v3351 = vadd.f32 %v3257, %v3332
        %v3352 = vadd.f32 %v3258, %v3334
        %v3353 = vadd.f32 %v3259, %v3337
        %v3354 = vadd.f32 %v3260, %v3339
        %v3355 = vadd.f32 %v3261, %v3342
        %v3356 = vadd.f32 %v3262, %v3344
        %v3357 = vadd.f32 %v3263, %v3347
        %v3358 = vadd.f32 %v3264, %v3349
        %v3359 = vld [vmem:[%s1450 + $0x9] sm:$0xff]
        %v3360 = vld [vmem:[%s1450 + $0x21] sm:$0xff]
        %v3361 = vld [vmem:[%s1450 + $0x39] sm:$0xff]
        %v3362 = vld [vmem:[%s1450 + $0x51] sm:$0xff]
        %v3363 = vld [vmem:[%s1450 + $0x69] sm:$0xff]
        %v3364 = vld [vmem:[%s1450 + $0x81] sm:$0xff]
        %v3365 = vld [vmem:[%s1450 + $0x99] sm:$0xff]
        %v3366 = vld [vmem:[%s1450 + $0xb1] sm:$0xff]
        %s3367 = scalar_lea.vmem %s2, 832
        %v3368 = vld [vmem:[%s3367] sm:$0xf]
        %v3369 = vld [vmem:[%s3367 + $0x4] sm:$0xf]
        %v3370 = vld [vmem:[%s3367 + $0x8] sm:$0xf]
        %v3371 = vld [vmem:[%s3367 + $0xc] sm:$0xf]
        %v3372 = vld [vmem:[%s3367 + $0x10] sm:$0xf]
        %v3373 = vld [vmem:[%s3367 + $0x14] sm:$0xf]
        %v3374 = vld [vmem:[%s3367 + $0x18] sm:$0xf]
        %v3375 = vld [vmem:[%s3367 + $0x1c] sm:$0xf]
        %v3376 = vpack.c.bf16 %v3360, %v3359
        %v3377 = vpack.c.bf16 %v3362, %v3361
        %v3378 = vpack.c.bf16 %v3364, %v3363
        %v3379 = vpack.c.bf16 %v3366, %v3365
        %v3388 = vunpack.c.l.b16 %v3368
        %v3389 = vunpack.c.l.b16 %v3369
        %v3390 = vunpack.c.l.b16 %v3370
        %v3391 = vunpack.c.l.b16 %v3371
        %v3392 = vunpack.c.l.b16 %v3372
        %v3393 = vunpack.c.l.b16 %v3373
        %v3394 = vunpack.c.l.b16 %v3374
        %v3395 = vunpack.c.l.b16 %v3375
        %v3396 = vpack.c.b16 %v3389, %v3388
        %v3397 = vpack.c.b16 %v3391, %v3390
        %v3398 = vpack.c.b16 %v3393, %v3392
        %v3399 = vpack.c.b16 %v3395, %v3394
        %v3405 = vsel %vm203, %v3376, 0
        %v3408 = vsel %vm203, %v3377, 0
        %v3411 = vsel %vm203, %v3378, 0
        %v3414 = vsel %vm203, %v3379, 0
        %3416 = vmatpush.bf16.msra.mxu0 0
        %3417 = vmatpush.bf16.msra.mxu0 0
        %3418 = vmatpush.bf16.msra.mxu0 0
        %3419 = vmatpush.bf16.msra.mxu0 0
        %3420 = vmatpush.bf16.msra.mxu0 %v3399
        %3421 = vmatpush.bf16.msra.mxu0 %v3398
        %3422 = vmatpush.bf16.msra.mxu0 %v3397
        %3423 = vmatpush.bf16.msra.mxu0 %v3396
        %3424 = vmatmul.bf16.gmra.mxu0 %v3405
        %v3425 = vpop.f32.mrf.mxu0
        %v3426 = vadd.f32 0.0, %v3425
        %v3427 = vpop.f32.mrf.mxu0
        %v3428 = vadd.f32 0.0, %v3427
        %3429 = vmatmul.bf16.gmra.mxu0 %v3408
        %v3430 = vpop.f32.mrf.mxu0
        %v3431 = vadd.f32 0.0, %v3430
        %v3432 = vpop.f32.mrf.mxu0
        %v3433 = vadd.f32 0.0, %v3432
        %3434 = vmatmul.bf16.gmra.mxu0 %v3411
        %v3435 = vpop.f32.mrf.mxu0
        %v3436 = vadd.f32 0.0, %v3435
        %v3437 = vpop.f32.mrf.mxu0
        %v3438 = vadd.f32 0.0, %v3437
        %3439 = vmatmul.bf16.gmra.mxu0 %v3414
        %v3440 = vpop.f32.mrf.mxu0
        %v3441 = vadd.f32 0.0, %v3440
        %v3442 = vpop.f32.mrf.mxu0
        %v3443 = vadd.f32 0.0, %v3442
        %3444 = vdwg.mxu0
        %v3445 = vadd.f32 %v3351, %v3426
        %v3446 = vadd.f32 %v3352, %v3428
        %v3447 = vadd.f32 %v3353, %v3431
        %v3448 = vadd.f32 %v3354, %v3433
        %v3449 = vadd.f32 %v3355, %v3436
        %v3450 = vadd.f32 %v3356, %v3438
        %v3451 = vadd.f32 %v3357, %v3441
        %v3452 = vadd.f32 %v3358, %v3443
        %v3453 = vld [vmem:[%s3 + $0x3] sm:$0x1]
        %v3454 = vperm.slane %v3453, 0
        %v3455 = vadd.f32 %v3445, %v3454
        %v3456 = vadd.f32 %v3446, %v3454
        %v3457 = vadd.f32 %v3447, %v3454
        %v3458 = vadd.f32 %v3448, %v3454
        %v3459 = vadd.f32 %v3449, %v3454
        %v3460 = vadd.f32 %v3450, %v3454
        %v3461 = vadd.f32 %v3451, %v3454
        %v3462 = vadd.f32 %v3452, %v3454
        %v3463 = vmax.f32 %v3455, 0.0
        %v3464 = vmax.f32 %v3456, 0.0
        %v3465 = vmax.f32 %v3457, 0.0
        %v3466 = vmax.f32 %v3458, 0.0
        %v3467 = vmax.f32 %v3459, 0.0
        %v3468 = vmax.f32 %v3460, 0.0
        %v3469 = vmax.f32 %v3461, 0.0
        %v3470 = vmax.f32 %v3462, 0.0
        %3471 = vst.msk [vmem:[%s790 + $0x8] sm:$0xff] %vm203, %v3463
        %3472 = vst.msk [vmem:[%s790 + $0x20] sm:$0xff] %vm203, %v3464
        %3473 = vst.msk [vmem:[%s790 + $0x38] sm:$0xff] %vm203, %v3465
        %3474 = vst.msk [vmem:[%s790 + $0x50] sm:$0xff] %vm203, %v3466
        %3475 = vst.msk [vmem:[%s790 + $0x68] sm:$0xff] %vm203, %v3467
        %3476 = vst.msk [vmem:[%s790 + $0x80] sm:$0xff] %vm203, %v3468
        %3477 = vst.msk [vmem:[%s790 + $0x98] sm:$0xff] %vm203, %v3469
        %3478 = vst.msk [vmem:[%s790 + $0xb0] sm:$0xff] %vm203, %v3470
        %v3479 = vld [vmem:[#allocation2 + $0x7] sm:$0xff]
        %v3480 = vld [vmem:[#allocation2 + $0x1f] sm:$0xff]
        %v3481 = vld [vmem:[#allocation2 + $0x37] sm:$0xff]
        %v3482 = vld [vmem:[#allocation2 + $0x4f] sm:$0xff]
        %v3483 = vld [vmem:[#allocation2 + $0x67] sm:$0xff]
        %v3484 = vld [vmem:[#allocation2 + $0x7f] sm:$0xff]
        %v3485 = vld [vmem:[#allocation2 + $0x97] sm:$0xff]
        %v3486 = vld [vmem:[#allocation2 + $0xaf] sm:$0xff]
        %s3487 = scalar_lea.vmem %s2, 864
        %v3488 = vld [vmem:[%s3487] sm:$0xf]
        %v3489 = vld [vmem:[%s3487 + $0x4] sm:$0xf]
        %v3490 = vld [vmem:[%s3487 + $0x8] sm:$0xf]
        %v3491 = vld [vmem:[%s3487 + $0xc] sm:$0xf]
        %v3492 = vld [vmem:[%s3487 + $0x10] sm:$0xf]
        %v3493 = vld [vmem:[%s3487 + $0x14] sm:$0xf]
        %v3494 = vld [vmem:[%s3487 + $0x18] sm:$0xf]
        %v3495 = vld [vmem:[%s3487 + $0x1c] sm:$0xf]
        %v3496 = vpack.c.bf16 %v3480, %v3479
        %v3497 = vpack.c.bf16 %v3482, %v3481
        %v3498 = vpack.c.bf16 %v3484, %v3483
        %v3499 = vpack.c.bf16 %v3486, %v3485
        %v3500 = vld [vmem:[#allocation2 + $0x8] sm:$0xff]
        %v3501 = vld [vmem:[#allocation2 + $0x20] sm:$0xff]
        %v3502 = vld [vmem:[#allocation2 + $0x38] sm:$0xff]
        %v3503 = vld [vmem:[#allocation2 + $0x50] sm:$0xff]
        %v3504 = vld [vmem:[#allocation2 + $0x68] sm:$0xff]
        %v3505 = vld [vmem:[#allocation2 + $0x80] sm:$0xff]
        %v3506 = vld [vmem:[#allocation2 + $0x98] sm:$0xff]
        %v3507 = vld [vmem:[#allocation2 + $0xb0] sm:$0xff]
        %s3508 = scalar_lea.vmem %s2, 896
        %v3509 = vld [vmem:[%s3508] sm:$0xf]
        %v3510 = vld [vmem:[%s3508 + $0x4] sm:$0xf]
        %v3511 = vld [vmem:[%s3508 + $0x8] sm:$0xf]
        %v3512 = vld [vmem:[%s3508 + $0xc] sm:$0xf]
        %v3513 = vld [vmem:[%s3508 + $0x10] sm:$0xf]
        %v3514 = vld [vmem:[%s3508 + $0x14] sm:$0xf]
        %v3515 = vld [vmem:[%s3508 + $0x18] sm:$0xf]
        %v3516 = vld [vmem:[%s3508 + $0x1c] sm:$0xf]
        %v3517 = vpack.c.bf16 %v3501, %v3500
        %v3518 = vpack.c.bf16 %v3503, %v3502
        %v3519 = vpack.c.bf16 %v3505, %v3504
        %v3520 = vpack.c.bf16 %v3507, %v3506
        %v3529 = vunpack.c.l.b16 %v3509
        %v3530 = vunpack.c.l.b16 %v3510
        %v3531 = vunpack.c.l.b16 %v3511
        %v3532 = vunpack.c.l.b16 %v3512
        %v3533 = vunpack.c.l.b16 %v3513
        %v3534 = vunpack.c.l.b16 %v3514
        %v3535 = vunpack.c.l.b16 %v3515
        %v3536 = vunpack.c.l.b16 %v3516
        %v3537 = vpack.c.b16 %v3530, %v3529
        %v3538 = vpack.c.b16 %v3532, %v3531
        %v3539 = vpack.c.b16 %v3534, %v3533
        %v3540 = vpack.c.b16 %v3536, %v3535
        %v3546 = vsel %vm203, %v3517, 0
        %v3549 = vsel %vm203, %v3518, 0
        %v3552 = vsel %vm203, %v3519, 0
        %v3555 = vsel %vm203, %v3520, 0
        %3557 = vmatpush.bf16.msra.mxu0 0
        %3558 = vmatpush.bf16.msra.mxu0 0
        %3559 = vmatpush.bf16.msra.mxu0 0
        %3560 = vmatpush.bf16.msra.mxu0 0
        %3561 = vmatpush.bf16.msra.mxu0 %v3540
        %3562 = vmatpush.bf16.msra.mxu0 %v3539
        %3563 = vmatpush.bf16.msra.mxu0 %v3538
        %3564 = vmatpush.bf16.msra.mxu0 %v3537
        %3565 = vmatmul.bf16.gmra.mxu0 %v3546
        %v3566 = vpop.f32.mrf.mxu0
        %v3567 = vadd.f32 0.0, %v3566
        %v3568 = vpop.f32.mrf.mxu0
        %v3569 = vadd.f32 0.0, %v3568
        %3570 = vmatmul.bf16.gmra.mxu0 %v3549
        %v3571 = vpop.f32.mrf.mxu0
        %v3572 = vadd.f32 0.0, %v3571
        %v3573 = vpop.f32.mrf.mxu0
        %v3574 = vadd.f32 0.0, %v3573
        %3575 = vmatmul.bf16.gmra.mxu0 %v3552
        %v3576 = vpop.f32.mrf.mxu0
        %v3577 = vadd.f32 0.0, %v3576
        %v3578 = vpop.f32.mrf.mxu0
        %v3579 = vadd.f32 0.0, %v3578
        %3580 = vmatmul.bf16.gmra.mxu0 %v3555
        %v3581 = vpop.f32.mrf.mxu0
        %v3582 = vadd.f32 0.0, %v3581
        %v3583 = vpop.f32.mrf.mxu0
        %v3584 = vadd.f32 0.0, %v3583
        %3585 = vdwg.mxu0
        %v3594 = vunpack.c.l.b16 %v3488
        %v3595 = vunpack.c.l.b16 %v3489
        %v3596 = vunpack.c.l.b16 %v3490
        %v3597 = vunpack.c.l.b16 %v3491
        %v3598 = vunpack.c.l.b16 %v3492
        %v3599 = vunpack.c.l.b16 %v3493
        %v3600 = vunpack.c.l.b16 %v3494
        %v3601 = vunpack.c.l.b16 %v3495
        %v3602 = vpack.c.b16 %v3595, %v3594
        %v3603 = vpack.c.b16 %v3597, %v3596
        %v3604 = vpack.c.b16 %v3599, %v3598
        %v3605 = vpack.c.b16 %v3601, %v3600
        %v3611 = vsel %vm203, %v3496, 0
        %v3614 = vsel %vm203, %v3497, 0
        %v3617 = vsel %vm203, %v3498, 0
        %v3620 = vsel %vm203, %v3499, 0
        %3622 = vmatpush.bf16.msra.mxu0 0
        %3623 = vmatpush.bf16.msra.mxu0 0
        %3624 = vmatpush.bf16.msra.mxu0 0
        %3625 = vmatpush.bf16.msra.mxu0 0
        %3626 = vmatpush.bf16.msra.mxu0 %v3605
        %3627 = vmatpush.bf16.msra.mxu0 %v3604
        %3628 = vmatpush.bf16.msra.mxu0 %v3603
        %3629 = vmatpush.bf16.msra.mxu0 %v3602
        %3630 = vmatmul.bf16.gmra.mxu0 %v3611
        %v3631 = vpop.f32.mrf.mxu0
        %v3632 = vadd.f32 %v3567, %v3631
        %v3633 = vpop.f32.mrf.mxu0
        %v3634 = vadd.f32 %v3569, %v3633
        %3635 = vmatmul.bf16.gmra.mxu0 %v3614
        %v3636 = vpop.f32.mrf.mxu0
        %v3637 = vadd.f32 %v3572, %v3636
        %v3638 = vpop.f32.mrf.mxu0
        %v3639 = vadd.f32 %v3574, %v3638
        %3640 = vmatmul.bf16.gmra.mxu0 %v3617
        %v3641 = vpop.f32.mrf.mxu0
        %v3642 = vadd.f32 %v3577, %v3641
        %v3643 = vpop.f32.mrf.mxu0
        %v3644 = vadd.f32 %v3579, %v3643
        %3645 = vmatmul.bf16.gmra.mxu0 %v3620
        %v3646 = vpop.f32.mrf.mxu0
        %v3647 = vadd.f32 %v3582, %v3646
        %v3648 = vpop.f32.mrf.mxu0
        %v3649 = vadd.f32 %v3584, %v3648
        %3650 = vdwg.mxu0
        %v3651 = vld [vmem:[#allocation2 + $0x9] sm:$0xff]
        %v3652 = vld [vmem:[#allocation2 + $0x21] sm:$0xff]
        %v3653 = vld [vmem:[#allocation2 + $0x39] sm:$0xff]
        %v3654 = vld [vmem:[#allocation2 + $0x51] sm:$0xff]
        %v3655 = vld [vmem:[#allocation2 + $0x69] sm:$0xff]
        %v3656 = vld [vmem:[#allocation2 + $0x81] sm:$0xff]
        %v3657 = vld [vmem:[#allocation2 + $0x99] sm:$0xff]
        %v3658 = vld [vmem:[#allocation2 + $0xb1] sm:$0xff]
        %s3659 = scalar_lea.vmem %s2, 928
        %v3660 = vld [vmem:[%s3659] sm:$0xf]
        %v3661 = vld [vmem:[%s3659 + $0x4] sm:$0xf]
        %v3662 = vld [vmem:[%s3659 + $0x8] sm:$0xf]
        %v3663 = vld [vmem:[%s3659 + $0xc] sm:$0xf]
        %v3664 = vld [vmem:[%s3659 + $0x10] sm:$0xf]
        %v3665 = vld [vmem:[%s3659 + $0x14] sm:$0xf]
        %v3666 = vld [vmem:[%s3659 + $0x18] sm:$0xf]
        %v3667 = vld [vmem:[%s3659 + $0x1c] sm:$0xf]
        %v3668 = vpack.c.bf16 %v3652, %v3651
        %v3669 = vpack.c.bf16 %v3654, %v3653
        %v3670 = vpack.c.bf16 %v3656, %v3655
        %v3671 = vpack.c.bf16 %v3658, %v3657
        %v3680 = vunpack.c.l.b16 %v3660
        %v3681 = vunpack.c.l.b16 %v3661
        %v3682 = vunpack.c.l.b16 %v3662
        %v3683 = vunpack.c.l.b16 %v3663
        %v3684 = vunpack.c.l.b16 %v3664
        %v3685 = vunpack.c.l.b16 %v3665
        %v3686 = vunpack.c.l.b16 %v3666
        %v3687 = vunpack.c.l.b16 %v3667
        %v3688 = vpack.c.b16 %v3681, %v3680
        %v3689 = vpack.c.b16 %v3683, %v3682
        %v3690 = vpack.c.b16 %v3685, %v3684
        %v3691 = vpack.c.b16 %v3687, %v3686
        %v3697 = vsel %vm203, %v3668, 0
        %v3700 = vsel %vm203, %v3669, 0
        %v3703 = vsel %vm203, %v3670, 0
        %v3706 = vsel %vm203, %v3671, 0
        %3708 = vmatpush.bf16.msra.mxu0 0
        %3709 = vmatpush.bf16.msra.mxu0 0
        %3710 = vmatpush.bf16.msra.mxu0 0
        %3711 = vmatpush.bf16.msra.mxu0 0
        %3712 = vmatpush.bf16.msra.mxu0 %v3691
        %3713 = vmatpush.bf16.msra.mxu0 %v3690
        %3714 = vmatpush.bf16.msra.mxu0 %v3689
        %3715 = vmatpush.bf16.msra.mxu0 %v3688
        %3716 = vmatmul.bf16.gmra.mxu0 %v3697
        %v3717 = vpop.f32.mrf.mxu0
        %v3718 = vadd.f32 0.0, %v3717
        %v3719 = vpop.f32.mrf.mxu0
        %v3720 = vadd.f32 0.0, %v3719
        %3721 = vmatmul.bf16.gmra.mxu0 %v3700
        %v3722 = vpop.f32.mrf.mxu0
        %v3723 = vadd.f32 0.0, %v3722
        %v3724 = vpop.f32.mrf.mxu0
        %v3725 = vadd.f32 0.0, %v3724
        %3726 = vmatmul.bf16.gmra.mxu0 %v3703
        %v3727 = vpop.f32.mrf.mxu0
        %v3728 = vadd.f32 0.0, %v3727
        %v3729 = vpop.f32.mrf.mxu0
        %v3730 = vadd.f32 0.0, %v3729
        %3731 = vmatmul.bf16.gmra.mxu0 %v3706
        %v3732 = vpop.f32.mrf.mxu0
        %v3733 = vadd.f32 0.0, %v3732
        %v3734 = vpop.f32.mrf.mxu0
        %v3735 = vadd.f32 0.0, %v3734
        %3736 = vdwg.mxu0
        %v3737 = vadd.f32 %v3632, %v3718
        %v3738 = vadd.f32 %v3634, %v3720
        %v3739 = vadd.f32 %v3637, %v3723
        %v3740 = vadd.f32 %v3639, %v3725
        %v3741 = vadd.f32 %v3642, %v3728
        %v3742 = vadd.f32 %v3644, %v3730
        %v3743 = vadd.f32 %v3647, %v3733
        %v3744 = vadd.f32 %v3649, %v3735
        %v3745 = vld [vmem:[%s790 + $0x7] sm:$0xff]
        %v3746 = vld [vmem:[%s790 + $0x1f] sm:$0xff]
        %v3747 = vld [vmem:[%s790 + $0x37] sm:$0xff]
        %v3748 = vld [vmem:[%s790 + $0x4f] sm:$0xff]
        %v3749 = vld [vmem:[%s790 + $0x67] sm:$0xff]
        %v3750 = vld [vmem:[%s790 + $0x7f] sm:$0xff]
        %v3751 = vld [vmem:[%s790 + $0x97] sm:$0xff]
        %v3752 = vld [vmem:[%s790 + $0xaf] sm:$0xff]
        %s3753 = scalar_lea.vmem %s2, 960
        %v3754 = vld [vmem:[%s3753] sm:$0xf]
        %v3755 = vld [vmem:[%s3753 + $0x4] sm:$0xf]
        %v3756 = vld [vmem:[%s3753 + $0x8] sm:$0xf]
        %v3757 = vld [vmem:[%s3753 + $0xc] sm:$0xf]
        %v3758 = vld [vmem:[%s3753 + $0x10] sm:$0xf]
        %v3759 = vld [vmem:[%s3753 + $0x14] sm:$0xf]
        %v3760 = vld [vmem:[%s3753 + $0x18] sm:$0xf]
        %v3761 = vld [vmem:[%s3753 + $0x1c] sm:$0xf]
        %v3762 = vpack.c.bf16 %v3746, %v3745
        %v3763 = vpack.c.bf16 %v3748, %v3747
        %v3764 = vpack.c.bf16 %v3750, %v3749
        %v3765 = vpack.c.bf16 %v3752, %v3751
        %v3774 = vunpack.c.l.b16 %v3754
        %v3775 = vunpack.c.l.b16 %v3755
        %v3776 = vunpack.c.l.b16 %v3756
        %v3777 = vunpack.c.l.b16 %v3757
        %v3778 = vunpack.c.l.b16 %v3758
        %v3779 = vunpack.c.l.b16 %v3759
        %v3780 = vunpack.c.l.b16 %v3760
        %v3781 = vunpack.c.l.b16 %v3761
        %v3782 = vpack.c.b16 %v3775, %v3774
        %v3783 = vpack.c.b16 %v3777, %v3776
        %v3784 = vpack.c.b16 %v3779, %v3778
        %v3785 = vpack.c.b16 %v3781, %v3780
        %v3791 = vsel %vm203, %v3762, 0
        %v3794 = vsel %vm203, %v3763, 0
        %v3797 = vsel %vm203, %v3764, 0
        %v3800 = vsel %vm203, %v3765, 0
        %3802 = vmatpush.bf16.msra.mxu0 0
        %3803 = vmatpush.bf16.msra.mxu0 0
        %3804 = vmatpush.bf16.msra.mxu0 0
        %3805 = vmatpush.bf16.msra.mxu0 0
        %3806 = vmatpush.bf16.msra.mxu0 %v3785
        %3807 = vmatpush.bf16.msra.mxu0 %v3784
        %3808 = vmatpush.bf16.msra.mxu0 %v3783
        %3809 = vmatpush.bf16.msra.mxu0 %v3782
        %3810 = vmatmul.bf16.gmra.mxu0 %v3791
        %v3811 = vpop.f32.mrf.mxu0
        %v3812 = vadd.f32 0.0, %v3811
        %v3813 = vpop.f32.mrf.mxu0
        %v3814 = vadd.f32 0.0, %v3813
        %3815 = vmatmul.bf16.gmra.mxu0 %v3794
        %v3816 = vpop.f32.mrf.mxu0
        %v3817 = vadd.f32 0.0, %v3816
        %v3818 = vpop.f32.mrf.mxu0
        %v3819 = vadd.f32 0.0, %v3818
        %3820 = vmatmul.bf16.gmra.mxu0 %v3797
        %v3821 = vpop.f32.mrf.mxu0
        %v3822 = vadd.f32 0.0, %v3821
        %v3823 = vpop.f32.mrf.mxu0
        %v3824 = vadd.f32 0.0, %v3823
        %3825 = vmatmul.bf16.gmra.mxu0 %v3800
        %v3826 = vpop.f32.mrf.mxu0
        %v3827 = vadd.f32 0.0, %v3826
        %v3828 = vpop.f32.mrf.mxu0
        %v3829 = vadd.f32 0.0, %v3828
        %3830 = vdwg.mxu0
        %v3831 = vadd.f32 %v3737, %v3812
        %v3832 = vadd.f32 %v3738, %v3814
        %v3833 = vadd.f32 %v3739, %v3817
        %v3834 = vadd.f32 %v3740, %v3819
        %v3835 = vadd.f32 %v3741, %v3822
        %v3836 = vadd.f32 %v3742, %v3824
        %v3837 = vadd.f32 %v3743, %v3827
        %v3838 = vadd.f32 %v3744, %v3829
        %v3839 = vld [vmem:[%s790 + $0x8] sm:$0xff]
        %v3840 = vld [vmem:[%s790 + $0x20] sm:$0xff]
        %v3841 = vld [vmem:[%s790 + $0x38] sm:$0xff]
        %v3842 = vld [vmem:[%s790 + $0x50] sm:$0xff]
        %v3843 = vld [vmem:[%s790 + $0x68] sm:$0xff]
        %v3844 = vld [vmem:[%s790 + $0x80] sm:$0xff]
        %v3845 = vld [vmem:[%s790 + $0x98] sm:$0xff]
        %v3846 = vld [vmem:[%s790 + $0xb0] sm:$0xff]
        %s3847 = scalar_lea.vmem %s2, 992
        %v3848 = vld [vmem:[%s3847] sm:$0xf]
        %v3849 = vld [vmem:[%s3847 + $0x4] sm:$0xf]
        %v3850 = vld [vmem:[%s3847 + $0x8] sm:$0xf]
        %v3851 = vld [vmem:[%s3847 + $0xc] sm:$0xf]
        %v3852 = vld [vmem:[%s3847 + $0x10] sm:$0xf]
        %v3853 = vld [vmem:[%s3847 + $0x14] sm:$0xf]
        %v3854 = vld [vmem:[%s3847 + $0x18] sm:$0xf]
        %v3855 = vld [vmem:[%s3847 + $0x1c] sm:$0xf]
        %v3856 = vpack.c.bf16 %v3840, %v3839
        %v3857 = vpack.c.bf16 %v3842, %v3841
        %v3858 = vpack.c.bf16 %v3844, %v3843
        %v3859 = vpack.c.bf16 %v3846, %v3845
        %v3868 = vunpack.c.l.b16 %v3848
        %v3869 = vunpack.c.l.b16 %v3849
        %v3870 = vunpack.c.l.b16 %v3850
        %v3871 = vunpack.c.l.b16 %v3851
        %v3872 = vunpack.c.l.b16 %v3852
        %v3873 = vunpack.c.l.b16 %v3853
        %v3874 = vunpack.c.l.b16 %v3854
        %v3875 = vunpack.c.l.b16 %v3855
        %v3876 = vpack.c.b16 %v3869, %v3868
        %v3877 = vpack.c.b16 %v3871, %v3870
        %v3878 = vpack.c.b16 %v3873, %v3872
        %v3879 = vpack.c.b16 %v3875, %v3874
        %v3885 = vsel %vm203, %v3856, 0
        %v3888 = vsel %vm203, %v3857, 0
        %v3891 = vsel %vm203, %v3858, 0
        %v3894 = vsel %vm203, %v3859, 0
        %3896 = vmatpush.bf16.msra.mxu0 0
        %3897 = vmatpush.bf16.msra.mxu0 0
        %3898 = vmatpush.bf16.msra.mxu0 0
        %3899 = vmatpush.bf16.msra.mxu0 0
        %3900 = vmatpush.bf16.msra.mxu0 %v3879
        %3901 = vmatpush.bf16.msra.mxu0 %v3878
        %3902 = vmatpush.bf16.msra.mxu0 %v3877
        %3903 = vmatpush.bf16.msra.mxu0 %v3876
        %3904 = vmatmul.bf16.gmra.mxu0 %v3885
        %v3905 = vpop.f32.mrf.mxu0
        %v3906 = vadd.f32 0.0, %v3905
        %v3907 = vpop.f32.mrf.mxu0
        %v3908 = vadd.f32 0.0, %v3907
        %3909 = vmatmul.bf16.gmra.mxu0 %v3888
        %v3910 = vpop.f32.mrf.mxu0
        %v3911 = vadd.f32 0.0, %v3910
        %v3912 = vpop.f32.mrf.mxu0
        %v3913 = vadd.f32 0.0, %v3912
        %3914 = vmatmul.bf16.gmra.mxu0 %v3891
        %v3915 = vpop.f32.mrf.mxu0
        %v3916 = vadd.f32 0.0, %v3915
        %v3917 = vpop.f32.mrf.mxu0
        %v3918 = vadd.f32 0.0, %v3917
        %3919 = vmatmul.bf16.gmra.mxu0 %v3894
        %v3920 = vpop.f32.mrf.mxu0
        %v3921 = vadd.f32 0.0, %v3920
        %v3922 = vpop.f32.mrf.mxu0
        %v3923 = vadd.f32 0.0, %v3922
        %3924 = vdwg.mxu0
        %v3925 = vadd.f32 %v3831, %v3906
        %v3926 = vadd.f32 %v3832, %v3908
        %v3927 = vadd.f32 %v3833, %v3911
        %v3928 = vadd.f32 %v3834, %v3913
        %v3929 = vadd.f32 %v3835, %v3916
        %v3930 = vadd.f32 %v3836, %v3918
        %v3931 = vadd.f32 %v3837, %v3921
        %v3932 = vadd.f32 %v3838, %v3923
        %v3933 = vld [vmem:[%s790 + $0x9] sm:$0xff]
        %v3934 = vld [vmem:[%s790 + $0x21] sm:$0xff]
        %v3935 = vld [vmem:[%s790 + $0x39] sm:$0xff]
        %v3936 = vld [vmem:[%s790 + $0x51] sm:$0xff]
        %v3937 = vld [vmem:[%s790 + $0x69] sm:$0xff]
        %v3938 = vld [vmem:[%s790 + $0x81] sm:$0xff]
        %v3939 = vld [vmem:[%s790 + $0x99] sm:$0xff]
        %v3940 = vld [vmem:[%s790 + $0xb1] sm:$0xff]
        %s3941 = scalar_lea.vmem %s2, 1024
        %v3942 = vld [vmem:[%s3941] sm:$0xf]
        %v3943 = vld [vmem:[%s3941 + $0x4] sm:$0xf]
        %v3944 = vld [vmem:[%s3941 + $0x8] sm:$0xf]
        %v3945 = vld [vmem:[%s3941 + $0xc] sm:$0xf]
        %v3946 = vld [vmem:[%s3941 + $0x10] sm:$0xf]
        %v3947 = vld [vmem:[%s3941 + $0x14] sm:$0xf]
        %v3948 = vld [vmem:[%s3941 + $0x18] sm:$0xf]
        %v3949 = vld [vmem:[%s3941 + $0x1c] sm:$0xf]
        %v3950 = vpack.c.bf16 %v3934, %v3933
        %v3951 = vpack.c.bf16 %v3936, %v3935
        %v3952 = vpack.c.bf16 %v3938, %v3937
        %v3953 = vpack.c.bf16 %v3940, %v3939
        %v3962 = vunpack.c.l.b16 %v3942
        %v3963 = vunpack.c.l.b16 %v3943
        %v3964 = vunpack.c.l.b16 %v3944
        %v3965 = vunpack.c.l.b16 %v3945
        %v3966 = vunpack.c.l.b16 %v3946
        %v3967 = vunpack.c.l.b16 %v3947
        %v3968 = vunpack.c.l.b16 %v3948
        %v3969 = vunpack.c.l.b16 %v3949
        %v3970 = vpack.c.b16 %v3963, %v3962
        %v3971 = vpack.c.b16 %v3965, %v3964
        %v3972 = vpack.c.b16 %v3967, %v3966
        %v3973 = vpack.c.b16 %v3969, %v3968
        %v3979 = vsel %vm203, %v3950, 0
        %v3982 = vsel %vm203, %v3951, 0
        %v3985 = vsel %vm203, %v3952, 0
        %v3988 = vsel %vm203, %v3953, 0
        %3990 = vmatpush.bf16.msra.mxu0 0
        %3991 = vmatpush.bf16.msra.mxu0 0
        %3992 = vmatpush.bf16.msra.mxu0 0
        %3993 = vmatpush.bf16.msra.mxu0 0
        %3994 = vmatpush.bf16.msra.mxu0 %v3973
        %3995 = vmatpush.bf16.msra.mxu0 %v3972
        %3996 = vmatpush.bf16.msra.mxu0 %v3971
        %3997 = vmatpush.bf16.msra.mxu0 %v3970
        %3998 = vmatmul.bf16.gmra.mxu0 %v3979
        %v3999 = vpop.f32.mrf.mxu0
        %v4000 = vadd.f32 0.0, %v3999
        %v4001 = vpop.f32.mrf.mxu0
        %v4002 = vadd.f32 0.0, %v4001
        %4003 = vmatmul.bf16.gmra.mxu0 %v3982
        %v4004 = vpop.f32.mrf.mxu0
        %v4005 = vadd.f32 0.0, %v4004
        %v4006 = vpop.f32.mrf.mxu0
        %v4007 = vadd.f32 0.0, %v4006
        %4008 = vmatmul.bf16.gmra.mxu0 %v3985
        %v4009 = vpop.f32.mrf.mxu0
        %v4010 = vadd.f32 0.0, %v4009
        %v4011 = vpop.f32.mrf.mxu0
        %v4012 = vadd.f32 0.0, %v4011
        %4013 = vmatmul.bf16.gmra.mxu0 %v3988
        %v4014 = vpop.f32.mrf.mxu0
        %v4015 = vadd.f32 0.0, %v4014
        %v4016 = vpop.f32.mrf.mxu0
        %v4017 = vadd.f32 0.0, %v4016
        %4018 = vdwg.mxu0
        %v4019 = vadd.f32 %v3925, %v4000
        %v4020 = vadd.f32 %v3926, %v4002
        %v4021 = vadd.f32 %v3927, %v4005
        %v4022 = vadd.f32 %v3928, %v4007
        %v4023 = vadd.f32 %v3929, %v4010
        %v4024 = vadd.f32 %v3930, %v4012
        %v4025 = vadd.f32 %v3931, %v4015
        %v4026 = vadd.f32 %v3932, %v4017
        %v4027 = vld [vmem:[%s1450 + $0x7] sm:$0xff]
        %v4028 = vld [vmem:[%s1450 + $0x1f] sm:$0xff]
        %v4029 = vld [vmem:[%s1450 + $0x37] sm:$0xff]
        %v4030 = vld [vmem:[%s1450 + $0x4f] sm:$0xff]
        %v4031 = vld [vmem:[%s1450 + $0x67] sm:$0xff]
        %v4032 = vld [vmem:[%s1450 + $0x7f] sm:$0xff]
        %v4033 = vld [vmem:[%s1450 + $0x97] sm:$0xff]
        %v4034 = vld [vmem:[%s1450 + $0xaf] sm:$0xff]
        %s4035 = scalar_lea.vmem %s2, 1056
        %v4036 = vld [vmem:[%s4035] sm:$0xf]
        %v4037 = vld [vmem:[%s4035 + $0x4] sm:$0xf]
        %v4038 = vld [vmem:[%s4035 + $0x8] sm:$0xf]
        %v4039 = vld [vmem:[%s4035 + $0xc] sm:$0xf]
        %v4040 = vld [vmem:[%s4035 + $0x10] sm:$0xf]
        %v4041 = vld [vmem:[%s4035 + $0x14] sm:$0xf]
        %v4042 = vld [vmem:[%s4035 + $0x18] sm:$0xf]
        %v4043 = vld [vmem:[%s4035 + $0x1c] sm:$0xf]
        %v4044 = vpack.c.bf16 %v4028, %v4027
        %v4045 = vpack.c.bf16 %v4030, %v4029
        %v4046 = vpack.c.bf16 %v4032, %v4031
        %v4047 = vpack.c.bf16 %v4034, %v4033
        %v4056 = vunpack.c.l.b16 %v4036
        %v4057 = vunpack.c.l.b16 %v4037
        %v4058 = vunpack.c.l.b16 %v4038
        %v4059 = vunpack.c.l.b16 %v4039
        %v4060 = vunpack.c.l.b16 %v4040
        %v4061 = vunpack.c.l.b16 %v4041
        %v4062 = vunpack.c.l.b16 %v4042
        %v4063 = vunpack.c.l.b16 %v4043
        %v4064 = vpack.c.b16 %v4057, %v4056
        %v4065 = vpack.c.b16 %v4059, %v4058
        %v4066 = vpack.c.b16 %v4061, %v4060
        %v4067 = vpack.c.b16 %v4063, %v4062
        %v4073 = vsel %vm203, %v4044, 0
        %v4076 = vsel %vm203, %v4045, 0
        %v4079 = vsel %vm203, %v4046, 0
        %v4082 = vsel %vm203, %v4047, 0
        %4084 = vmatpush.bf16.msra.mxu0 0
        %4085 = vmatpush.bf16.msra.mxu0 0
        %4086 = vmatpush.bf16.msra.mxu0 0
        %4087 = vmatpush.bf16.msra.mxu0 0
        %4088 = vmatpush.bf16.msra.mxu0 %v4067
        %4089 = vmatpush.bf16.msra.mxu0 %v4066
        %4090 = vmatpush.bf16.msra.mxu0 %v4065
        %4091 = vmatpush.bf16.msra.mxu0 %v4064
        %4092 = vmatmul.bf16.gmra.mxu0 %v4073
        %v4093 = vpop.f32.mrf.mxu0
        %v4094 = vadd.f32 0.0, %v4093
        %v4095 = vpop.f32.mrf.mxu0
        %v4096 = vadd.f32 0.0, %v4095
        %4097 = vmatmul.bf16.gmra.mxu0 %v4076
        %v4098 = vpop.f32.mrf.mxu0
        %v4099 = vadd.f32 0.0, %v4098
        %v4100 = vpop.f32.mrf.mxu0
        %v4101 = vadd.f32 0.0, %v4100
        %4102 = vmatmul.bf16.gmra.mxu0 %v4079
        %v4103 = vpop.f32.mrf.mxu0
        %v4104 = vadd.f32 0.0, %v4103
        %v4105 = vpop.f32.mrf.mxu0
        %v4106 = vadd.f32 0.0, %v4105
        %4107 = vmatmul.bf16.gmra.mxu0 %v4082
        %v4108 = vpop.f32.mrf.mxu0
        %v4109 = vadd.f32 0.0, %v4108
        %v4110 = vpop.f32.mrf.mxu0
        %v4111 = vadd.f32 0.0, %v4110
        %4112 = vdwg.mxu0
        %v4113 = vadd.f32 %v4019, %v4094
        %v4114 = vadd.f32 %v4020, %v4096
        %v4115 = vadd.f32 %v4021, %v4099
        %v4116 = vadd.f32 %v4022, %v4101
        %v4117 = vadd.f32 %v4023, %v4104
        %v4118 = vadd.f32 %v4024, %v4106
        %v4119 = vadd.f32 %v4025, %v4109
        %v4120 = vadd.f32 %v4026, %v4111
        %v4121 = vld [vmem:[%s1450 + $0x8] sm:$0xff]
        %v4122 = vld [vmem:[%s1450 + $0x20] sm:$0xff]
        %v4123 = vld [vmem:[%s1450 + $0x38] sm:$0xff]
        %v4124 = vld [vmem:[%s1450 + $0x50] sm:$0xff]
        %v4125 = vld [vmem:[%s1450 + $0x68] sm:$0xff]
        %v4126 = vld [vmem:[%s1450 + $0x80] sm:$0xff]
        %v4127 = vld [vmem:[%s1450 + $0x98] sm:$0xff]
        %v4128 = vld [vmem:[%s1450 + $0xb0] sm:$0xff]
        %s4129 = scalar_lea.vmem %s2, 1088
        %v4130 = vld [vmem:[%s4129] sm:$0xf]
        %v4131 = vld [vmem:[%s4129 + $0x4] sm:$0xf]
        %v4132 = vld [vmem:[%s4129 + $0x8] sm:$0xf]
        %v4133 = vld [vmem:[%s4129 + $0xc] sm:$0xf]
        %v4134 = vld [vmem:[%s4129 + $0x10] sm:$0xf]
        %v4135 = vld [vmem:[%s4129 + $0x14] sm:$0xf]
        %v4136 = vld [vmem:[%s4129 + $0x18] sm:$0xf]
        %v4137 = vld [vmem:[%s4129 + $0x1c] sm:$0xf]
        %v4138 = vpack.c.bf16 %v4122, %v4121
        %v4139 = vpack.c.bf16 %v4124, %v4123
        %v4140 = vpack.c.bf16 %v4126, %v4125
        %v4141 = vpack.c.bf16 %v4128, %v4127
        %v4150 = vunpack.c.l.b16 %v4130
        %v4151 = vunpack.c.l.b16 %v4131
        %v4152 = vunpack.c.l.b16 %v4132
        %v4153 = vunpack.c.l.b16 %v4133
        %v4154 = vunpack.c.l.b16 %v4134
        %v4155 = vunpack.c.l.b16 %v4135
        %v4156 = vunpack.c.l.b16 %v4136
        %v4157 = vunpack.c.l.b16 %v4137
        %v4158 = vpack.c.b16 %v4151, %v4150
        %v4159 = vpack.c.b16 %v4153, %v4152
        %v4160 = vpack.c.b16 %v4155, %v4154
        %v4161 = vpack.c.b16 %v4157, %v4156
        %v4167 = vsel %vm203, %v4138, 0
        %v4170 = vsel %vm203, %v4139, 0
        %v4173 = vsel %vm203, %v4140, 0
        %v4176 = vsel %vm203, %v4141, 0
        %4178 = vmatpush.bf16.msra.mxu0 0
        %4179 = vmatpush.bf16.msra.mxu0 0
        %4180 = vmatpush.bf16.msra.mxu0 0
        %4181 = vmatpush.bf16.msra.mxu0 0
        %4182 = vmatpush.bf16.msra.mxu0 %v4161
        %4183 = vmatpush.bf16.msra.mxu0 %v4160
        %4184 = vmatpush.bf16.msra.mxu0 %v4159
        %4185 = vmatpush.bf16.msra.mxu0 %v4158
        %4186 = vmatmul.bf16.gmra.mxu0 %v4167
        %v4187 = vpop.f32.mrf.mxu0
        %v4188 = vadd.f32 0.0, %v4187
        %v4189 = vpop.f32.mrf.mxu0
        %v4190 = vadd.f32 0.0, %v4189
        %4191 = vmatmul.bf16.gmra.mxu0 %v4170
        %v4192 = vpop.f32.mrf.mxu0
        %v4193 = vadd.f32 0.0, %v4192
        %v4194 = vpop.f32.mrf.mxu0
        %v4195 = vadd.f32 0.0, %v4194
        %4196 = vmatmul.bf16.gmra.mxu0 %v4173
        %v4197 = vpop.f32.mrf.mxu0
        %v4198 = vadd.f32 0.0, %v4197
        %v4199 = vpop.f32.mrf.mxu0
        %v4200 = vadd.f32 0.0, %v4199
        %4201 = vmatmul.bf16.gmra.mxu0 %v4176
        %v4202 = vpop.f32.mrf.mxu0
        %v4203 = vadd.f32 0.0, %v4202
        %v4204 = vpop.f32.mrf.mxu0
        %v4205 = vadd.f32 0.0, %v4204
        %4206 = vdwg.mxu0
        %v4207 = vadd.f32 %v4113, %v4188
        %v4208 = vadd.f32 %v4114, %v4190
        %v4209 = vadd.f32 %v4115, %v4193
        %v4210 = vadd.f32 %v4116, %v4195
        %v4211 = vadd.f32 %v4117, %v4198
        %v4212 = vadd.f32 %v4118, %v4200
        %v4213 = vadd.f32 %v4119, %v4203
        %v4214 = vadd.f32 %v4120, %v4205
        %v4215 = vld [vmem:[%s1450 + $0x9] sm:$0xff]
        %v4216 = vld [vmem:[%s1450 + $0x21] sm:$0xff]
        %v4217 = vld [vmem:[%s1450 + $0x39] sm:$0xff]
        %v4218 = vld [vmem:[%s1450 + $0x51] sm:$0xff]
        %v4219 = vld [vmem:[%s1450 + $0x69] sm:$0xff]
        %v4220 = vld [vmem:[%s1450 + $0x81] sm:$0xff]
        %v4221 = vld [vmem:[%s1450 + $0x99] sm:$0xff]
        %v4222 = vld [vmem:[%s1450 + $0xb1] sm:$0xff]
        %s4223 = scalar_lea.vmem %s2, 1120
        %v4224 = vld [vmem:[%s4223] sm:$0xf]
        %v4225 = vld [vmem:[%s4223 + $0x4] sm:$0xf]
        %v4226 = vld [vmem:[%s4223 + $0x8] sm:$0xf]
        %v4227 = vld [vmem:[%s4223 + $0xc] sm:$0xf]
        %v4228 = vld [vmem:[%s4223 + $0x10] sm:$0xf]
        %v4229 = vld [vmem:[%s4223 + $0x14] sm:$0xf]
        %v4230 = vld [vmem:[%s4223 + $0x18] sm:$0xf]
        %v4231 = vld [vmem:[%s4223 + $0x1c] sm:$0xf]
        %v4232 = vpack.c.bf16 %v4216, %v4215
        %v4233 = vpack.c.bf16 %v4218, %v4217
        %v4234 = vpack.c.bf16 %v4220, %v4219
        %v4235 = vpack.c.bf16 %v4222, %v4221
        %v4244 = vunpack.c.l.b16 %v4224
        %v4245 = vunpack.c.l.b16 %v4225
        %v4246 = vunpack.c.l.b16 %v4226
        %v4247 = vunpack.c.l.b16 %v4227
        %v4248 = vunpack.c.l.b16 %v4228
        %v4249 = vunpack.c.l.b16 %v4229
        %v4250 = vunpack.c.l.b16 %v4230
        %v4251 = vunpack.c.l.b16 %v4231
        %v4252 = vpack.c.b16 %v4245, %v4244
        %v4253 = vpack.c.b16 %v4247, %v4246
        %v4254 = vpack.c.b16 %v4249, %v4248
        %v4255 = vpack.c.b16 %v4251, %v4250
        %v4261 = vsel %vm203, %v4232, 0
        %v4264 = vsel %vm203, %v4233, 0
        %v4267 = vsel %vm203, %v4234, 0
        %v4270 = vsel %vm203, %v4235, 0
        %4272 = vmatpush.bf16.msra.mxu0 0
        %4273 = vmatpush.bf16.msra.mxu0 0
        %4274 = vmatpush.bf16.msra.mxu0 0
        %4275 = vmatpush.bf16.msra.mxu0 0
        %4276 = vmatpush.bf16.msra.mxu0 %v4255
        %4277 = vmatpush.bf16.msra.mxu0 %v4254
        %4278 = vmatpush.bf16.msra.mxu0 %v4253
        %4279 = vmatpush.bf16.msra.mxu0 %v4252
        %4280 = vmatmul.bf16.gmra.mxu0 %v4261
        %v4281 = vpop.f32.mrf.mxu0
        %v4282 = vadd.f32 0.0, %v4281
        %v4283 = vpop.f32.mrf.mxu0
        %v4284 = vadd.f32 0.0, %v4283
        %4285 = vmatmul.bf16.gmra.mxu0 %v4264
        %v4286 = vpop.f32.mrf.mxu0
        %v4287 = vadd.f32 0.0, %v4286
        %v4288 = vpop.f32.mrf.mxu0
        %v4289 = vadd.f32 0.0, %v4288
        %4290 = vmatmul.bf16.gmra.mxu0 %v4267
        %v4291 = vpop.f32.mrf.mxu0
        %v4292 = vadd.f32 0.0, %v4291
        %v4293 = vpop.f32.mrf.mxu0
        %v4294 = vadd.f32 0.0, %v4293
        %4295 = vmatmul.bf16.gmra.mxu0 %v4270
        %v4296 = vpop.f32.mrf.mxu0
        %v4297 = vadd.f32 0.0, %v4296
        %v4298 = vpop.f32.mrf.mxu0
        %v4299 = vadd.f32 0.0, %v4298
        %4300 = vdwg.mxu0
        %v4301 = vadd.f32 %v4207, %v4282
        %v4302 = vadd.f32 %v4208, %v4284
        %v4303 = vadd.f32 %v4209, %v4287
        %v4304 = vadd.f32 %v4210, %v4289
        %v4305 = vadd.f32 %v4211, %v4292
        %v4306 = vadd.f32 %v4212, %v4294
        %v4307 = vadd.f32 %v4213, %v4297
        %v4308 = vadd.f32 %v4214, %v4299
        %v4309 = vld [vmem:[%s3 + $0x4] sm:$0x1]
        %v4310 = vperm.slane %v4309, 0
        %v4311 = vadd.f32 %v4301, %v4310
        %v4312 = vadd.f32 %v4302, %v4310
        %v4313 = vadd.f32 %v4303, %v4310
        %v4314 = vadd.f32 %v4304, %v4310
        %v4315 = vadd.f32 %v4305, %v4310
        %v4316 = vadd.f32 %v4306, %v4310
        %v4317 = vadd.f32 %v4307, %v4310
        %v4318 = vadd.f32 %v4308, %v4310
        %v4319 = vadd.f32 %v4311, %v2607
        %v4320 = vadd.f32 %v4312, %v2608
        %v4321 = vadd.f32 %v4313, %v2609
        %v4322 = vadd.f32 %v4314, %v2610
        %v4323 = vadd.f32 %v4315, %v2611
        %v4324 = vadd.f32 %v4316, %v2612
        %v4325 = vadd.f32 %v4317, %v2613
        %v4326 = vadd.f32 %v4318, %v2614
        %v4327 = vmax.f32 %v4319, 0.0
        %v4328 = vmax.f32 %v4320, 0.0
        %v4329 = vmax.f32 %v4321, 0.0
        %v4330 = vmax.f32 %v4322, 0.0
        %v4331 = vmax.f32 %v4323, 0.0
        %v4332 = vmax.f32 %v4324, 0.0
        %v4333 = vmax.f32 %v4325, 0.0
        %v4334 = vmax.f32 %v4326, 0.0
        %4335 = vst.msk [vmem:[%s193] sm:$0xff] %vm203, %v4327
        %4336 = vst.msk [vmem:[%s193 + $0x8] sm:$0xff] %vm203, %v4328
        %4337 = vst.msk [vmem:[%s193 + $0x10] sm:$0xff] %vm203, %v4329
        %4338 = vst.msk [vmem:[%s193 + $0x18] sm:$0xff] %vm203, %v4330
        %4339 = vst.msk [vmem:[%s193 + $0x20] sm:$0xff] %vm203, %v4331
        %4340 = vst.msk [vmem:[%s193 + $0x28] sm:$0xff] %vm203, %v4332
        %4341 = vst.msk [vmem:[%s193 + $0x30] sm:$0xff] %vm203, %v4333
        %4342 = vst.msk [vmem:[%s193 + $0x38] sm:$0xff] %vm203, %v4334
        %s4343 = sand.u32 %s115, 1
        %s4344 = scalar_lea.sflag [#allocation4], %s4343
        %s4345 = sand.u32 %s115, 1
        %s4346 = smul.addr %s4345, 64
        %s4347 = scalar_lea.vmem [#allocation3], %s4346
        // Predicated region
        $region37: #{resnet18_client_forward.1} parent=35 // pred_check
          %p4348 = pneg %p125
        $region38: #{resnet18_client_forward.1} parent=35 // pred_check_branch
          %4350 = sbr.rel (%p4348) target = $region40
        $region39: #{resnet18_client_forward.1} parent=35 // pred_region
          %s4351 = smul.u32 8, %s18
          %4353 = vsyncadd %s4344, 0
          %s4354 = smul.addr %s4351, 8
          %s4355 = scalar_lea.hbm %s4, %s4354
          %s4356 = sshll.u32 %s4347, 4
          %s4357 = int_to_ptr.vmem [resolvable:$true] %s4356
          %s4358 = sshll.u32 %s4355, 4
          %s4359 = int_to_ptr.hbm [resolvable:$true] %s4358
          %4364 = dma.vmem_to_hbm [thread:$0]  %s4357, 1024, %s4359, %s4344, 128, 128, 8
        $region40: #{resnet18_client_forward.1} parent=35 // pred_fallthru
          _
      $region36: #{resnet18_client_forward.1} parent=5 // pred_fallthru
        _
      %p4365 = scmp.le.s32.totalorder 2, %s13
      // Predicated region
      $region41: #{resnet18_client_forward.1} parent=5 // pred_check
        %p4366 = pneg %p4365
      $region42: #{resnet18_client_forward.1} parent=5 // pred_check_branch
        %4368 = sbr.rel (%p4366) target = $region44
      $region43: #{resnet18_client_forward.1} parent=5 // pred_region
        %s4369 = ssub.s32 %s13, 2
        // Predicated region
        $region45: #{resnet18_client_forward.1} parent=43 // pred_check
          %p4370 = pneg %p131
        $region46: #{resnet18_client_forward.1} parent=43 // pred_check_branch
          %4372 = sbr.rel (%p4370) target = $region48
        $region47: #{resnet18_client_forward.1} parent=43 // pred_region
          %s4373 = sand.u32 %s116, 1
          %s4374 = scalar_lea.sflag [#allocation4], %s4373
          %s4375 = sand.u32 %s116, 1
          %s4376 = smul.addr %s4375, 64
          %s4377 = scalar_lea.vmem [#allocation3], %s4376
          %4379 = dma.done %s4374, 1024
        $region48: #{resnet18_client_forward.1} parent=43 // pred_fallthru
          _
      $region44: #{resnet18_client_forward.1} parent=5 // pred_fallthru
        _
    $region6: #{resnet18_client_forward.1} parent=1 // loop_footer
      %s17 = sadd.s32 1, %s13
    $region7: #{resnet18_client_forward.1} parent=1 // loop_footer_branch
      %12 = sbr.rel target = $region3
    $region8: #{resnet18_client_forward.1} parent=1 // loop_exit
      _
    %4380 = vsyncpa [#allocation4], 1
    %s4381 = scalar_lea.sflag [#allocation4], 1
    %4382 = vsyncpa %s4381, 1

</llo_original>
